<compile_context>
chip_gen: v5e
topology: v5e:2x2
jax: 0.10.0
libtpu: 0.0.40
codegen_flags: <defaults>
</compile_context>

<pallas_src>
import functools

import jax
import jax.numpy as jnp
from jax import lax
from jax.experimental import pallas as pl
from jax.experimental.pallas import tpu as pltpu


# ----------------------------- Pallas kernel ------------------------------

def _basic_block_kernel(x_ref, w1_ref, w2_ref, ws_ref, o_ref,
                        xpad_ref, ypad_ref, col1_ref, col2_ref, *, stride):
    """Fused BasicBlock for one batch element (grid axis = batch).

    x_ref   : (1, H,  W,  Cp)    input activations (channels padded to 128)
    w1_ref  : (9*Cp, Pp)         conv1 3x3 taps, K order = (tap, cin)
    w2_ref  : (9*Pp, Pp)         conv2 3x3 taps
    ws_ref  : (Cp, Pp)           1x1 shortcut weight
    o_ref   : (1, Ho, Wo, Pp)    relu(conv2(relu(conv1(x))) + shortcut(x))
    xpad_ref: (H+2,  W+9,  Cp)   zero-bordered staging of x   (halo in-kernel)
    ypad_ref: (Ho+2, Wo+9, Pp)   zero-bordered staging of out1 (VMEM resident)
    col1/2  : im2col scratch slabs for the two 3x3 convolutions
    """
    _, H, W, Cp = x_ref.shape
    _, Ho, Wo, Pp = o_ref.shape

    # Data is stored at row offset 1 and column offset 8 (8-aligned sublane
    # start => aligned stores); tap (ky, kx) therefore reads from
    # (row0, col0) = (ky, kx + 7), the 1x1 shortcut from (1, 8).
    def window(ref, row0, col0, s):
        if s == 1:
            return ref[row0:row0 + Ho, col0:col0 + Wo, :]
        return ref[pl.ds(row0, Ho, s), pl.ds(col0, Wo, s), :]

    # ---- stage x into a zero-bordered VMEM buffer (padding=1 halo) ----
    xpad_ref[...] = jnp.zeros_like(xpad_ref)
    xpad_ref[1:H + 1, 8:W + 8, :] = x_ref[0]

    # ---- conv1: strided 3x3 as a single im2col MXU contraction + ReLU ----
    for ky in range(3):
        for kx in range(3):
            t = ky * 3 + kx
            col1_ref[:, :, t * Cp:(t + 1) * Cp] = window(xpad_ref, ky, kx + 7, stride)
    out1 = jnp.dot(col1_ref[...].reshape(Ho * Wo, 9 * Cp), w1_ref[...],
                   preferred_element_type=jnp.float32)
    out1 = jnp.maximum(out1, 0.0)

    # ---- stage relu(conv1) in VMEM (never written back to HBM) ----
    ypad_ref[...] = jnp.zeros_like(ypad_ref)
    ypad_ref[1:Ho + 1, 8:Wo + 8, :] = out1.reshape(Ho, Wo, Pp).astype(ypad_ref.dtype)

    # ---- conv2 (stride 1) + strided 1x1 shortcut, fused add + ReLU ----
    for ky in range(3):
        for kx in range(3):
            t = ky * 3 + kx
            col2_ref[:, :, t * Pp:(t + 1) * Pp] = window(ypad_ref, ky, kx + 7, 1)
    acc = jnp.dot(col2_ref[...].reshape(Ho * Wo, 9 * Pp), w2_ref[...],
                  preferred_element_type=jnp.float32)
    acc = acc + jnp.dot(window(xpad_ref, 1, 8, stride).reshape(Ho * Wo, Cp),
                        ws_ref[...], preferred_element_type=jnp.float32)
    o_ref[...] = jnp.maximum(acc, 0.0).reshape(1, Ho, Wo, Pp).astype(o_ref.dtype)


# ------------------------------ JAX wrapper -------------------------------

def _round_up(x, m):
    return (x + m - 1) // m * m


@functools.partial(jax.jit, static_argnames=("stride", "compute_dtype"))
def basic_block_forward(x_nchw, w1_hwio, w2_hwio, ws_io, *, stride=1,
                        compute_dtype=jnp.bfloat16):
    """BasicBlock forward.  x_nchw: (N, Cin, H, W) -> (N, planes, Ho, Wo) f32."""
    N, Cin, H, W = x_nchw.shape
    planes = w1_hwio.shape[-1]
    Ho = (H - 1) // stride + 1
    Wo = (W - 1) // stride + 1
    Cp = _round_up(max(Cin, 128), 128)      # lane-dense channel padding
    Pp = _round_up(max(planes, 128), 128)

    # Single fused prep pass: NCHW->NHWC, cast to MXU dtype, pad channels to
    # the lane width.  (In a stacked network this layout is kept throughout.)
    x = jnp.transpose(x_nchw, (0, 2, 3, 1)).astype(compute_dtype)
    x = jnp.pad(x, ((0, 0), (0, 0), (0, 0), (0, Cp - Cin)))

    def prep_w3x3(w, cin, cout, cin_p, cout_p):
        w = jnp.pad(w, ((0, 0), (0, 0), (0, cin_p - cin), (0, cout_p - cout)))
        return w.reshape(9 * cin_p, cout_p).astype(compute_dtype)

    w1 = prep_w3x3(w1_hwio, Cin, planes, Cp, Pp)
    w2 = prep_w3x3(w2_hwio, planes, planes, Pp, Pp)
    ws = jnp.pad(ws_io, ((0, Cp - Cin), (0, Pp - planes))).astype(compute_dtype)

    itemsize = jnp.dtype(compute_dtype).itemsize
    flops = 2 * N * Ho * Wo * Pp * (9 * Cp + 9 * Pp + Cp)
    bytes_accessed = itemsize * (x.size + w1.size + w2.size + ws.size) \
        + 4 * N * Ho * Wo * Pp

    kernel = functools.partial(_basic_block_kernel, stride=stride)

    out = pl.pallas_call(
        kernel,
        out_shape=jax.ShapeDtypeStruct((N, Ho, Wo, Pp), jnp.float32),
        grid_spec=pltpu.PrefetchScalarGridSpec(
            num_scalar_prefetch=0,
            grid=(N,),
            in_specs=[
                pl.BlockSpec((1, H, W, Cp), lambda n: (n, 0, 0, 0)),
                pl.BlockSpec((9 * Cp, Pp), lambda n: (0, 0)),
                pl.BlockSpec((9 * Pp, Pp), lambda n: (0, 0)),
                pl.BlockSpec((Cp, Pp), lambda n: (0, 0)),
            ],
            out_specs=pl.BlockSpec((1, Ho, Wo, Pp), lambda n: (n, 0, 0, 0)),
            scratch_shapes=[
                pltpu.VMEM((H + 2, W + 9, Cp), compute_dtype),    # padded x
                pltpu.VMEM((Ho + 2, Wo + 9, Pp), compute_dtype),  # padded out1
                pltpu.VMEM((Ho, Wo, 9 * Cp), compute_dtype),      # im2col conv1
                pltpu.VMEM((Ho, Wo, 9 * Pp), compute_dtype),      # im2col conv2
            ],
        ),
        compiler_params=pltpu.CompilerParams(
            dimension_semantics=("parallel",),          # megacore over batch
            vmem_limit_bytes=32 * 1024 * 1024,
        ),
        cost_estimate=pl.CostEstimate(flops=flops, transcendentals=0,
                                      bytes_accessed=bytes_accessed),
    )(x, w1, w2, ws)

    out = out[..., :planes]                    # drop channel padding
    return jnp.transpose(out, (0, 3, 1, 2))    # back to NCHW (f32)


# ------------------------------- reference --------------------------------

def _ref_block(x_nchw, w1_hwio, w2_hwio, ws_io, stride):
    dn = ("NCHW", "HWIO", "NCHW")

    def conv(inp, w, s, p):
        return lax.conv_general_dilated(inp, w, (s, s), ((p, p), (p, p)),
                                        dimension_numbers=dn)

    out1 = jax.nn.relu(conv(x_nchw, w1_hwio, stride, 1))
    short = conv(x_nchw, ws_io.reshape(1, 1, *ws_io.shape), stride, 0)
    return jax.nn.relu(conv(out1, w2_hwio, 1, 1) + short)


# ---------------------------------- main -----------------------------------

if __name__ == "__main__":
    key = jax.random.PRNGKey(0)
    k1, k2, k3, kx = jax.random.split(key, 4)

    N, Cin, planes, H, W = 2, 4, 8, 16, 16
    x = jax.random.normal(kx, (N, Cin, H, W), jnp.float32)
    # synthetic weights: conv3x3 / conv3x3 / 1x1 shortcut, no bias
    w1 = jax.random.normal(k1, (3, 3, Cin, planes), jnp.float32) * 0.1
    w2 = jax.random.normal(k2, (3, 3, planes, planes), jnp.float32) * 0.1
    ws = jax.random.normal(k3, (Cin, planes), jnp.float32) * 0.1

    for stride in (1, 2):
        ref = _ref_block(x, w1, w2, ws, stride)

        # f32 compute path (validation, tight tolerance)
        out_f32 = jax.block_until_ready(
            basic_block_forward(x, w1, w2, ws, stride=stride,
                                compute_dtype=jnp.float32))
        assert out_f32.shape == ref.shape, (out_f32.shape, ref.shape)
        err = float(jnp.max(jnp.abs(out_f32 - ref)))
        assert jnp.allclose(out_f32, ref, atol=2e-3, rtol=2e-3), ("f32", stride, err)

        # bf16 MXU path (default; f32 accumulation, looser tolerance)
        out_bf16 = jax.block_until_ready(
            basic_block_forward(x, w1, w2, ws, stride=stride,
                                compute_dtype=jnp.bfloat16))
        err_bf = float(jnp.max(jnp.abs(out_bf16 - ref)))
        assert jnp.allclose(out_bf16, ref, atol=0.15, rtol=0.1), ("bf16", stride, err_bf)

    print("KERNEL_OK")
</pallas_src>

<mosaic_0001>
module attributes {stable_mosaic.version = 11 : i64} {
  func.func @_basic_block_kernel(%arg0: i32, %arg1: memref<1x16x16x128xf32, #tpu.memory_space<vmem>>, %arg2: memref<1152x128xf32, #tpu.memory_space<vmem>>, %arg3: memref<1152x128xf32, #tpu.memory_space<vmem>>, %arg4: memref<128x128xf32, #tpu.memory_space<vmem>>, %arg5: memref<1x16x16x128xf32, #tpu.memory_space<vmem>>, %arg6: memref<18x25x128xf32, #tpu.memory_space<vmem>>, %arg7: memref<18x25x128xf32, #tpu.memory_space<vmem>>, %arg8: memref<16x16x1152xf32, #tpu.memory_space<vmem>>, %arg9: memref<16x16x1152xf32, #tpu.memory_space<vmem>>) attributes {dimension_semantics = [#tpu.dimension_semantics<parallel>], iteration_bounds = array<i64: 2>, scalar_prefetch = 0 : i64, scratch_operands = 4 : i64, tpu.core_type = #tpu.core_type<tc>, window_params = [{transform_indices = @transform_0, window_bounds = array<i64: 1, 16, 16, 128>}, {pipeline_mode = #tpu.pipeline_mode<synchronous>, transform_indices = @transform_1, window_bounds = array<i64: 1152, 128>}, {pipeline_mode = #tpu.pipeline_mode<synchronous>, transform_indices = @transform_2, window_bounds = array<i64: 1152, 128>}, {pipeline_mode = #tpu.pipeline_mode<synchronous>, transform_indices = @transform_3, window_bounds = array<i64: 128, 128>}, {transform_indices = @transform_4, window_bounds = array<i64: 1, 16, 16, 128>}]} {
    %cst = arith.constant 0.000000e+00 : f32
    %0 = vector.broadcast %cst : f32 to vector<18x25x128xf32>
    %c0 = arith.constant 0 : index
    %c0_0 = arith.constant 0 : index
    %c0_1 = arith.constant 0 : index
    %1 = vector.load %arg6[%c0, %c0_0, %c0_1] : memref<18x25x128xf32, #tpu.memory_space<vmem>>, vector<18x25x128xf32>
    tpu.vector_store %arg6[%c0, %c0_0, %c0_1], %0 {strides = array<i32>} : memref<18x25x128xf32, #tpu.memory_space<vmem>>, vector<18x25x128xf32>,
    %c0_2 = arith.constant 0 : index
    %c0_3 = arith.constant 0 : index
    %c0_4 = arith.constant 0 : index
    %c0_5 = arith.constant 0 : index
    %2 = vector.load %arg1[%c0_2, %c0_3, %c0_4, %c0_5] : memref<1x16x16x128xf32, #tpu.memory_space<vmem>>, vector<1x16x16x128xf32>
    %3 = vector.shape_cast %2 : vector<1x16x16x128xf32> to vector<16x16x128xf32>
    %c1 = arith.constant 1 : index
    %c8 = arith.constant 8 : index
    %c0_6 = arith.constant 0 : index
    %4 = vector.load %arg6[%c1, %c8, %c0_6] : memref<18x25x128xf32, #tpu.memory_space<vmem>>, vector<16x16x128xf32>
    tpu.vector_store %arg6[%c1, %c8, %c0_6], %3 {strides = array<i32>} : memref<18x25x128xf32, #tpu.memory_space<vmem>>, vector<16x16x128xf32>,
    %c0_7 = arith.constant 0 : index
    %c7 = arith.constant 7 : index
    %c0_8 = arith.constant 0 : index
    %5 = vector.load %arg6[%c0_7, %c7, %c0_8] : memref<18x25x128xf32, #tpu.memory_space<vmem>>, vector<16x16x128xf32>
    %c0_9 = arith.constant 0 : index
    %c0_10 = arith.constant 0 : index
    %c0_11 = arith.constant 0 : index
    %6 = vector.load %arg8[%c0_9, %c0_10, %c0_11] : memref<16x16x1152xf32, #tpu.memory_space<vmem>>, vector<16x16x128xf32>
    tpu.vector_store %arg8[%c0_9, %c0_10, %c0_11], %5 {strides = array<i32>} : memref<16x16x1152xf32, #tpu.memory_space<vmem>>, vector<16x16x128xf32>,
    %c0_12 = arith.constant 0 : index
    %c8_13 = arith.constant 8 : index
    %c0_14 = arith.constant 0 : index
    %7 = vector.load %arg6[%c0_12, %c8_13, %c0_14] : memref<18x25x128xf32, #tpu.memory_space<vmem>>, vector<16x16x128xf32>
    %c0_15 = arith.constant 0 : index
    %c0_16 = arith.constant 0 : index
    %c128 = arith.constant 128 : index
    %8 = vector.load %arg8[%c0_15, %c0_16, %c128] : memref<16x16x1152xf32, #tpu.memory_space<vmem>>, vector<16x16x128xf32>
    tpu.vector_store %arg8[%c0_15, %c0_16, %c128], %7 {strides = array<i32>} : memref<16x16x1152xf32, #tpu.memory_space<vmem>>, vector<16x16x128xf32>,
    %c0_17 = arith.constant 0 : index
    %c9 = arith.constant 9 : index
    %c0_18 = arith.constant 0 : index
    %9 = vector.load %arg6[%c0_17, %c9, %c0_18] : memref<18x25x128xf32, #tpu.memory_space<vmem>>, vector<16x16x128xf32>
    %c0_19 = arith.constant 0 : index
    %c0_20 = arith.constant 0 : index
    %c256 = arith.constant 256 : index
    %10 = vector.load %arg8[%c0_19, %c0_20, %c256] : memref<16x16x1152xf32, #tpu.memory_space<vmem>>, vector<16x16x128xf32>
    tpu.vector_store %arg8[%c0_19, %c0_20, %c256], %9 {strides = array<i32>} : memref<16x16x1152xf32, #tpu.memory_space<vmem>>, vector<16x16x128xf32>,
    %c1_21 = arith.constant 1 : index
    %c7_22 = arith.constant 7 : index
    %c0_23 = arith.constant 0 : index
    %11 = vector.load %arg6[%c1_21, %c7_22, %c0_23] : memref<18x25x128xf32, #tpu.memory_space<vmem>>, vector<16x16x128xf32>
    %c0_24 = arith.constant 0 : index
    %c0_25 = arith.constant 0 : index
    %c384 = arith.constant 384 : index
    %12 = vector.load %arg8[%c0_24, %c0_25, %c384] : memref<16x16x1152xf32, #tpu.memory_space<vmem>>, vector<16x16x128xf32>
    tpu.vector_store %arg8[%c0_24, %c0_25, %c384], %11 {strides = array<i32>} : memref<16x16x1152xf32, #tpu.memory_space<vmem>>, vector<16x16x128xf32>,
    %c1_26 = arith.constant 1 : index
    %c8_27 = arith.constant 8 : index
    %c0_28 = arith.constant 0 : index
    %13 = vector.load %arg6[%c1_26, %c8_27, %c0_28] : memref<18x25x128xf32, #tpu.memory_space<vmem>>, vector<16x16x128xf32>
    %c0_29 = arith.constant 0 : index
    %c0_30 = arith.constant 0 : index
    %c512 = arith.constant 512 : index
    %14 = vector.load %arg8[%c0_29, %c0_30, %c512] : memref<16x16x1152xf32, #tpu.memory_space<vmem>>, vector<16x16x128xf32>
    tpu.vector_store %arg8[%c0_29, %c0_30, %c512], %13 {strides = array<i32>} : memref<16x16x1152xf32, #tpu.memory_space<vmem>>, vector<16x16x128xf32>,
    %c1_31 = arith.constant 1 : index
    %c9_32 = arith.constant 9 : index
    %c0_33 = arith.constant 0 : index
    %15 = vector.load %arg6[%c1_31, %c9_32, %c0_33] : memref<18x25x128xf32, #tpu.memory_space<vmem>>, vector<16x16x128xf32>
    %c0_34 = arith.constant 0 : index
    %c0_35 = arith.constant 0 : index
    %c640 = arith.constant 640 : index
    %16 = vector.load %arg8[%c0_34, %c0_35, %c640] : memref<16x16x1152xf32, #tpu.memory_space<vmem>>, vector<16x16x128xf32>
    tpu.vector_store %arg8[%c0_34, %c0_35, %c640], %15 {strides = array<i32>} : memref<16x16x1152xf32, #tpu.memory_space<vmem>>, vector<16x16x128xf32>,
    %c2 = arith.constant 2 : index
    %c7_36 = arith.constant 7 : index
    %c0_37 = arith.constant 0 : index
    %17 = vector.load %arg6[%c2, %c7_36, %c0_37] : memref<18x25x128xf32, #tpu.memory_space<vmem>>, vector<16x16x128xf32>
    %c0_38 = arith.constant 0 : index
    %c0_39 = arith.constant 0 : index
    %c768 = arith.constant 768 : index
    %18 = vector.load %arg8[%c0_38, %c0_39, %c768] : memref<16x16x1152xf32, #tpu.memory_space<vmem>>, vector<16x16x128xf32>
    tpu.vector_store %arg8[%c0_38, %c0_39, %c768], %17 {strides = array<i32>} : memref<16x16x1152xf32, #tpu.memory_space<vmem>>, vector<16x16x128xf32>,
    %c2_40 = arith.constant 2 : index
    %c8_41 = arith.constant 8 : index
    %c0_42 = arith.constant 0 : index
    %19 = vector.load %arg6[%c2_40, %c8_41, %c0_42] : memref<18x25x128xf32, #tpu.memory_space<vmem>>, vector<16x16x128xf32>
    %c0_43 = arith.constant 0 : index
    %c0_44 = arith.constant 0 : index
    %c896 = arith.constant 896 : index
    %20 = vector.load %arg8[%c0_43, %c0_44, %c896] : memref<16x16x1152xf32, #tpu.memory_space<vmem>>, vector<16x16x128xf32>
    tpu.vector_store %arg8[%c0_43, %c0_44, %c896], %19 {strides = array<i32>} : memref<16x16x1152xf32, #tpu.memory_space<vmem>>, vector<16x16x128xf32>,
    %c2_45 = arith.constant 2 : index
    %c9_46 = arith.constant 9 : index
    %c0_47 = arith.constant 0 : index
    %21 = vector.load %arg6[%c2_45, %c9_46, %c0_47] : memref<18x25x128xf32, #tpu.memory_space<vmem>>, vector<16x16x128xf32>
    %c0_48 = arith.constant 0 : index
    %c0_49 = arith.constant 0 : index
    %c1024 = arith.constant 1024 : index
    %22 = vector.load %arg8[%c0_48, %c0_49, %c1024] : memref<16x16x1152xf32, #tpu.memory_space<vmem>>, vector<16x16x128xf32>
    tpu.vector_store %arg8[%c0_48, %c0_49, %c1024], %21 {strides = array<i32>} : memref<16x16x1152xf32, #tpu.memory_space<vmem>>, vector<16x16x128xf32>,
    %c0_50 = arith.constant 0 : index
    %c0_51 = arith.constant 0 : index
    %c0_52 = arith.constant 0 : index
    %23 = vector.load %arg8[%c0_50, %c0_51, %c0_52] : memref<16x16x1152xf32, #tpu.memory_space<vmem>>, vector<16x16x1152xf32>
    %24 = vector.shape_cast %23 : vector<16x16x1152xf32> to vector<256x1152xf32>
    %c0_53 = arith.constant 0 : index
    %c0_54 = arith.constant 0 : index
    %25 = vector.load %arg2[%c0_53, %c0_54] : memref<1152x128xf32, #tpu.memory_space<vmem>>, vector<1152x128xf32>
    %cst_55 = arith.constant dense<0.000000e+00> : vector<256x128xf32>
    %26 = tpu.matmul %24, %25, %cst_55 {dimension_numbers = #tpu.dot_dimension_numbers<[1], [0], [0], [1], [0, 0, 1, 1], [], []>} : vector<256x1152xf32>, vector<1152x128xf32>, vector<256x128xf32> -> vector<256x128xf32>
    %cst_56 = arith.constant 0.000000e+00 : f32
    %27 = vector.broadcast %cst_56 : f32 to vector<256x128xf32>
    %28 = arith.maximumf %26, %27 : vector<256x128xf32>
    %cst_57 = arith.constant 0.000000e+00 : f32
    %29 = vector.broadcast %cst_57 : f32 to vector<18x25x128xf32>
    %c0_58 = arith.constant 0 : index
    %c0_59 = arith.constant 0 : index
    %c0_60 = arith.constant 0 : index
    %30 = vector.load %arg7[%c0_58, %c0_59, %c0_60] : memref<18x25x128xf32, #tpu.memory_space<vmem>>, vector<18x25x128xf32>
    tpu.vector_store %arg7[%c0_58, %c0_59, %c0_60], %29 {strides = array<i32>} : memref<18x25x128xf32, #tpu.memory_space<vmem>>, vector<18x25x128xf32>,
    %31 = vector.shape_cast %28 : vector<256x128xf32> to vector<16x16x128xf32>
    %c1_61 = arith.constant 1 : index
    %c8_62 = arith.constant 8 : index
    %c0_63 = arith.constant 0 : index
    %32 = vector.load %arg7[%c1_61, %c8_62, %c0_63] : memref<18x25x128xf32, #tpu.memory_space<vmem>>, vector<16x16x128xf32>
    tpu.vector_store %arg7[%c1_61, %c8_62, %c0_63], %31 {strides = array<i32>} : memref<18x25x128xf32, #tpu.memory_space<vmem>>, vector<16x16x128xf32>,
    %c0_64 = arith.constant 0 : index
    %c7_65 = arith.constant 7 : index
    %c0_66 = arith.constant 0 : index
    %33 = vector.load %arg7[%c0_64, %c7_65, %c0_66] : memref<18x25x128xf32, #tpu.memory_space<vmem>>, vector<16x16x128xf32>
    %c0_67 = arith.constant 0 : index
    %c0_68 = arith.constant 0 : index
    %c0_69 = arith.constant 0 : index
    %34 = vector.load %arg9[%c0_67, %c0_68, %c0_69] : memref<16x16x1152xf32, #tpu.memory_space<vmem>>, vector<16x16x128xf32>
    tpu.vector_store %arg9[%c0_67, %c0_68, %c0_69], %33 {strides = array<i32>} : memref<16x16x1152xf32, #tpu.memory_space<vmem>>, vector<16x16x128xf32>,
    %c0_70 = arith.constant 0 : index
    %c8_71 = arith.constant 8 : index
    %c0_72 = arith.constant 0 : index
    %35 = vector.load %arg7[%c0_70, %c8_71, %c0_72] : memref<18x25x128xf32, #tpu.memory_space<vmem>>, vector<16x16x128xf32>
    %c0_73 = arith.constant 0 : index
    %c0_74 = arith.constant 0 : index
    %c128_75 = arith.constant 128 : index
    %36 = vector.load %arg9[%c0_73, %c0_74, %c128_75] : memref<16x16x1152xf32, #tpu.memory_space<vmem>>, vector<16x16x128xf32>
    tpu.vector_store %arg9[%c0_73, %c0_74, %c128_75], %35 {strides = array<i32>} : memref<16x16x1152xf32, #tpu.memory_space<vmem>>, vector<16x16x128xf32>,
    %c0_76 = arith.constant 0 : index
    %c9_77 = arith.constant 9 : index
    %c0_78 = arith.constant 0 : index
    %37 = vector.load %arg7[%c0_76, %c9_77, %c0_78] : memref<18x25x128xf32, #tpu.memory_space<vmem>>, vector<16x16x128xf32>
    %c0_79 = arith.constant 0 : index
    %c0_80 = arith.constant 0 : index
    %c256_81 = arith.constant 256 : index
    %38 = vector.load %arg9[%c0_79, %c0_80, %c256_81] : memref<16x16x1152xf32, #tpu.memory_space<vmem>>, vector<16x16x128xf32>
    tpu.vector_store %arg9[%c0_79, %c0_80, %c256_81], %37 {strides = array<i32>} : memref<16x16x1152xf32, #tpu.memory_space<vmem>>, vector<16x16x128xf32>,
    %c1_82 = arith.constant 1 : index
    %c7_83 = arith.constant 7 : index
    %c0_84 = arith.constant 0 : index
    %39 = vector.load %arg7[%c1_82, %c7_83, %c0_84] : memref<18x25x128xf32, #tpu.memory_space<vmem>>, vector<16x16x128xf32>
    %c0_85 = arith.constant 0 : index
    %c0_86 = arith.constant 0 : index
    %c384_87 = arith.constant 384 : index
    %40 = vector.load %arg9[%c0_85, %c0_86, %c384_87] : memref<16x16x1152xf32, #tpu.memory_space<vmem>>, vector<16x16x128xf32>
    tpu.vector_store %arg9[%c0_85, %c0_86, %c384_87], %39 {strides = array<i32>} : memref<16x16x1152xf32, #tpu.memory_space<vmem>>, vector<16x16x128xf32>,
    %c1_88 = arith.constant 1 : index
    %c8_89 = arith.constant 8 : index
    %c0_90 = arith.constant 0 : index
    %41 = vector.load %arg7[%c1_88, %c8_89, %c0_90] : memref<18x25x128xf32, #tpu.memory_space<vmem>>, vector<16x16x128xf32>
    %c0_91 = arith.constant 0 : index
    %c0_92 = arith.constant 0 : index
    %c512_93 = arith.constant 512 : index
    %42 = vector.load %arg9[%c0_91, %c0_92, %c512_93] : memref<16x16x1152xf32, #tpu.memory_space<vmem>>, vector<16x16x128xf32>
    tpu.vector_store %arg9[%c0_91, %c0_92, %c512_93], %41 {strides = array<i32>} : memref<16x16x1152xf32, #tpu.memory_space<vmem>>, vector<16x16x128xf32>,
    %c1_94 = arith.constant 1 : index
    %c9_95 = arith.constant 9 : index
    %c0_96 = arith.constant 0 : index
    %43 = vector.load %arg7[%c1_94, %c9_95, %c0_96] : memref<18x25x128xf32, #tpu.memory_space<vmem>>, vector<16x16x128xf32>
    %c0_97 = arith.constant 0 : index
    %c0_98 = arith.constant 0 : index
    %c640_99 = arith.constant 640 : index
    %44 = vector.load %arg9[%c0_97, %c0_98, %c640_99] : memref<16x16x1152xf32, #tpu.memory_space<vmem>>, vector<16x16x128xf32>
    tpu.vector_store %arg9[%c0_97, %c0_98, %c640_99], %43 {strides = array<i32>} : memref<16x16x1152xf32, #tpu.memory_space<vmem>>, vector<16x16x128xf32>,
    %c2_100 = arith.constant 2 : index
    %c7_101 = arith.constant 7 : index
    %c0_102 = arith.constant 0 : index
    %45 = vector.load %arg7[%c2_100, %c7_101, %c0_102] : memref<18x25x128xf32, #tpu.memory_space<vmem>>, vector<16x16x128xf32>
    %c0_103 = arith.constant 0 : index
    %c0_104 = arith.constant 0 : index
    %c768_105 = arith.constant 768 : index
    %46 = vector.load %arg9[%c0_103, %c0_104, %c768_105] : memref<16x16x1152xf32, #tpu.memory_space<vmem>>, vector<16x16x128xf32>
    tpu.vector_store %arg9[%c0_103, %c0_104, %c768_105], %45 {strides = array<i32>} : memref<16x16x1152xf32, #tpu.memory_space<vmem>>, vector<16x16x128xf32>,
    %c2_106 = arith.constant 2 : index
    %c8_107 = arith.constant 8 : index
    %c0_108 = arith.constant 0 : index
    %47 = vector.load %arg7[%c2_106, %c8_107, %c0_108] : memref<18x25x128xf32, #tpu.memory_space<vmem>>, vector<16x16x128xf32>
    %c0_109 = arith.constant 0 : index
    %c0_110 = arith.constant 0 : index
    %c896_111 = arith.constant 896 : index
    %48 = vector.load %arg9[%c0_109, %c0_110, %c896_111] : memref<16x16x1152xf32, #tpu.memory_space<vmem>>, vector<16x16x128xf32>
    tpu.vector_store %arg9[%c0_109, %c0_110, %c896_111], %47 {strides = array<i32>} : memref<16x16x1152xf32, #tpu.memory_space<vmem>>, vector<16x16x128xf32>,
    %c2_112 = arith.constant 2 : index
    %c9_113 = arith.constant 9 : index
    %c0_114 = arith.constant 0 : index
    %49 = vector.load %arg7[%c2_112, %c9_113, %c0_114] : memref<18x25x128xf32, #tpu.memory_space<vmem>>, vector<16x16x128xf32>
    %c0_115 = arith.constant 0 : index
    %c0_116 = arith.constant 0 : index
    %c1024_117 = arith.constant 1024 : index
    %50 = vector.load %arg9[%c0_115, %c0_116, %c1024_117] : memref<16x16x1152xf32, #tpu.memory_space<vmem>>, vector<16x16x128xf32>
    tpu.vector_store %arg9[%c0_115, %c0_116, %c1024_117], %49 {strides = array<i32>} : memref<16x16x1152xf32, #tpu.memory_space<vmem>>, vector<16x16x128xf32>,
    %c0_118 = arith.constant 0 : index
    %c0_119 = arith.constant 0 : index
    %c0_120 = arith.constant 0 : index
    %51 = vector.load %arg9[%c0_118, %c0_119, %c0_120] : memref<16x16x1152xf32, #tpu.memory_space<vmem>>, vector<16x16x1152xf32>
    %52 = vector.shape_cast %51 : vector<16x16x1152xf32> to vector<256x1152xf32>
    %c0_121 = arith.constant 0 : index
    %c0_122 = arith.constant 0 : index
    %53 = vector.load %arg3[%c0_121, %c0_122] : memref<1152x128xf32, #tpu.memory_space<vmem>>, vector<1152x128xf32>
    %cst_123 = arith.constant dense<0.000000e+00> : vector<256x128xf32>
    %54 = tpu.matmul %52, %53, %cst_123 {dimension_numbers = #tpu.dot_dimension_numbers<[1], [0], [0], [1], [0, 0, 1, 1], [], []>} : vector<256x1152xf32>, vector<1152x128xf32>, vector<256x128xf32> -> vector<256x128xf32>
    %c1_124 = arith.constant 1 : index
    %c8_125 = arith.constant 8 : index
    %c0_126 = arith.constant 0 : index
    %55 = vector.load %arg6[%c1_124, %c8_125, %c0_126] : memref<18x25x128xf32, #tpu.memory_space<vmem>>, vector<16x16x128xf32>
    %56 = vector.shape_cast %55 : vector<16x16x128xf32> to vector<256x128xf32>
    %c0_127 = arith.constant 0 : index
    %c0_128 = arith.constant 0 : index
    %57 = vector.load %arg4[%c0_127, %c0_128] : memref<128x128xf32, #tpu.memory_space<vmem>>, vector<128x128xf32>
    %cst_129 = arith.constant dense<0.000000e+00> : vector<256x128xf32>
    %58 = tpu.matmul %56, %57, %cst_129 {dimension_numbers = #tpu.dot_dimension_numbers<[1], [0], [0], [1], [0, 0, 1, 1], [], []>} : vector<256x128xf32>, vector<128x128xf32>, vector<256x128xf32> -> vector<256x128xf32>
    %59 = arith.addf %54, %58 : vector<256x128xf32>
    %cst_130 = arith.constant 0.000000e+00 : f32
    %60 = vector.broadcast %cst_130 : f32 to vector<256x128xf32>
    %61 = arith.maximumf %59, %60 : vector<256x128xf32>
    %62 = vector.shape_cast %61 : vector<256x128xf32> to vector<1x16x16x128xf32>
    %c0_131 = arith.constant 0 : index
    %c0_132 = arith.constant 0 : index
    %c0_133 = arith.constant 0 : index
    %c0_134 = arith.constant 0 : index
    %63 = vector.load %arg5[%c0_131, %c0_132, %c0_133, %c0_134] : memref<1x16x16x128xf32, #tpu.memory_space<vmem>>, vector<1x16x16x128xf32>
    tpu.vector_store %arg5[%c0_131, %c0_132, %c0_133, %c0_134], %62 {strides = array<i32>} : memref<1x16x16x128xf32, #tpu.memory_space<vmem>>, vector<1x16x16x128xf32>,
    return
  }
  func.func @transform_0(%arg0: i32) -> (i32, i32, i32, i32) {
    %c0_i32 = arith.constant 0 : i32
    %c0_i32_0 = arith.constant 0 : i32
    %c0_i32_1 = arith.constant 0 : i32
    %c0_i32_2 = arith.constant 0 : i32
    return %arg0, %c0_i32, %c0_i32_0, %c0_i32_1 : i32, i32, i32, i32
  }
  func.func @transform_1(%arg0: i32) -> (i32, i32) {
    %c0_i32 = arith.constant 0 : i32
    %c0_i32_0 = arith.constant 0 : i32
    %c0_i32_1 = arith.constant 0 : i32
    return %c0_i32, %c0_i32_0 : i32, i32
  }
  func.func @transform_2(%arg0: i32) -> (i32, i32) {
    %c0_i32 = arith.constant 0 : i32
    %c0_i32_0 = arith.constant 0 : i32
    %c0_i32_1 = arith.constant 0 : i32
    return %c0_i32, %c0_i32_0 : i32, i32
  }
  func.func @transform_3(%arg0: i32) -> (i32, i32) {
    %c0_i32 = arith.constant 0 : i32
    %c0_i32_0 = arith.constant 0 : i32
    %c0_i32_1 = arith.constant 0 : i32
    return %c0_i32, %c0_i32_0 : i32, i32
  }
  func.func @transform_4(%arg0: i32) -> (i32, i32, i32, i32) {
    %c0_i32 = arith.constant 0 : i32
    %c0_i32_0 = arith.constant 0 : i32
    %c0_i32_1 = arith.constant 0 : i32
    %c0_i32_2 = arith.constant 0 : i32
    return %arg0, %c0_i32, %c0_i32_0, %c0_i32_1 : i32, i32, i32, i32
  }
}

</mosaic_0001>

<llo_original>
// kernel: basic_block_forward.1
$region0: #{basic_block_forward.1}
  #allocation0 [shape = 'u32[]', space=smem, size = 0x4, offset = 0x4, fixed_abs, tag = 'smem constant byte address 0x4 - core index']
  #allocation1 [shape = 'u32[72,128]{1,0:T(1,128)}', space=vmem, size = 0x9000, scoped, tag = 'internal scratch']
  #allocation2 [shape = 'f32[18,25,128]{2,1,0:T(8,128)}', space=vmem, size = 0x48000, scoped, tag = 'scratch operand']
  #allocation3 [shape = 'f32[18,25,128]{2,1,0:T(8,128)}', space=vmem, size = 0x48000, scoped, tag = 'scratch operand']
  #allocation4 [shape = 'f32[16,16,1152]{2,1,0:T(8,128)}', space=vmem, size = 0x120000, scoped, tag = 'scratch operand']
  #allocation5 [shape = 'f32[16,16,1152]{2,1,0:T(8,128)}', space=vmem, size = 0x120000, scoped, tag = 'scratch operand']
  %s0 = inlined_call_operand.vmem [shape: f32[2,16,16,128], index: 0, kind: input, shape index: {}]
  %s1 = inlined_call_operand.vmem [shape: f32[1152,128], index: 1, kind: input, shape index: {}]
  %s2 = inlined_call_operand.vmem [shape: f32[1152,128], index: 2, kind: input, shape index: {}]
  %s3 = inlined_call_operand.vmem [shape: f32[128,128], index: 3, kind: input, shape index: {}]
  %s4 = inlined_call_operand.vmem [shape: f32[2,16,16,128], index: 4, kind: output, shape index: {}]
  %s5 = sld [smem:[#allocation0]]
  $region49: #{basic_block_forward.1} parent=0
    _
  %s7 = ssub.s32 1, %s5
  %s8 = scalar_select 0, %s7, %s5
  loop: start=0, step=1, limit=4
  $region2: #{basic_block_forward.1} parent=0 // loop_pre_header
    _
  $region3: #{basic_block_forward.1} parent=0 // loop_header
    %s10 = sphi 0, %s14
    %p11 = scmp.ge.s32.totalorder %s10, 4
    %s20 = sphi 0, %s22
    %s23 = sphi 0, %s20
    %s24 = sphi 0, %s23
    %s40 = sphi 0, %s24
    %s44 = sphi 0, %s44
    %s46 = sphi 0, %s44
    %s47 = sphi 0, %s46
    %s61 = sphi 0, %s47
    %s65 = sphi 0, %s65
    %s67 = sphi 0, %s65
    %s68 = sphi 0, %s67
    %s82 = sphi 0, %s68
    %s86 = sphi 0, %s86
    %s88 = sphi 0, %s86
    %s89 = sphi 0, %s88
    %s103 = sphi 0, %s89
    %s109 = sphi 0, %s111
    %s112 = sphi 0, %s109
    %s113 = sphi 0, %s112
    %s129 = sphi 0, %s113
  $region4: #{basic_block_forward.1} parent=0 // loop_header_branch
    %13 = sbr.rel (%p11) target = $region8
  $region5: #{basic_block_forward.1} parent=0 // loop_body
    %s15 = ssub.s32 %s10, 1
    %s16 = ssub.s32 %s10, 2
    %s17 = sadd.s32 %s10, 1
    %s18 = ssub.s32 %s10, %s17
    %p19 = scmp.eq.s32.totalorder %s18, 0
    %s21 = sadd.s32 %s20, 1
    %s22 = scalar_select %p19, %s20, %s21
    %p25 = pneg %p19
    %p26 = scmp.eq.s32.totalorder %s10, 1
    %p27 = por %p25, %p26
    %p28 = scmp.ne.s32.totalorder %s20, %s23
    %p29 = scmp.eq.s32.totalorder %s10, 0
    %p30 = por %p28, %p29
    %p31 = scmp.ne.s32.totalorder %s20, %s23
    %p32 = scmp.eq.s32.totalorder %s15, 1
    %p33 = por %p31, %p32
    %p34 = scmp.ne.s32.totalorder %s23, %s24
    %p35 = scmp.eq.s32.totalorder %s15, 0
    %p36 = por %p34, %p35
    %p37 = scmp.ne.s32.totalorder %s23, %s24
    %p38 = scmp.eq.s32.totalorder %s16, 1
    %p39 = por %p37, %p38
    %p41 = scmp.ne.s32.totalorder %s24, %s40
    %p42 = scmp.eq.s32.totalorder %s16, 0
    %p43 = por %p41, %p42
    %s45 = sadd.s32 %s44, 1
    %p48 = scmp.eq.s32.totalorder %s10, 1
    %p49 = scmp.ne.s32.totalorder %s44, %s46
    %p50 = scmp.eq.s32.totalorder %s10, 0
    %p51 = por %p49, %p50
    %p52 = scmp.ne.s32.totalorder %s44, %s46
    %p53 = scmp.eq.s32.totalorder %s15, 1
    %p54 = por %p52, %p53
    %p55 = scmp.ne.s32.totalorder %s46, %s47
    %p56 = scmp.eq.s32.totalorder %s15, 0
    %p57 = por %p55, %p56
    %p58 = scmp.ne.s32.totalorder %s46, %s47
    %p59 = scmp.eq.s32.totalorder %s16, 1
    %p60 = por %p58, %p59
    %p62 = scmp.ne.s32.totalorder %s47, %s61
    %p63 = scmp.eq.s32.totalorder %s16, 0
    %p64 = por %p62, %p63
    %s66 = sadd.s32 %s65, 1
    %p69 = scmp.eq.s32.totalorder %s10, 1
    %p70 = scmp.ne.s32.totalorder %s65, %s67
    %p71 = scmp.eq.s32.totalorder %s10, 0
    %p72 = por %p70, %p71
    %p73 = scmp.ne.s32.totalorder %s65, %s67
    %p74 = scmp.eq.s32.totalorder %s15, 1
    %p75 = por %p73, %p74
    %p76 = scmp.ne.s32.totalorder %s67, %s68
    %p77 = scmp.eq.s32.totalorder %s15, 0
    %p78 = por %p76, %p77
    %p79 = scmp.ne.s32.totalorder %s67, %s68
    %p80 = scmp.eq.s32.totalorder %s16, 1
    %p81 = por %p79, %p80
    %p83 = scmp.ne.s32.totalorder %s68, %s82
    %p84 = scmp.eq.s32.totalorder %s16, 0
    %p85 = por %p83, %p84
    %s87 = sadd.s32 %s86, 1
    %p90 = scmp.eq.s32.totalorder %s10, 1
    %p91 = scmp.ne.s32.totalorder %s86, %s88
    %p92 = scmp.eq.s32.totalorder %s10, 0
    %p93 = por %p91, %p92
    %p94 = scmp.ne.s32.totalorder %s86, %s88
    %p95 = scmp.eq.s32.totalorder %s15, 1
    %p96 = por %p94, %p95
    %p97 = scmp.ne.s32.totalorder %s88, %s89
    %p98 = scmp.eq.s32.totalorder %s15, 0
    %p99 = por %p97, %p98
    %p100 = scmp.ne.s32.totalorder %s88, %s89
    %p101 = scmp.eq.s32.totalorder %s16, 1
    %p102 = por %p100, %p101
    %p104 = scmp.ne.s32.totalorder %s89, %s103
    %p105 = scmp.eq.s32.totalorder %s16, 0
    %p106 = por %p104, %p105
    %s107 = ssub.s32 %s10, %s17
    %p108 = scmp.eq.s32.totalorder %s107, 0
    %s110 = sadd.s32 %s109, 1
    %s111 = scalar_select %p108, %s109, %s110
    %p114 = pneg %p108
    %p115 = scmp.eq.s32.totalorder %s10, 1
    %p116 = por %p114, %p115
    %p117 = scmp.ne.s32.totalorder %s109, %s112
    %p118 = scmp.eq.s32.totalorder %s10, 0
    %p119 = por %p117, %p118
    %p120 = scmp.ne.s32.totalorder %s109, %s112
    %p121 = scmp.eq.s32.totalorder %s15, 1
    %p122 = por %p120, %p121
    %p123 = scmp.ne.s32.totalorder %s112, %s113
    %p124 = scmp.eq.s32.totalorder %s15, 0
    %p125 = por %p123, %p124
    %p126 = scmp.ne.s32.totalorder %s112, %s113
    %p127 = scmp.eq.s32.totalorder %s16, 1
    %p128 = por %p126, %p127
    %p130 = scmp.ne.s32.totalorder %s113, %s129
    %p131 = scmp.eq.s32.totalorder %s16, 0
    %p132 = por %p130, %p131
    %p133 = scmp.le.s32.totalorder 1, %s10
    %p134 = scmp.lt.s32.totalorder %s10, 3
    %p135 = pnand %p133, %p134
    %p136 = pneg %p135
    // Predicated region
    $region9: #{basic_block_forward.1} parent=5 // pred_check
      _
    $region10: #{basic_block_forward.1} parent=5 // pred_check_branch
      %138 = sbr.rel (%p135) target = $region12
    $region11: #{basic_block_forward.1} parent=5 // pred_region
      %s139 = ssub.s32 %s10, 1
      // Predicated region
      $region13: #{basic_block_forward.1} parent=11 // pred_check
        %p140 = pneg %p57
      $region14: #{basic_block_forward.1} parent=11 // pred_check_branch
        %142 = sbr.rel (%p140) target = $region16
      $region15: #{basic_block_forward.1} parent=11 // pred_region
        _
      $region16: #{basic_block_forward.1} parent=11 // pred_fallthru
        _
      // Predicated region
      $region17: #{basic_block_forward.1} parent=11 // pred_check
        %p143 = pneg %p78
      $region18: #{basic_block_forward.1} parent=11 // pred_check_branch
        %145 = sbr.rel (%p143) target = $region20
      $region19: #{basic_block_forward.1} parent=11 // pred_region
        _
      $region20: #{basic_block_forward.1} parent=11 // pred_fallthru
        _
      // Predicated region
      $region21: #{basic_block_forward.1} parent=11 // pred_check
        %p146 = pneg %p99
      $region22: #{basic_block_forward.1} parent=11 // pred_check_branch
        %148 = sbr.rel (%p146) target = $region24
      $region23: #{basic_block_forward.1} parent=11 // pred_region
        _
      $region24: #{basic_block_forward.1} parent=11 // pred_fallthru
        _
    $region12: #{basic_block_forward.1} parent=5 // pred_fallthru
      _
    %p149 = scmp.lt.s32.totalorder %s10, 2
    // Predicated region
    $region25: #{basic_block_forward.1} parent=5 // pred_check
      %p150 = pneg %p149
    $region26: #{basic_block_forward.1} parent=5 // pred_check_branch
      %152 = sbr.rel (%p150) target = $region28
    $region27: #{basic_block_forward.1} parent=5 // pred_region
      // Predicated region
      $region29: #{basic_block_forward.1} parent=27 // pred_check
        %p153 = pneg %p30
      $region30: #{basic_block_forward.1} parent=27 // pred_check_branch
        %155 = sbr.rel (%p153) target = $region32
      $region31: #{basic_block_forward.1} parent=27 // pred_region
        %p156 = scmp.lt.s32.totalorder %s10, 1
        %s157 = scalar_select %p156, %s10, 1
        %s158 = smul.addr %s157, 32
        %s159 = smul.addr %s158, 8
        %s160 = scalar_lea.vmem %s0, %s159
      $region32: #{basic_block_forward.1} parent=27 // pred_fallthru
        _
    $region28: #{basic_block_forward.1} parent=5 // pred_fallthru
      _
    %p161 = scmp.le.s32.totalorder 1, %s10
    %p162 = scmp.lt.s32.totalorder %s10, 3
    %p163 = pnand %p161, %p162
    %p164 = pneg %p163
    // Predicated region
    $region33: #{basic_block_forward.1} parent=5 // pred_check
      _
    $region34: #{basic_block_forward.1} parent=5 // pred_check_branch
      %166 = sbr.rel (%p163) target = $region36
    $region35: #{basic_block_forward.1} parent=5 // pred_region
      %s167 = ssub.s32 %s10, 1
      %p168 = scmp.lt.s32.totalorder %s15, 1
      %s169 = scalar_select %p168, %s15, 1
      %s170 = smul.addr %s169, 32
      %s171 = smul.addr %s170, 8
      %s172 = scalar_lea.vmem %s0, %s171
      %p173 = pneg %p36
      %p174 = pneg %p33
      %p175 = pneg %p57
      %p176 = pneg %p54
      %p177 = pneg %p78
      %p178 = pneg %p75
      %p179 = pneg %p99
      %p180 = pneg %p96
      %p181 = pneg %p125
      %p182 = pneg %p122
      %p183 = scmp.lt.s32.totalorder %s15, 1
      %s184 = scalar_select %p183, %s15, 1
      %s185 = smul.addr %s184, 32
      %s186 = smul.addr %s185, 8
      %s187 = scalar_lea.vmem %s4, %s186
      %p188 = scmp.lt.s32.totalorder %s15, 1
      %s189 = scalar_select %p188, %s15, 1
      %s190 = smul.addr %s189, 32
      %s191 = smul.addr %s190, 8
      %s192 = scalar_lea.vmem %s0, %s191
      %p193 = scmp.lt.s32.totalorder %s15, 1
      %s194 = scalar_select %p193, %s15, 1
      %s195 = smul.addr %s194, 32
      %s196 = smul.addr %s195, 8
      %s197 = scalar_lea.vmem %s4, %s196
      %198 = vst [vmem:[#allocation2] sm:$0xff] 0.0
      %199 = vst [vmem:[#allocation2 + $0x8] sm:$0xff] 0.0
      %200 = vst [vmem:[#allocation2 + $0x10] sm:$0xff] 0.0
      %201 = vst [vmem:[#allocation2 + $0x18] sm:$0x1] 0.0
      %202 = vst [vmem:[#allocation2 + $0x20] sm:$0xff] 0.0
      %203 = vst [vmem:[#allocation2 + $0x28] sm:$0xff] 0.0
      %204 = vst [vmem:[#allocation2 + $0x30] sm:$0xff] 0.0
      %205 = vst [vmem:[#allocation2 + $0x38] sm:$0x1] 0.0
      %206 = vst [vmem:[#allocation2 + $0x40] sm:$0xff] 0.0
      %207 = vst [vmem:[#allocation2 + $0x48] sm:$0xff] 0.0
      %208 = vst [vmem:[#allocation2 + $0x50] sm:$0xff] 0.0
      %209 = vst [vmem:[#allocation2 + $0x58] sm:$0x1] 0.0
      %210 = vst [vmem:[#allocation2 + $0x60] sm:$0xff] 0.0
      %211 = vst [vmem:[#allocation2 + $0x68] sm:$0xff] 0.0
      %212 = vst [vmem:[#allocation2 + $0x70] sm:$0xff] 0.0
      %213 = vst [vmem:[#allocation2 + $0x78] sm:$0x1] 0.0
      %214 = vst [vmem:[#allocation2 + $0x80] sm:$0xff] 0.0
      %215 = vst [vmem:[#allocation2 + $0x88] sm:$0xff] 0.0
      %216 = vst [vmem:[#allocation2 + $0x90] sm:$0xff] 0.0
      %217 = vst [vmem:[#allocation2 + $0x98] sm:$0x1] 0.0
      %218 = vst [vmem:[#allocation2 + $0xa0] sm:$0xff] 0.0
      %219 = vst [vmem:[#allocation2 + $0xa8] sm:$0xff] 0.0
      %220 = vst [vmem:[#allocation2 + $0xb0] sm:$0xff] 0.0
      %221 = vst [vmem:[#allocation2 + $0xb8] sm:$0x1] 0.0
      %222 = vst [vmem:[#allocation2 + $0xc0] sm:$0xff] 0.0
      %223 = vst [vmem:[#allocation2 + $0xc8] sm:$0xff] 0.0
      %224 = vst [vmem:[#allocation2 + $0xd0] sm:$0xff] 0.0
      %225 = vst [vmem:[#allocation2 + $0xd8] sm:$0x1] 0.0
      %226 = vst [vmem:[#allocation2 + $0xe0] sm:$0xff] 0.0
      %227 = vst [vmem:[#allocation2 + $0xe8] sm:$0xff] 0.0
      %228 = vst [vmem:[#allocation2 + $0xf0] sm:$0xff] 0.0
      %229 = vst [vmem:[#allocation2 + $0xf8] sm:$0x1] 0.0
      %230 = vst [vmem:[#allocation2 + $0x100] sm:$0xff] 0.0
      %231 = vst [vmem:[#allocation2 + $0x108] sm:$0xff] 0.0
      %232 = vst [vmem:[#allocation2 + $0x110] sm:$0xff] 0.0
      %233 = vst [vmem:[#allocation2 + $0x118] sm:$0x1] 0.0
      %234 = vst [vmem:[#allocation2 + $0x120] sm:$0xff] 0.0
      %235 = vst [vmem:[#allocation2 + $0x128] sm:$0xff] 0.0
      %236 = vst [vmem:[#allocation2 + $0x130] sm:$0xff] 0.0
      %237 = vst [vmem:[#allocation2 + $0x138] sm:$0x1] 0.0
      %238 = vst [vmem:[#allocation2 + $0x140] sm:$0xff] 0.0
      %239 = vst [vmem:[#allocation2 + $0x148] sm:$0xff] 0.0
      %240 = vst [vmem:[#allocation2 + $0x150] sm:$0xff] 0.0
      %241 = vst [vmem:[#allocation2 + $0x158] sm:$0x1] 0.0
      %242 = vst [vmem:[#allocation2 + $0x160] sm:$0xff] 0.0
      %243 = vst [vmem:[#allocation2 + $0x168] sm:$0xff] 0.0
      %244 = vst [vmem:[#allocation2 + $0x170] sm:$0xff] 0.0
      %245 = vst [vmem:[#allocation2 + $0x178] sm:$0x1] 0.0
      %246 = vst [vmem:[#allocation2 + $0x180] sm:$0xff] 0.0
      %247 = vst [vmem:[#allocation2 + $0x188] sm:$0xff] 0.0
      %248 = vst [vmem:[#allocation2 + $0x190] sm:$0xff] 0.0
      %249 = vst [vmem:[#allocation2 + $0x198] sm:$0x1] 0.0
      %250 = vst [vmem:[#allocation2 + $0x1a0] sm:$0xff] 0.0
      %251 = vst [vmem:[#allocation2 + $0x1a8] sm:$0xff] 0.0
      %252 = vst [vmem:[#allocation2 + $0x1b0] sm:$0xff] 0.0
      %253 = vst [vmem:[#allocation2 + $0x1b8] sm:$0x1] 0.0
      %254 = vst [vmem:[#allocation2 + $0x1c0] sm:$0xff] 0.0
      %255 = vst [vmem:[#allocation2 + $0x1c8] sm:$0xff] 0.0
      %256 = vst [vmem:[#allocation2 + $0x1d0] sm:$0xff] 0.0
      %257 = vst [vmem:[#allocation2 + $0x1d8] sm:$0x1] 0.0
      %258 = vst [vmem:[#allocation2 + $0x1e0] sm:$0xff] 0.0
      %259 = vst [vmem:[#allocation2 + $0x1e8] sm:$0xff] 0.0
      %260 = vst [vmem:[#allocation2 + $0x1f0] sm:$0xff] 0.0
      %261 = vst [vmem:[#allocation2 + $0x1f8] sm:$0x1] 0.0
      %262 = vst [vmem:[#allocation2 + $0x200] sm:$0xff] 0.0
      %263 = vst [vmem:[#allocation2 + $0x208] sm:$0xff] 0.0
      %264 = vst [vmem:[#allocation2 + $0x210] sm:$0xff] 0.0
      %265 = vst [vmem:[#allocation2 + $0x218] sm:$0x1] 0.0
      %266 = vst [vmem:[#allocation2 + $0x220] sm:$0xff] 0.0
      %267 = vst [vmem:[#allocation2 + $0x228] sm:$0xff] 0.0
      %268 = vst [vmem:[#allocation2 + $0x230] sm:$0xff] 0.0
      %269 = vst [vmem:[#allocation2 + $0x238] sm:$0x1] 0.0
      %v270 = vld [vmem:[%s192] sm:$0xff]
      %v271 = vld [vmem:[%s192 + $0x8] sm:$0xff]
      %v272 = vld [vmem:[%s192 + $0x10] sm:$0xff]
      %v273 = vld [vmem:[%s192 + $0x18] sm:$0xff]
      %v274 = vld [vmem:[%s192 + $0x20] sm:$0xff]
      %v275 = vld [vmem:[%s192 + $0x28] sm:$0xff]
      %v276 = vld [vmem:[%s192 + $0x30] sm:$0xff]
      %v277 = vld [vmem:[%s192 + $0x38] sm:$0xff]
      %v278 = vld [vmem:[%s192 + $0x40] sm:$0xff]
      %v279 = vld [vmem:[%s192 + $0x48] sm:$0xff]
      %v280 = vld [vmem:[%s192 + $0x50] sm:$0xff]
      %v281 = vld [vmem:[%s192 + $0x58] sm:$0xff]
      %v282 = vld [vmem:[%s192 + $0x60] sm:$0xff]
      %v283 = vld [vmem:[%s192 + $0x68] sm:$0xff]
      %v284 = vld [vmem:[%s192 + $0x70] sm:$0xff]
      %v285 = vld [vmem:[%s192 + $0x78] sm:$0xff]
      %v286 = vld [vmem:[%s192 + $0x80] sm:$0xff]
      %v287 = vld [vmem:[%s192 + $0x88] sm:$0xff]
      %v288 = vld [vmem:[%s192 + $0x90] sm:$0xff]
      %v289 = vld [vmem:[%s192 + $0x98] sm:$0xff]
      %v290 = vld [vmem:[%s192 + $0xa0] sm:$0xff]
      %v291 = vld [vmem:[%s192 + $0xa8] sm:$0xff]
      %v292 = vld [vmem:[%s192 + $0xb0] sm:$0xff]
      %v293 = vld [vmem:[%s192 + $0xb8] sm:$0xff]
      %v294 = vld [vmem:[%s192 + $0xc0] sm:$0xff]
      %v295 = vld [vmem:[%s192 + $0xc8] sm:$0xff]
      %v296 = vld [vmem:[%s192 + $0xd0] sm:$0xff]
      %v297 = vld [vmem:[%s192 + $0xd8] sm:$0xff]
      %v298 = vld [vmem:[%s192 + $0xe0] sm:$0xff]
      %v299 = vld [vmem:[%s192 + $0xe8] sm:$0xff]
      %v300 = vld [vmem:[%s192 + $0xf0] sm:$0xff]
      %v301 = vld [vmem:[%s192 + $0xf8] sm:$0xff]
      %s302 = scalar_lea.vmem [#allocation2], 32
      %303 = vst [vmem:[%s302 + $0x8] sm:$0xff] %v270
      %304 = vst [vmem:[%s302 + $0x10] sm:$0xff] %v271
      %305 = vst [vmem:[%s302 + $0x28] sm:$0xff] %v272
      %306 = vst [vmem:[%s302 + $0x30] sm:$0xff] %v273
      %307 = vst [vmem:[%s302 + $0x48] sm:$0xff] %v274
      %308 = vst [vmem:[%s302 + $0x50] sm:$0xff] %v275
      %309 = vst [vmem:[%s302 + $0x68] sm:$0xff] %v276
      %310 = vst [vmem:[%s302 + $0x70] sm:$0xff] %v277
      %311 = vst [vmem:[%s302 + $0x88] sm:$0xff] %v278
      %312 = vst [vmem:[%s302 + $0x90] sm:$0xff] %v279
      %313 = vst [vmem:[%s302 + $0xa8] sm:$0xff] %v280
      %314 = vst [vmem:[%s302 + $0xb0] sm:$0xff] %v281
      %315 = vst [vmem:[%s302 + $0xc8] sm:$0xff] %v282
      %316 = vst [vmem:[%s302 + $0xd0] sm:$0xff] %v283
      %317 = vst [vmem:[%s302 + $0xe8] sm:$0xff] %v284
      %318 = vst [vmem:[%s302 + $0xf0] sm:$0xff] %v285
      %319 = vst [vmem:[%s302 + $0x108] sm:$0xff] %v286
      %320 = vst [vmem:[%s302 + $0x110] sm:$0xff] %v287
      %321 = vst [vmem:[%s302 + $0x128] sm:$0xff] %v288
      %322 = vst [vmem:[%s302 + $0x130] sm:$0xff] %v289
      %323 = vst [vmem:[%s302 + $0x148] sm:$0xff] %v290
      %324 = vst [vmem:[%s302 + $0x150] sm:$0xff] %v291
      %325 = vst [vmem:[%s302 + $0x168] sm:$0xff] %v292
      %326 = vst [vmem:[%s302 + $0x170] sm:$0xff] %v293
      %327 = vst [vmem:[%s302 + $0x188] sm:$0xff] %v294
      %328 = vst [vmem:[%s302 + $0x190] sm:$0xff] %v295
      %329 = vst [vmem:[%s302 + $0x1a8] sm:$0xff] %v296
      %330 = vst [vmem:[%s302 + $0x1b0] sm:$0xff] %v297
      %331 = vst [vmem:[%s302 + $0x1c8] sm:$0xff] %v298
      %332 = vst [vmem:[%s302 + $0x1d0] sm:$0xff] %v299
      %333 = vst [vmem:[%s302 + $0x1e8] sm:$0xff] %v300
      %334 = vst [vmem:[%s302 + $0x1f0] sm:$0xff] %v301
      %v335 = vld [vmem:[#allocation2 + $0x7] sm:$0xff]
      %v336 = vld [vmem:[#allocation2 + $0xf] sm:$0xff]
      %v337 = vld [vmem:[#allocation2 + $0x27] sm:$0xff]
      %v338 = vld [vmem:[#allocation2 + $0x2f] sm:$0xff]
      %v339 = vld [vmem:[#allocation2 + $0x47] sm:$0xff]
      %v340 = vld [vmem:[#allocation2 + $0x4f] sm:$0xff]
      %v341 = vld [vmem:[#allocation2 + $0x67] sm:$0xff]
      %v342 = vld [vmem:[#allocation2 + $0x6f] sm:$0xff]
      %v343 = vld [vmem:[#allocation2 + $0x87] sm:$0xff]
      %v344 = vld [vmem:[#allocation2 + $0x8f] sm:$0xff]
      %v345 = vld [vmem:[#allocation2 + $0xa7] sm:$0xff]
      %v346 = vld [vmem:[#allocation2 + $0xaf] sm:$0xff]
      %v347 = vld [vmem:[#allocation2 + $0xc7] sm:$0xff]
      %v348 = vld [vmem:[#allocation2 + $0xcf] sm:$0xff]
      %v349 = vld [vmem:[#allocation2 + $0xe7] sm:$0xff]
      %v350 = vld [vmem:[#allocation2 + $0xef] sm:$0xff]
      %v351 = vld [vmem:[#allocation2 + $0x107] sm:$0xff]
      %v352 = vld [vmem:[#allocation2 + $0x10f] sm:$0xff]
      %v353 = vld [vmem:[#allocation2 + $0x127] sm:$0xff]
      %v354 = vld [vmem:[#allocation2 + $0x12f] sm:$0xff]
      %v355 = vld [vmem:[#allocation2 + $0x147] sm:$0xff]
      %v356 = vld [vmem:[#allocation2 + $0x14f] sm:$0xff]
      %v357 = vld [vmem:[#allocation2 + $0x167] sm:$0xff]
      %v358 = vld [vmem:[#allocation2 + $0x16f] sm:$0xff]
      %v359 = vld [vmem:[#allocation2 + $0x187] sm:$0xff]
      %v360 = vld [vmem:[#allocation2 + $0x18f] sm:$0xff]
      %v361 = vld [vmem:[#allocation2 + $0x1a7] sm:$0xff]
      %v362 = vld [vmem:[#allocation2 + $0x1af] sm:$0xff]
      %v363 = vld [vmem:[#allocation2 + $0x1c7] sm:$0xff]
      %v364 = vld [vmem:[#allocation2 + $0x1cf] sm:$0xff]
      %v365 = vld [vmem:[#allocation2 + $0x1e7] sm:$0xff]
      %v366 = vld [vmem:[#allocation2 + $0x1ef] sm:$0xff]
      %367 = vst [vmem:[#allocation4] sm:$0xff] %v335
      %368 = vst [vmem:[#allocation4 + $0x48] sm:$0xff] %v336
      %369 = vst [vmem:[#allocation4 + $0x90] sm:$0xff] %v337
      %370 = vst [vmem:[#allocation4 + $0xd8] sm:$0xff] %v338
      %371 = vst [vmem:[#allocation4 + $0x120] sm:$0xff] %v339
      %372 = vst [vmem:[#allocation4 + $0x168] sm:$0xff] %v340
      %373 = vst [vmem:[#allocation4 + $0x1b0] sm:$0xff] %v341
      %374 = vst [vmem:[#allocation4 + $0x1f8] sm:$0xff] %v342
      %375 = vst [vmem:[#allocation4 + $0x240] sm:$0xff] %v343
      %376 = vst [vmem:[#allocation4 + $0x288] sm:$0xff] %v344
      %377 = vst [vmem:[#allocation4 + $0x2d0] sm:$0xff] %v345
      %378 = vst [vmem:[#allocation4 + $0x318] sm:$0xff] %v346
      %379 = vst [vmem:[#allocation4 + $0x360] sm:$0xff] %v347
      %380 = vst [vmem:[#allocation4 + $0x3a8] sm:$0xff] %v348
      %381 = vst [vmem:[#allocation4 + $0x3f0] sm:$0xff] %v349
      %382 = vst [vmem:[#allocation4 + $0x438] sm:$0xff] %v350
      %383 = vst [vmem:[#allocation4 + $0x480] sm:$0xff] %v351
      %384 = vst [vmem:[#allocation4 + $0x4c8] sm:$0xff] %v352
      %385 = vst [vmem:[#allocation4 + $0x510] sm:$0xff] %v353
      %386 = vst [vmem:[#allocation4 + $0x558] sm:$0xff] %v354
      %387 = vst [vmem:[#allocation4 + $0x5a0] sm:$0xff] %v355
      %388 = vst [vmem:[#allocation4 + $0x5e8] sm:$0xff] %v356
      %389 = vst [vmem:[#allocation4 + $0x630] sm:$0xff] %v357
      %390 = vst [vmem:[#allocation4 + $0x678] sm:$0xff] %v358
      %391 = vst [vmem:[#allocation4 + $0x6c0] sm:$0xff] %v359
      %392 = vst [vmem:[#allocation4 + $0x708] sm:$0xff] %v360
      %393 = vst [vmem:[#allocation4 + $0x750] sm:$0xff] %v361
      %394 = vst [vmem:[#allocation4 + $0x798] sm:$0xff] %v362
      %395 = vst [vmem:[#allocation4 + $0x7e0] sm:$0xff] %v363
      %396 = vst [vmem:[#allocation4 + $0x828] sm:$0xff] %v364
      %397 = vst [vmem:[#allocation4 + $0x870] sm:$0xff] %v365
      %398 = vst [vmem:[#allocation4 + $0x8b8] sm:$0xff] %v366
      %v399 = vld [vmem:[#allocation2 + $0x8] sm:$0xff]
      %v400 = vld [vmem:[#allocation2 + $0x10] sm:$0xff]
      %v401 = vld [vmem:[#allocation2 + $0x28] sm:$0xff]
      %v402 = vld [vmem:[#allocation2 + $0x30] sm:$0xff]
      %v403 = vld [vmem:[#allocation2 + $0x48] sm:$0xff]
      %v404 = vld [vmem:[#allocation2 + $0x50] sm:$0xff]
      %v405 = vld [vmem:[#allocation2 + $0x68] sm:$0xff]
      %v406 = vld [vmem:[#allocation2 + $0x70] sm:$0xff]
      %v407 = vld [vmem:[#allocation2 + $0x88] sm:$0xff]
      %v408 = vld [vmem:[#allocation2 + $0x90] sm:$0xff]
      %v409 = vld [vmem:[#allocation2 + $0xa8] sm:$0xff]
      %v410 = vld [vmem:[#allocation2 + $0xb0] sm:$0xff]
      %v411 = vld [vmem:[#allocation2 + $0xc8] sm:$0xff]
      %v412 = vld [vmem:[#allocation2 + $0xd0] sm:$0xff]
      %v413 = vld [vmem:[#allocation2 + $0xe8] sm:$0xff]
      %v414 = vld [vmem:[#allocation2 + $0xf0] sm:$0xff]
      %v415 = vld [vmem:[#allocation2 + $0x108] sm:$0xff]
      %v416 = vld [vmem:[#allocation2 + $0x110] sm:$0xff]
      %v417 = vld [vmem:[#allocation2 + $0x128] sm:$0xff]
      %v418 = vld [vmem:[#allocation2 + $0x130] sm:$0xff]
      %v419 = vld [vmem:[#allocation2 + $0x148] sm:$0xff]
      %v420 = vld [vmem:[#allocation2 + $0x150] sm:$0xff]
      %v421 = vld [vmem:[#allocation2 + $0x168] sm:$0xff]
      %v422 = vld [vmem:[#allocation2 + $0x170] sm:$0xff]
      %v423 = vld [vmem:[#allocation2 + $0x188] sm:$0xff]
      %v424 = vld [vmem:[#allocation2 + $0x190] sm:$0xff]
      %v425 = vld [vmem:[#allocation2 + $0x1a8] sm:$0xff]
      %v426 = vld [vmem:[#allocation2 + $0x1b0] sm:$0xff]
      %v427 = vld [vmem:[#allocation2 + $0x1c8] sm:$0xff]
      %v428 = vld [vmem:[#allocation2 + $0x1d0] sm:$0xff]
      %v429 = vld [vmem:[#allocation2 + $0x1e8] sm:$0xff]
      %v430 = vld [vmem:[#allocation2 + $0x1f0] sm:$0xff]
      %431 = vst [vmem:[#allocation4 + $0x8] sm:$0xff] %v399
      %432 = vst [vmem:[#allocation4 + $0x50] sm:$0xff] %v400
      %433 = vst [vmem:[#allocation4 + $0x98] sm:$0xff] %v401
      %434 = vst [vmem:[#allocation4 + $0xe0] sm:$0xff] %v402
      %435 = vst [vmem:[#allocation4 + $0x128] sm:$0xff] %v403
      %436 = vst [vmem:[#allocation4 + $0x170] sm:$0xff] %v404
      %437 = vst [vmem:[#allocation4 + $0x1b8] sm:$0xff] %v405
      %438 = vst [vmem:[#allocation4 + $0x200] sm:$0xff] %v406
      %439 = vst [vmem:[#allocation4 + $0x248] sm:$0xff] %v407
      %440 = vst [vmem:[#allocation4 + $0x290] sm:$0xff] %v408
      %441 = vst [vmem:[#allocation4 + $0x2d8] sm:$0xff] %v409
      %442 = vst [vmem:[#allocation4 + $0x320] sm:$0xff] %v410
      %443 = vst [vmem:[#allocation4 + $0x368] sm:$0xff] %v411
      %444 = vst [vmem:[#allocation4 + $0x3b0] sm:$0xff] %v412
      %445 = vst [vmem:[#allocation4 + $0x3f8] sm:$0xff] %v413
      %446 = vst [vmem:[#allocation4 + $0x440] sm:$0xff] %v414
      %447 = vst [vmem:[#allocation4 + $0x488] sm:$0xff] %v415
      %448 = vst [vmem:[#allocation4 + $0x4d0] sm:$0xff] %v416
      %449 = vst [vmem:[#allocation4 + $0x518] sm:$0xff] %v417
      %450 = vst [vmem:[#allocation4 + $0x560] sm:$0xff] %v418
      %451 = vst [vmem:[#allocation4 + $0x5a8] sm:$0xff] %v419
      %452 = vst [vmem:[#allocation4 + $0x5f0] sm:$0xff] %v420
      %453 = vst [vmem:[#allocation4 + $0x638] sm:$0xff] %v421
      %454 = vst [vmem:[#allocation4 + $0x680] sm:$0xff] %v422
      %455 = vst [vmem:[#allocation4 + $0x6c8] sm:$0xff] %v423
      %456 = vst [vmem:[#allocation4 + $0x710] sm:$0xff] %v424
      %457 = vst [vmem:[#allocation4 + $0x758] sm:$0xff] %v425
      %458 = vst [vmem:[#allocation4 + $0x7a0] sm:$0xff] %v426
      %459 = vst [vmem:[#allocation4 + $0x7e8] sm:$0xff] %v427
      %460 = vst [vmem:[#allocation4 + $0x830] sm:$0xff] %v428
      %461 = vst [vmem:[#allocation4 + $0x878] sm:$0xff] %v429
      %462 = vst [vmem:[#allocation4 + $0x8c0] sm:$0xff] %v430
      %v463 = vld [vmem:[#allocation2 + $0x9] sm:$0xff]
      %v464 = vld [vmem:[#allocation2 + $0x11] sm:$0xff]
      %v465 = vld [vmem:[#allocation2 + $0x29] sm:$0xff]
      %v466 = vld [vmem:[#allocation2 + $0x31] sm:$0xff]
      %v467 = vld [vmem:[#allocation2 + $0x49] sm:$0xff]
      %v468 = vld [vmem:[#allocation2 + $0x51] sm:$0xff]
      %v469 = vld [vmem:[#allocation2 + $0x69] sm:$0xff]
      %v470 = vld [vmem:[#allocation2 + $0x71] sm:$0xff]
      %v471 = vld [vmem:[#allocation2 + $0x89] sm:$0xff]
      %v472 = vld [vmem:[#allocation2 + $0x91] sm:$0xff]
      %v473 = vld [vmem:[#allocation2 + $0xa9] sm:$0xff]
      %v474 = vld [vmem:[#allocation2 + $0xb1] sm:$0xff]
      %v475 = vld [vmem:[#allocation2 + $0xc9] sm:$0xff]
      %v476 = vld [vmem:[#allocation2 + $0xd1] sm:$0xff]
      %v477 = vld [vmem:[#allocation2 + $0xe9] sm:$0xff]
      %v478 = vld [vmem:[#allocation2 + $0xf1] sm:$0xff]
      %v479 = vld [vmem:[#allocation2 + $0x109] sm:$0xff]
      %v480 = vld [vmem:[#allocation2 + $0x111] sm:$0xff]
      %v481 = vld [vmem:[#allocation2 + $0x129] sm:$0xff]
      %v482 = vld [vmem:[#allocation2 + $0x131] sm:$0xff]
      %v483 = vld [vmem:[#allocation2 + $0x149] sm:$0xff]
      %v484 = vld [vmem:[#allocation2 + $0x151] sm:$0xff]
      %v485 = vld [vmem:[#allocation2 + $0x169] sm:$0xff]
      %v486 = vld [vmem:[#allocation2 + $0x171] sm:$0xff]
      %v487 = vld [vmem:[#allocation2 + $0x189] sm:$0xff]
      %v488 = vld [vmem:[#allocation2 + $0x191] sm:$0xff]
      %v489 = vld [vmem:[#allocation2 + $0x1a9] sm:$0xff]
      %v490 = vld [vmem:[#allocation2 + $0x1b1] sm:$0xff]
      %v491 = vld [vmem:[#allocation2 + $0x1c9] sm:$0xff]
      %v492 = vld [vmem:[#allocation2 + $0x1d1] sm:$0xff]
      %v493 = vld [vmem:[#allocation2 + $0x1e9] sm:$0xff]
      %v494 = vld [vmem:[#allocation2 + $0x1f1] sm:$0xff]
      %495 = vst [vmem:[#allocation4 + $0x10] sm:$0xff] %v463
      %496 = vst [vmem:[#allocation4 + $0x58] sm:$0xff] %v464
      %497 = vst [vmem:[#allocation4 + $0xa0] sm:$0xff] %v465
      %498 = vst [vmem:[#allocation4 + $0xe8] sm:$0xff] %v466
      %499 = vst [vmem:[#allocation4 + $0x130] sm:$0xff] %v467
      %500 = vst [vmem:[#allocation4 + $0x178] sm:$0xff] %v468
      %501 = vst [vmem:[#allocation4 + $0x1c0] sm:$0xff] %v469
      %502 = vst [vmem:[#allocation4 + $0x208] sm:$0xff] %v470
      %503 = vst [vmem:[#allocation4 + $0x250] sm:$0xff] %v471
      %504 = vst [vmem:[#allocation4 + $0x298] sm:$0xff] %v472
      %505 = vst [vmem:[#allocation4 + $0x2e0] sm:$0xff] %v473
      %506 = vst [vmem:[#allocation4 + $0x328] sm:$0xff] %v474
      %507 = vst [vmem:[#allocation4 + $0x370] sm:$0xff] %v475
      %508 = vst [vmem:[#allocation4 + $0x3b8] sm:$0xff] %v476
      %509 = vst [vmem:[#allocation4 + $0x400] sm:$0xff] %v477
      %510 = vst [vmem:[#allocation4 + $0x448] sm:$0xff] %v478
      %511 = vst [vmem:[#allocation4 + $0x490] sm:$0xff] %v479
      %512 = vst [vmem:[#allocation4 + $0x4d8] sm:$0xff] %v480
      %513 = vst [vmem:[#allocation4 + $0x520] sm:$0xff] %v481
      %514 = vst [vmem:[#allocation4 + $0x568] sm:$0xff] %v482
      %515 = vst [vmem:[#allocation4 + $0x5b0] sm:$0xff] %v483
      %516 = vst [vmem:[#allocation4 + $0x5f8] sm:$0xff] %v484
      %517 = vst [vmem:[#allocation4 + $0x640] sm:$0xff] %v485
      %518 = vst [vmem:[#allocation4 + $0x688] sm:$0xff] %v486
      %519 = vst [vmem:[#allocation4 + $0x6d0] sm:$0xff] %v487
      %520 = vst [vmem:[#allocation4 + $0x718] sm:$0xff] %v488
      %521 = vst [vmem:[#allocation4 + $0x760] sm:$0xff] %v489
      %522 = vst [vmem:[#allocation4 + $0x7a8] sm:$0xff] %v490
      %523 = vst [vmem:[#allocation4 + $0x7f0] sm:$0xff] %v491
      %524 = vst [vmem:[#allocation4 + $0x838] sm:$0xff] %v492
      %525 = vst [vmem:[#allocation4 + $0x880] sm:$0xff] %v493
      %526 = vst [vmem:[#allocation4 + $0x8c8] sm:$0xff] %v494
      %v527 = vld [vmem:[%s302 + $0x7] sm:$0xff]
      %v528 = vld [vmem:[%s302 + $0xf] sm:$0xff]
      %v529 = vld [vmem:[%s302 + $0x27] sm:$0xff]
      %v530 = vld [vmem:[%s302 + $0x2f] sm:$0xff]
      %v531 = vld [vmem:[%s302 + $0x47] sm:$0xff]
      %v532 = vld [vmem:[%s302 + $0x4f] sm:$0xff]
      %v533 = vld [vmem:[%s302 + $0x67] sm:$0xff]
      %v534 = vld [vmem:[%s302 + $0x6f] sm:$0xff]
      %v535 = vld [vmem:[%s302 + $0x87] sm:$0xff]
      %v536 = vld [vmem:[%s302 + $0x8f] sm:$0xff]
      %v537 = vld [vmem:[%s302 + $0xa7] sm:$0xff]
      %v538 = vld [vmem:[%s302 + $0xaf] sm:$0xff]
      %v539 = vld [vmem:[%s302 + $0xc7] sm:$0xff]
      %v540 = vld [vmem:[%s302 + $0xcf] sm:$0xff]
      %v541 = vld [vmem:[%s302 + $0xe7] sm:$0xff]
      %v542 = vld [vmem:[%s302 + $0xef] sm:$0xff]
      %v543 = vld [vmem:[%s302 + $0x107] sm:$0xff]
      %v544 = vld [vmem:[%s302 + $0x10f] sm:$0xff]
      %v545 = vld [vmem:[%s302 + $0x127] sm:$0xff]
      %v546 = vld [vmem:[%s302 + $0x12f] sm:$0xff]
      %v547 = vld [vmem:[%s302 + $0x147] sm:$0xff]
      %v548 = vld [vmem:[%s302 + $0x14f] sm:$0xff]
      %v549 = vld [vmem:[%s302 + $0x167] sm:$0xff]
      %v550 = vld [vmem:[%s302 + $0x16f] sm:$0xff]
      %v551 = vld [vmem:[%s302 + $0x187] sm:$0xff]
      %v552 = vld [vmem:[%s302 + $0x18f] sm:$0xff]
      %v553 = vld [vmem:[%s302 + $0x1a7] sm:$0xff]
      %v554 = vld [vmem:[%s302 + $0x1af] sm:$0xff]
      %v555 = vld [vmem:[%s302 + $0x1c7] sm:$0xff]
      %v556 = vld [vmem:[%s302 + $0x1cf] sm:$0xff]
      %v557 = vld [vmem:[%s302 + $0x1e7] sm:$0xff]
      %v558 = vld [vmem:[%s302 + $0x1ef] sm:$0xff]
      %559 = vst [vmem:[#allocation4 + $0x18] sm:$0xff] %v527
      %560 = vst [vmem:[#allocation4 + $0x60] sm:$0xff] %v528
      %561 = vst [vmem:[#allocation4 + $0xa8] sm:$0xff] %v529
      %562 = vst [vmem:[#allocation4 + $0xf0] sm:$0xff] %v530
      %563 = vst [vmem:[#allocation4 + $0x138] sm:$0xff] %v531
      %564 = vst [vmem:[#allocation4 + $0x180] sm:$0xff] %v532
      %565 = vst [vmem:[#allocation4 + $0x1c8] sm:$0xff] %v533
      %566 = vst [vmem:[#allocation4 + $0x210] sm:$0xff] %v534
      %567 = vst [vmem:[#allocation4 + $0x258] sm:$0xff] %v535
      %568 = vst [vmem:[#allocation4 + $0x2a0] sm:$0xff] %v536
      %569 = vst [vmem:[#allocation4 + $0x2e8] sm:$0xff] %v537
      %570 = vst [vmem:[#allocation4 + $0x330] sm:$0xff] %v538
      %571 = vst [vmem:[#allocation4 + $0x378] sm:$0xff] %v539
      %572 = vst [vmem:[#allocation4 + $0x3c0] sm:$0xff] %v540
      %573 = vst [vmem:[#allocation4 + $0x408] sm:$0xff] %v541
      %574 = vst [vmem:[#allocation4 + $0x450] sm:$0xff] %v542
      %575 = vst [vmem:[#allocation4 + $0x498] sm:$0xff] %v543
      %576 = vst [vmem:[#allocation4 + $0x4e0] sm:$0xff] %v544
      %577 = vst [vmem:[#allocation4 + $0x528] sm:$0xff] %v545
      %578 = vst [vmem:[#allocation4 + $0x570] sm:$0xff] %v546
      %579 = vst [vmem:[#allocation4 + $0x5b8] sm:$0xff] %v547
      %580 = vst [vmem:[#allocation4 + $0x600] sm:$0xff] %v548
      %581 = vst [vmem:[#allocation4 + $0x648] sm:$0xff] %v549
      %582 = vst [vmem:[#allocation4 + $0x690] sm:$0xff] %v550
      %583 = vst [vmem:[#allocation4 + $0x6d8] sm:$0xff] %v551
      %584 = vst [vmem:[#allocation4 + $0x720] sm:$0xff] %v552
      %585 = vst [vmem:[#allocation4 + $0x768] sm:$0xff] %v553
      %586 = vst [vmem:[#allocation4 + $0x7b0] sm:$0xff] %v554
      %587 = vst [vmem:[#allocation4 + $0x7f8] sm:$0xff] %v555
      %588 = vst [vmem:[#allocation4 + $0x840] sm:$0xff] %v556
      %589 = vst [vmem:[#allocation4 + $0x888] sm:$0xff] %v557
      %590 = vst [vmem:[#allocation4 + $0x8d0] sm:$0xff] %v558
      %v591 = vld [vmem:[%s302 + $0x8] sm:$0xff]
      %v592 = vld [vmem:[%s302 + $0x10] sm:$0xff]
      %v593 = vld [vmem:[%s302 + $0x28] sm:$0xff]
      %v594 = vld [vmem:[%s302 + $0x30] sm:$0xff]
      %v595 = vld [vmem:[%s302 + $0x48] sm:$0xff]
      %v596 = vld [vmem:[%s302 + $0x50] sm:$0xff]
      %v597 = vld [vmem:[%s302 + $0x68] sm:$0xff]
      %v598 = vld [vmem:[%s302 + $0x70] sm:$0xff]
      %v599 = vld [vmem:[%s302 + $0x88] sm:$0xff]
      %v600 = vld [vmem:[%s302 + $0x90] sm:$0xff]
      %v601 = vld [vmem:[%s302 + $0xa8] sm:$0xff]
      %v602 = vld [vmem:[%s302 + $0xb0] sm:$0xff]
      %v603 = vld [vmem:[%s302 + $0xc8] sm:$0xff]
      %v604 = vld [vmem:[%s302 + $0xd0] sm:$0xff]
      %v605 = vld [vmem:[%s302 + $0xe8] sm:$0xff]
      %v606 = vld [vmem:[%s302 + $0xf0] sm:$0xff]
      %v607 = vld [vmem:[%s302 + $0x108] sm:$0xff]
      %v608 = vld [vmem:[%s302 + $0x110] sm:$0xff]
      %v609 = vld [vmem:[%s302 + $0x128] sm:$0xff]
      %v610 = vld [vmem:[%s302 + $0x130] sm:$0xff]
      %v611 = vld [vmem:[%s302 + $0x148] sm:$0xff]
      %v612 = vld [vmem:[%s302 + $0x150] sm:$0xff]
      %v613 = vld [vmem:[%s302 + $0x168] sm:$0xff]
      %v614 = vld [vmem:[%s302 + $0x170] sm:$0xff]
      %v615 = vld [vmem:[%s302 + $0x188] sm:$0xff]
      %v616 = vld [vmem:[%s302 + $0x190] sm:$0xff]
      %v617 = vld [vmem:[%s302 + $0x1a8] sm:$0xff]
      %v618 = vld [vmem:[%s302 + $0x1b0] sm:$0xff]
      %v619 = vld [vmem:[%s302 + $0x1c8] sm:$0xff]
      %v620 = vld [vmem:[%s302 + $0x1d0] sm:$0xff]
      %v621 = vld [vmem:[%s302 + $0x1e8] sm:$0xff]
      %v622 = vld [vmem:[%s302 + $0x1f0] sm:$0xff]
      %623 = vst [vmem:[#allocation4 + $0x20] sm:$0xff] %v591
      %624 = vst [vmem:[#allocation4 + $0x68] sm:$0xff] %v592
      %625 = vst [vmem:[#allocation4 + $0xb0] sm:$0xff] %v593
      %626 = vst [vmem:[#allocation4 + $0xf8] sm:$0xff] %v594
      %627 = vst [vmem:[#allocation4 + $0x140] sm:$0xff] %v595
      %628 = vst [vmem:[#allocation4 + $0x188] sm:$0xff] %v596
      %629 = vst [vmem:[#allocation4 + $0x1d0] sm:$0xff] %v597
      %630 = vst [vmem:[#allocation4 + $0x218] sm:$0xff] %v598
      %631 = vst [vmem:[#allocation4 + $0x260] sm:$0xff] %v599
      %632 = vst [vmem:[#allocation4 + $0x2a8] sm:$0xff] %v600
      %633 = vst [vmem:[#allocation4 + $0x2f0] sm:$0xff] %v601
      %634 = vst [vmem:[#allocation4 + $0x338] sm:$0xff] %v602
      %635 = vst [vmem:[#allocation4 + $0x380] sm:$0xff] %v603
      %636 = vst [vmem:[#allocation4 + $0x3c8] sm:$0xff] %v604
      %637 = vst [vmem:[#allocation4 + $0x410] sm:$0xff] %v605
      %638 = vst [vmem:[#allocation4 + $0x458] sm:$0xff] %v606
      %639 = vst [vmem:[#allocation4 + $0x4a0] sm:$0xff] %v607
      %640 = vst [vmem:[#allocation4 + $0x4e8] sm:$0xff] %v608
      %641 = vst [vmem:[#allocation4 + $0x530] sm:$0xff] %v609
      %642 = vst [vmem:[#allocation4 + $0x578] sm:$0xff] %v610
      %643 = vst [vmem:[#allocation4 + $0x5c0] sm:$0xff] %v611
      %644 = vst [vmem:[#allocation4 + $0x608] sm:$0xff] %v612
      %645 = vst [vmem:[#allocation4 + $0x650] sm:$0xff] %v613
      %646 = vst [vmem:[#allocation4 + $0x698] sm:$0xff] %v614
      %647 = vst [vmem:[#allocation4 + $0x6e0] sm:$0xff] %v615
      %648 = vst [vmem:[#allocation4 + $0x728] sm:$0xff] %v616
      %649 = vst [vmem:[#allocation4 + $0x770] sm:$0xff] %v617
      %650 = vst [vmem:[#allocation4 + $0x7b8] sm:$0xff] %v618
      %651 = vst [vmem:[#allocation4 + $0x800] sm:$0xff] %v619
      %652 = vst [vmem:[#allocation4 + $0x848] sm:$0xff] %v620
      %653 = vst [vmem:[#allocation4 + $0x890] sm:$0xff] %v621
      %654 = vst [vmem:[#allocation4 + $0x8d8] sm:$0xff] %v622
      %v655 = vld [vmem:[%s302 + $0x9] sm:$0xff]
      %v656 = vld [vmem:[%s302 + $0x11] sm:$0xff]
      %v657 = vld [vmem:[%s302 + $0x29] sm:$0xff]
      %v658 = vld [vmem:[%s302 + $0x31] sm:$0xff]
      %v659 = vld [vmem:[%s302 + $0x49] sm:$0xff]
      %v660 = vld [vmem:[%s302 + $0x51] sm:$0xff]
      %v661 = vld [vmem:[%s302 + $0x69] sm:$0xff]
      %v662 = vld [vmem:[%s302 + $0x71] sm:$0xff]
      %v663 = vld [vmem:[%s302 + $0x89] sm:$0xff]
      %v664 = vld [vmem:[%s302 + $0x91] sm:$0xff]
      %v665 = vld [vmem:[%s302 + $0xa9] sm:$0xff]
      %v666 = vld [vmem:[%s302 + $0xb1] sm:$0xff]
      %v667 = vld [vmem:[%s302 + $0xc9] sm:$0xff]
      %v668 = vld [vmem:[%s302 + $0xd1] sm:$0xff]
      %v669 = vld [vmem:[%s302 + $0xe9] sm:$0xff]
      %v670 = vld [vmem:[%s302 + $0xf1] sm:$0xff]
      %v671 = vld [vmem:[%s302 + $0x109] sm:$0xff]
      %v672 = vld [vmem:[%s302 + $0x111] sm:$0xff]
      %v673 = vld [vmem:[%s302 + $0x129] sm:$0xff]
      %v674 = vld [vmem:[%s302 + $0x131] sm:$0xff]
      %v675 = vld [vmem:[%s302 + $0x149] sm:$0xff]
      %v676 = vld [vmem:[%s302 + $0x151] sm:$0xff]
      %v677 = vld [vmem:[%s302 + $0x169] sm:$0xff]
      %v678 = vld [vmem:[%s302 + $0x171] sm:$0xff]
      %v679 = vld [vmem:[%s302 + $0x189] sm:$0xff]
      %v680 = vld [vmem:[%s302 + $0x191] sm:$0xff]
      %v681 = vld [vmem:[%s302 + $0x1a9] sm:$0xff]
      %v682 = vld [vmem:[%s302 + $0x1b1] sm:$0xff]
      %v683 = vld [vmem:[%s302 + $0x1c9] sm:$0xff]
      %v684 = vld [vmem:[%s302 + $0x1d1] sm:$0xff]
      %v685 = vld [vmem:[%s302 + $0x1e9] sm:$0xff]
      %v686 = vld [vmem:[%s302 + $0x1f1] sm:$0xff]
      %687 = vst [vmem:[#allocation4 + $0x28] sm:$0xff] %v655
      %688 = vst [vmem:[#allocation4 + $0x70] sm:$0xff] %v656
      %689 = vst [vmem:[#allocation4 + $0xb8] sm:$0xff] %v657
      %690 = vst [vmem:[#allocation4 + $0x100] sm:$0xff] %v658
      %691 = vst [vmem:[#allocation4 + $0x148] sm:$0xff] %v659
      %692 = vst [vmem:[#allocation4 + $0x190] sm:$0xff] %v660
      %693 = vst [vmem:[#allocation4 + $0x1d8] sm:$0xff] %v661
      %694 = vst [vmem:[#allocation4 + $0x220] sm:$0xff] %v662
      %695 = vst [vmem:[#allocation4 + $0x268] sm:$0xff] %v663
      %696 = vst [vmem:[#allocation4 + $0x2b0] sm:$0xff] %v664
      %697 = vst [vmem:[#allocation4 + $0x2f8] sm:$0xff] %v665
      %698 = vst [vmem:[#allocation4 + $0x340] sm:$0xff] %v666
      %699 = vst [vmem:[#allocation4 + $0x388] sm:$0xff] %v667
      %700 = vst [vmem:[#allocation4 + $0x3d0] sm:$0xff] %v668
      %701 = vst [vmem:[#allocation4 + $0x418] sm:$0xff] %v669
      %702 = vst [vmem:[#allocation4 + $0x460] sm:$0xff] %v670
      %703 = vst [vmem:[#allocation4 + $0x4a8] sm:$0xff] %v671
      %704 = vst [vmem:[#allocation4 + $0x4f0] sm:$0xff] %v672
      %705 = vst [vmem:[#allocation4 + $0x538] sm:$0xff] %v673
      %706 = vst [vmem:[#allocation4 + $0x580] sm:$0xff] %v674
      %707 = vst [vmem:[#allocation4 + $0x5c8] sm:$0xff] %v675
      %708 = vst [vmem:[#allocation4 + $0x610] sm:$0xff] %v676
      %709 = vst [vmem:[#allocation4 + $0x658] sm:$0xff] %v677
      %710 = vst [vmem:[#allocation4 + $0x6a0] sm:$0xff] %v678
      %711 = vst [vmem:[#allocation4 + $0x6e8] sm:$0xff] %v679
      %712 = vst [vmem:[#allocation4 + $0x730] sm:$0xff] %v680
      %713 = vst [vmem:[#allocation4 + $0x778] sm:$0xff] %v681
      %714 = vst [vmem:[#allocation4 + $0x7c0] sm:$0xff] %v682
      %715 = vst [vmem:[#allocation4 + $0x808] sm:$0xff] %v683
      %716 = vst [vmem:[#allocation4 + $0x850] sm:$0xff] %v684
      %717 = vst [vmem:[#allocation4 + $0x898] sm:$0xff] %v685
      %718 = vst [vmem:[#allocation4 + $0x8e0] sm:$0xff] %v686
      %s719 = scalar_lea.vmem [#allocation2], 64
      %v720 = vld [vmem:[%s719 + $0x7] sm:$0xff]
      %v721 = vld [vmem:[%s719 + $0xf] sm:$0xff]
      %v722 = vld [vmem:[%s719 + $0x27] sm:$0xff]
      %v723 = vld [vmem:[%s719 + $0x2f] sm:$0xff]
      %v724 = vld [vmem:[%s719 + $0x47] sm:$0xff]
      %v725 = vld [vmem:[%s719 + $0x4f] sm:$0xff]
      %v726 = vld [vmem:[%s719 + $0x67] sm:$0xff]
      %v727 = vld [vmem:[%s719 + $0x6f] sm:$0xff]
      %v728 = vld [vmem:[%s719 + $0x87] sm:$0xff]
      %v729 = vld [vmem:[%s719 + $0x8f] sm:$0xff]
      %v730 = vld [vmem:[%s719 + $0xa7] sm:$0xff]
      %v731 = vld [vmem:[%s719 + $0xaf] sm:$0xff]
      %v732 = vld [vmem:[%s719 + $0xc7] sm:$0xff]
      %v733 = vld [vmem:[%s719 + $0xcf] sm:$0xff]
      %v734 = vld [vmem:[%s719 + $0xe7] sm:$0xff]
      %v735 = vld [vmem:[%s719 + $0xef] sm:$0xff]
      %v736 = vld [vmem:[%s719 + $0x107] sm:$0xff]
      %v737 = vld [vmem:[%s719 + $0x10f] sm:$0xff]
      %v738 = vld [vmem:[%s719 + $0x127] sm:$0xff]
      %v739 = vld [vmem:[%s719 + $0x12f] sm:$0xff]
      %v740 = vld [vmem:[%s719 + $0x147] sm:$0xff]
      %v741 = vld [vmem:[%s719 + $0x14f] sm:$0xff]
      %v742 = vld [vmem:[%s719 + $0x167] sm:$0xff]
      %v743 = vld [vmem:[%s719 + $0x16f] sm:$0xff]
      %v744 = vld [vmem:[%s719 + $0x187] sm:$0xff]
      %v745 = vld [vmem:[%s719 + $0x18f] sm:$0xff]
      %v746 = vld [vmem:[%s719 + $0x1a7] sm:$0xff]
      %v747 = vld [vmem:[%s719 + $0x1af] sm:$0xff]
      %v748 = vld [vmem:[%s719 + $0x1c7] sm:$0xff]
      %v749 = vld [vmem:[%s719 + $0x1cf] sm:$0xff]
      %v750 = vld [vmem:[%s719 + $0x1e7] sm:$0xff]
      %v751 = vld [vmem:[%s719 + $0x1ef] sm:$0xff]
      %752 = vst [vmem:[#allocation4 + $0x30] sm:$0xff] %v720
      %753 = vst [vmem:[#allocation4 + $0x78] sm:$0xff] %v721
      %754 = vst [vmem:[#allocation4 + $0xc0] sm:$0xff] %v722
      %755 = vst [vmem:[#allocation4 + $0x108] sm:$0xff] %v723
      %756 = vst [vmem:[#allocation4 + $0x150] sm:$0xff] %v724
      %757 = vst [vmem:[#allocation4 + $0x198] sm:$0xff] %v725
      %758 = vst [vmem:[#allocation4 + $0x1e0] sm:$0xff] %v726
      %759 = vst [vmem:[#allocation4 + $0x228] sm:$0xff] %v727
      %760 = vst [vmem:[#allocation4 + $0x270] sm:$0xff] %v728
      %761 = vst [vmem:[#allocation4 + $0x2b8] sm:$0xff] %v729
      %762 = vst [vmem:[#allocation4 + $0x300] sm:$0xff] %v730
      %763 = vst [vmem:[#allocation4 + $0x348] sm:$0xff] %v731
      %764 = vst [vmem:[#allocation4 + $0x390] sm:$0xff] %v732
      %765 = vst [vmem:[#allocation4 + $0x3d8] sm:$0xff] %v733
      %766 = vst [vmem:[#allocation4 + $0x420] sm:$0xff] %v734
      %767 = vst [vmem:[#allocation4 + $0x468] sm:$0xff] %v735
      %768 = vst [vmem:[#allocation4 + $0x4b0] sm:$0xff] %v736
      %769 = vst [vmem:[#allocation4 + $0x4f8] sm:$0xff] %v737
      %770 = vst [vmem:[#allocation4 + $0x540] sm:$0xff] %v738
      %771 = vst [vmem:[#allocation4 + $0x588] sm:$0xff] %v739
      %772 = vst [vmem:[#allocation4 + $0x5d0] sm:$0xff] %v740
      %773 = vst [vmem:[#allocation4 + $0x618] sm:$0xff] %v741
      %774 = vst [vmem:[#allocation4 + $0x660] sm:$0xff] %v742
      %775 = vst [vmem:[#allocation4 + $0x6a8] sm:$0xff] %v743
      %776 = vst [vmem:[#allocation4 + $0x6f0] sm:$0xff] %v744
      %777 = vst [vmem:[#allocation4 + $0x738] sm:$0xff] %v745
      %778 = vst [vmem:[#allocation4 + $0x780] sm:$0xff] %v746
      %779 = vst [vmem:[#allocation4 + $0x7c8] sm:$0xff] %v747
      %780 = vst [vmem:[#allocation4 + $0x810] sm:$0xff] %v748
      %781 = vst [vmem:[#allocation4 + $0x858] sm:$0xff] %v749
      %782 = vst [vmem:[#allocation4 + $0x8a0] sm:$0xff] %v750
      %783 = vst [vmem:[#allocation4 + $0x8e8] sm:$0xff] %v751
      %v784 = vld [vmem:[%s719 + $0x8] sm:$0xff]
      %v785 = vld [vmem:[%s719 + $0x10] sm:$0xff]
      %v786 = vld [vmem:[%s719 + $0x28] sm:$0xff]
      %v787 = vld [vmem:[%s719 + $0x30] sm:$0xff]
      %v788 = vld [vmem:[%s719 + $0x48] sm:$0xff]
      %v789 = vld [vmem:[%s719 + $0x50] sm:$0xff]
      %v790 = vld [vmem:[%s719 + $0x68] sm:$0xff]
      %v791 = vld [vmem:[%s719 + $0x70] sm:$0xff]
      %v792 = vld [vmem:[%s719 + $0x88] sm:$0xff]
      %v793 = vld [vmem:[%s719 + $0x90] sm:$0xff]
      %v794 = vld [vmem:[%s719 + $0xa8] sm:$0xff]
      %v795 = vld [vmem:[%s719 + $0xb0] sm:$0xff]
      %v796 = vld [vmem:[%s719 + $0xc8] sm:$0xff]
      %v797 = vld [vmem:[%s719 + $0xd0] sm:$0xff]
      %v798 = vld [vmem:[%s719 + $0xe8] sm:$0xff]
      %v799 = vld [vmem:[%s719 + $0xf0] sm:$0xff]
      %v800 = vld [vmem:[%s719 + $0x108] sm:$0xff]
      %v801 = vld [vmem:[%s719 + $0x110] sm:$0xff]
      %v802 = vld [vmem:[%s719 + $0x128] sm:$0xff]
      %v803 = vld [vmem:[%s719 + $0x130] sm:$0xff]
      %v804 = vld [vmem:[%s719 + $0x148] sm:$0xff]
      %v805 = vld [vmem:[%s719 + $0x150] sm:$0xff]
      %v806 = vld [vmem:[%s719 + $0x168] sm:$0xff]
      %v807 = vld [vmem:[%s719 + $0x170] sm:$0xff]
      %v808 = vld [vmem:[%s719 + $0x188] sm:$0xff]
      %v809 = vld [vmem:[%s719 + $0x190] sm:$0xff]
      %v810 = vld [vmem:[%s719 + $0x1a8] sm:$0xff]
      %v811 = vld [vmem:[%s719 + $0x1b0] sm:$0xff]
      %v812 = vld [vmem:[%s719 + $0x1c8] sm:$0xff]
      %v813 = vld [vmem:[%s719 + $0x1d0] sm:$0xff]
      %v814 = vld [vmem:[%s719 + $0x1e8] sm:$0xff]
      %v815 = vld [vmem:[%s719 + $0x1f0] sm:$0xff]
      %816 = vst [vmem:[#allocation4 + $0x38] sm:$0xff] %v784
      %817 = vst [vmem:[#allocation4 + $0x80] sm:$0xff] %v785
      %818 = vst [vmem:[#allocation4 + $0xc8] sm:$0xff] %v786
      %819 = vst [vmem:[#allocation4 + $0x110] sm:$0xff] %v787
      %820 = vst [vmem:[#allocation4 + $0x158] sm:$0xff] %v788
      %821 = vst [vmem:[#allocation4 + $0x1a0] sm:$0xff] %v789
      %822 = vst [vmem:[#allocation4 + $0x1e8] sm:$0xff] %v790
      %823 = vst [vmem:[#allocation4 + $0x230] sm:$0xff] %v791
      %824 = vst [vmem:[#allocation4 + $0x278] sm:$0xff] %v792
      %825 = vst [vmem:[#allocation4 + $0x2c0] sm:$0xff] %v793
      %826 = vst [vmem:[#allocation4 + $0x308] sm:$0xff] %v794
      %827 = vst [vmem:[#allocation4 + $0x350] sm:$0xff] %v795
      %828 = vst [vmem:[#allocation4 + $0x398] sm:$0xff] %v796
      %829 = vst [vmem:[#allocation4 + $0x3e0] sm:$0xff] %v797
      %830 = vst [vmem:[#allocation4 + $0x428] sm:$0xff] %v798
      %831 = vst [vmem:[#allocation4 + $0x470] sm:$0xff] %v799
      %832 = vst [vmem:[#allocation4 + $0x4b8] sm:$0xff] %v800
      %833 = vst [vmem:[#allocation4 + $0x500] sm:$0xff] %v801
      %834 = vst [vmem:[#allocation4 + $0x548] sm:$0xff] %v802
      %835 = vst [vmem:[#allocation4 + $0x590] sm:$0xff] %v803
      %836 = vst [vmem:[#allocation4 + $0x5d8] sm:$0xff] %v804
      %837 = vst [vmem:[#allocation4 + $0x620] sm:$0xff] %v805
      %838 = vst [vmem:[#allocation4 + $0x668] sm:$0xff] %v806
      %839 = vst [vmem:[#allocation4 + $0x6b0] sm:$0xff] %v807
      %840 = vst [vmem:[#allocation4 + $0x6f8] sm:$0xff] %v808
      %841 = vst [vmem:[#allocation4 + $0x740] sm:$0xff] %v809
      %842 = vst [vmem:[#allocation4 + $0x788] sm:$0xff] %v810
      %843 = vst [vmem:[#allocation4 + $0x7d0] sm:$0xff] %v811
      %844 = vst [vmem:[#allocation4 + $0x818] sm:$0xff] %v812
      %845 = vst [vmem:[#allocation4 + $0x860] sm:$0xff] %v813
      %846 = vst [vmem:[#allocation4 + $0x8a8] sm:$0xff] %v814
      %847 = vst [vmem:[#allocation4 + $0x8f0] sm:$0xff] %v815
      %v848 = vld [vmem:[%s719 + $0x9] sm:$0xff]
      %v849 = vld [vmem:[%s719 + $0x11] sm:$0xff]
      %v850 = vld [vmem:[%s719 + $0x29] sm:$0xff]
      %v851 = vld [vmem:[%s719 + $0x31] sm:$0xff]
      %v852 = vld [vmem:[%s719 + $0x49] sm:$0xff]
      %v853 = vld [vmem:[%s719 + $0x51] sm:$0xff]
      %v854 = vld [vmem:[%s719 + $0x69] sm:$0xff]
      %v855 = vld [vmem:[%s719 + $0x71] sm:$0xff]
      %v856 = vld [vmem:[%s719 + $0x89] sm:$0xff]
      %v857 = vld [vmem:[%s719 + $0x91] sm:$0xff]
      %v858 = vld [vmem:[%s719 + $0xa9] sm:$0xff]
      %v859 = vld [vmem:[%s719 + $0xb1] sm:$0xff]
      %v860 = vld [vmem:[%s719 + $0xc9] sm:$0xff]
      %v861 = vld [vmem:[%s719 + $0xd1] sm:$0xff]
      %v862 = vld [vmem:[%s719 + $0xe9] sm:$0xff]
      %v863 = vld [vmem:[%s719 + $0xf1] sm:$0xff]
      %v864 = vld [vmem:[%s719 + $0x109] sm:$0xff]
      %v865 = vld [vmem:[%s719 + $0x111] sm:$0xff]
      %v866 = vld [vmem:[%s719 + $0x129] sm:$0xff]
      %v867 = vld [vmem:[%s719 + $0x131] sm:$0xff]
      %v868 = vld [vmem:[%s719 + $0x149] sm:$0xff]
      %v869 = vld [vmem:[%s719 + $0x151] sm:$0xff]
      %v870 = vld [vmem:[%s719 + $0x169] sm:$0xff]
      %v871 = vld [vmem:[%s719 + $0x171] sm:$0xff]
      %v872 = vld [vmem:[%s719 + $0x189] sm:$0xff]
      %v873 = vld [vmem:[%s719 + $0x191] sm:$0xff]
      %v874 = vld [vmem:[%s719 + $0x1a9] sm:$0xff]
      %v875 = vld [vmem:[%s719 + $0x1b1] sm:$0xff]
      %v876 = vld [vmem:[%s719 + $0x1c9] sm:$0xff]
      %v877 = vld [vmem:[%s719 + $0x1d1] sm:$0xff]
      %v878 = vld [vmem:[%s719 + $0x1e9] sm:$0xff]
      %v879 = vld [vmem:[%s719 + $0x1f1] sm:$0xff]
      %880 = vst [vmem:[#allocation4 + $0x40] sm:$0xff] %v848
      %881 = vst [vmem:[#allocation4 + $0x88] sm:$0xff] %v849
      %882 = vst [vmem:[#allocation4 + $0xd0] sm:$0xff] %v850
      %883 = vst [vmem:[#allocation4 + $0x118] sm:$0xff] %v851
      %884 = vst [vmem:[#allocation4 + $0x160] sm:$0xff] %v852
      %885 = vst [vmem:[#allocation4 + $0x1a8] sm:$0xff] %v853
      %886 = vst [vmem:[#allocation4 + $0x1f0] sm:$0xff] %v854
      %887 = vst [vmem:[#allocation4 + $0x238] sm:$0xff] %v855
      %888 = vst [vmem:[#allocation4 + $0x280] sm:$0xff] %v856
      %889 = vst [vmem:[#allocation4 + $0x2c8] sm:$0xff] %v857
      %890 = vst [vmem:[#allocation4 + $0x310] sm:$0xff] %v858
      %891 = vst [vmem:[#allocation4 + $0x358] sm:$0xff] %v859
      %892 = vst [vmem:[#allocation4 + $0x3a0] sm:$0xff] %v860
      %893 = vst [vmem:[#allocation4 + $0x3e8] sm:$0xff] %v861
      %894 = vst [vmem:[#allocation4 + $0x430] sm:$0xff] %v862
      %895 = vst [vmem:[#allocation4 + $0x478] sm:$0xff] %v863
      %896 = vst [vmem:[#allocation4 + $0x4c0] sm:$0xff] %v864
      %897 = vst [vmem:[#allocation4 + $0x508] sm:$0xff] %v865
      %898 = vst [vmem:[#allocation4 + $0x550] sm:$0xff] %v866
      %899 = vst [vmem:[#allocation4 + $0x598] sm:$0xff] %v867
      %900 = vst [vmem:[#allocation4 + $0x5e0] sm:$0xff] %v868
      %901 = vst [vmem:[#allocation4 + $0x628] sm:$0xff] %v869
      %902 = vst [vmem:[#allocation4 + $0x670] sm:$0xff] %v870
      %903 = vst [vmem:[#allocation4 + $0x6b8] sm:$0xff] %v871
      %904 = vst [vmem:[#allocation4 + $0x700] sm:$0xff] %v872
      %905 = vst [vmem:[#allocation4 + $0x748] sm:$0xff] %v873
      %906 = vst [vmem:[#allocation4 + $0x790] sm:$0xff] %v874
      %907 = vst [vmem:[#allocation4 + $0x7d8] sm:$0xff] %v875
      %908 = vst [vmem:[#allocation4 + $0x820] sm:$0xff] %v876
      %909 = vst [vmem:[#allocation4 + $0x868] sm:$0xff] %v877
      %910 = vst [vmem:[#allocation4 + $0x8b0] sm:$0xff] %v878
      %911 = vst [vmem:[#allocation4 + $0x8f8] sm:$0xff] %v879
      %v912 = vld [vmem:[#allocation4] sm:$0xff]
      %v913 = vld [vmem:[#allocation4 + $0x8] sm:$0xff]
      %v914 = vld [vmem:[#allocation4 + $0x10] sm:$0xff]
      %v915 = vld [vmem:[#allocation4 + $0x18] sm:$0xff]
      %v916 = vld [vmem:[#allocation4 + $0x20] sm:$0xff]
      %v917 = vld [vmem:[#allocation4 + $0x28] sm:$0xff]
      %v918 = vld [vmem:[#allocation4 + $0x30] sm:$0xff]
      %v919 = vld [vmem:[#allocation4 + $0x38] sm:$0xff]
      %v920 = vld [vmem:[#allocation4 + $0x40] sm:$0xff]
      %v921 = vld [vmem:[#allocation4 + $0x48] sm:$0xff]
      %v922 = vld [vmem:[#allocation4 + $0x50] sm:$0xff]
      %v923 = vld [vmem:[#allocation4 + $0x58] sm:$0xff]
      %v924 = vld [vmem:[#allocation4 + $0x60] sm:$0xff]
      %v925 = vld [vmem:[#allocation4 + $0x68] sm:$0xff]
      %v926 = vld [vmem:[#allocation4 + $0x70] sm:$0xff]
      %v927 = vld [vmem:[#allocation4 + $0x78] sm:$0xff]
      %v928 = vld [vmem:[#allocation4 + $0x80] sm:$0xff]
      %v929 = vld [vmem:[#allocation4 + $0x88] sm:$0xff]
      %v930 = vld [vmem:[#allocation4 + $0x90] sm:$0xff]
      %v931 = vld [vmem:[#allocation4 + $0x98] sm:$0xff]
      %v932 = vld [vmem:[#allocation4 + $0xa0] sm:$0xff]
      %v933 = vld [vmem:[#allocation4 + $0xa8] sm:$0xff]
      %v934 = vld [vmem:[#allocation4 + $0xb0] sm:$0xff]
      %v935 = vld [vmem:[#allocation4 + $0xb8] sm:$0xff]
      %v936 = vld [vmem:[#allocation4 + $0xc0] sm:$0xff]
      %v937 = vld [vmem:[#allocation4 + $0xc8] sm:$0xff]
      %v938 = vld [vmem:[#allocation4 + $0xd0] sm:$0xff]
      %v939 = vld [vmem:[#allocation4 + $0xd8] sm:$0xff]
      %v940 = vld [vmem:[#allocation4 + $0xe0] sm:$0xff]
      %v941 = vld [vmem:[#allocation4 + $0xe8] sm:$0xff]
      %v942 = vld [vmem:[#allocation4 + $0xf0] sm:$0xff]
      %v943 = vld [vmem:[#allocation4 + $0xf8] sm:$0xff]
      %v944 = vld [vmem:[#allocation4 + $0x100] sm:$0xff]
      %v945 = vld [vmem:[#allocation4 + $0x108] sm:$0xff]
      %v946 = vld [vmem:[#allocation4 + $0x110] sm:$0xff]
      %v947 = vld [vmem:[#allocation4 + $0x118] sm:$0xff]
      %v948 = vld [vmem:[#allocation4 + $0x120] sm:$0xff]
      %v949 = vld [vmem:[#allocation4 + $0x128] sm:$0xff]
      %v950 = vld [vmem:[#allocation4 + $0x130] sm:$0xff]
      %v951 = vld [vmem:[#allocation4 + $0x138] sm:$0xff]
      %v952 = vld [vmem:[#allocation4 + $0x140] sm:$0xff]
      %v953 = vld [vmem:[#allocation4 + $0x148] sm:$0xff]
      %v954 = vld [vmem:[#allocation4 + $0x150] sm:$0xff]
      %v955 = vld [vmem:[#allocation4 + $0x158] sm:$0xff]
      %v956 = vld [vmem:[#allocation4 + $0x160] sm:$0xff]
      %v957 = vld [vmem:[#allocation4 + $0x168] sm:$0xff]
      %v958 = vld [vmem:[#allocation4 + $0x170] sm:$0xff]
      %v959 = vld [vmem:[#allocation4 + $0x178] sm:$0xff]
      %v960 = vld [vmem:[#allocation4 + $0x180] sm:$0xff]
      %v961 = vld [vmem:[#allocation4 + $0x188] sm:$0xff]
      %v962 = vld [vmem:[#allocation4 + $0x190] sm:$0xff]
      %v963 = vld [vmem:[#allocation4 + $0x198] sm:$0xff]
      %v964 = vld [vmem:[#allocation4 + $0x1a0] sm:$0xff]
      %v965 = vld [vmem:[#allocation4 + $0x1a8] sm:$0xff]
      %v966 = vld [vmem:[#allocation4 + $0x1b0] sm:$0xff]
      %v967 = vld [vmem:[#allocation4 + $0x1b8] sm:$0xff]
      %v968 = vld [vmem:[#allocation4 + $0x1c0] sm:$0xff]
      %v969 = vld [vmem:[#allocation4 + $0x1c8] sm:$0xff]
      %v970 = vld [vmem:[#allocation4 + $0x1d0] sm:$0xff]
      %v971 = vld [vmem:[#allocation4 + $0x1d8] sm:$0xff]
      %v972 = vld [vmem:[#allocation4 + $0x1e0] sm:$0xff]
      %v973 = vld [vmem:[#allocation4 + $0x1e8] sm:$0xff]
      %v974 = vld [vmem:[#allocation4 + $0x1f0] sm:$0xff]
      %v975 = vld [vmem:[#allocation4 + $0x1f8] sm:$0xff]
      %v976 = vld [vmem:[#allocation4 + $0x200] sm:$0xff]
      %v977 = vld [vmem:[#allocation4 + $0x208] sm:$0xff]
      %v978 = vld [vmem:[#allocation4 + $0x210] sm:$0xff]
      %v979 = vld [vmem:[#allocation4 + $0x218] sm:$0xff]
      %v980 = vld [vmem:[#allocation4 + $0x220] sm:$0xff]
      %v981 = vld [vmem:[#allocation4 + $0x228] sm:$0xff]
      %v982 = vld [vmem:[#allocation4 + $0x230] sm:$0xff]
      %v983 = vld [vmem:[#allocation4 + $0x238] sm:$0xff]
      %v984 = vld [vmem:[#allocation4 + $0x240] sm:$0xff]
      %v985 = vld [vmem:[#allocation4 + $0x248] sm:$0xff]
      %v986 = vld [vmem:[#allocation4 + $0x250] sm:$0xff]
      %v987 = vld [vmem:[#allocation4 + $0x258] sm:$0xff]
      %v988 = vld [vmem:[#allocation4 + $0x260] sm:$0xff]
      %v989 = vld [vmem:[#allocation4 + $0x268] sm:$0xff]
      %v990 = vld [vmem:[#allocation4 + $0x270] sm:$0xff]
      %v991 = vld [vmem:[#allocation4 + $0x278] sm:$0xff]
      %v992 = vld [vmem:[#allocation4 + $0x280] sm:$0xff]
      %v993 = vld [vmem:[#allocation4 + $0x288] sm:$0xff]
      %v994 = vld [vmem:[#allocation4 + $0x290] sm:$0xff]
      %v995 = vld [vmem:[#allocation4 + $0x298] sm:$0xff]
      %v996 = vld [vmem:[#allocation4 + $0x2a0] sm:$0xff]
      %v997 = vld [vmem:[#allocation4 + $0x2a8] sm:$0xff]
      %v998 = vld [vmem:[#allocation4 + $0x2b0] sm:$0xff]
      %v999 = vld [vmem:[#allocation4 + $0x2b8] sm:$0xff]
      %v1000 = vld [vmem:[#allocation4 + $0x2c0] sm:$0xff]
      %v1001 = vld [vmem:[#allocation4 + $0x2c8] sm:$0xff]
      %v1002 = vld [vmem:[#allocation4 + $0x2d0] sm:$0xff]
      %v1003 = vld [vmem:[#allocation4 + $0x2d8] sm:$0xff]
      %v1004 = vld [vmem:[#allocation4 + $0x2e0] sm:$0xff]
      %v1005 = vld [vmem:[#allocation4 + $0x2e8] sm:$0xff]
      %v1006 = vld [vmem:[#allocation4 + $0x2f0] sm:$0xff]
      %v1007 = vld [vmem:[#allocation4 + $0x2f8] sm:$0xff]
      %v1008 = vld [vmem:[#allocation4 + $0x300] sm:$0xff]
      %v1009 = vld [vmem:[#allocation4 + $0x308] sm:$0xff]
      %v1010 = vld [vmem:[#allocation4 + $0x310] sm:$0xff]
      %v1011 = vld [vmem:[#allocation4 + $0x318] sm:$0xff]
      %v1012 = vld [vmem:[#allocation4 + $0x320] sm:$0xff]
      %v1013 = vld [vmem:[#allocation4 + $0x328] sm:$0xff]
      %v1014 = vld [vmem:[#allocation4 + $0x330] sm:$0xff]
      %v1015 = vld [vmem:[#allocation4 + $0x338] sm:$0xff]
      %v1016 = vld [vmem:[#allocation4 + $0x340] sm:$0xff]
      %v1017 = vld [vmem:[#allocation4 + $0x348] sm:$0xff]
      %v1018 = vld [vmem:[#allocation4 + $0x350] sm:$0xff]
      %v1019 = vld [vmem:[#allocation4 + $0x358] sm:$0xff]
      %v1020 = vld [vmem:[#allocation4 + $0x360] sm:$0xff]
      %v1021 = vld [vmem:[#allocation4 + $0x368] sm:$0xff]
      %v1022 = vld [vmem:[#allocation4 + $0x370] sm:$0xff]
      %v1023 = vld [vmem:[#allocation4 + $0x378] sm:$0xff]
      %v1024 = vld [vmem:[#allocation4 + $0x380] sm:$0xff]
      %v1025 = vld [vmem:[#allocation4 + $0x388] sm:$0xff]
      %v1026 = vld [vmem:[#allocation4 + $0x390] sm:$0xff]
      %v1027 = vld [vmem:[#allocation4 + $0x398] sm:$0xff]
      %v1028 = vld [vmem:[#allocation4 + $0x3a0] sm:$0xff]
      %v1029 = vld [vmem:[#allocation4 + $0x3a8] sm:$0xff]
      %v1030 = vld [vmem:[#allocation4 + $0x3b0] sm:$0xff]
      %v1031 = vld [vmem:[#allocation4 + $0x3b8] sm:$0xff]
      %v1032 = vld [vmem:[#allocation4 + $0x3c0] sm:$0xff]
      %v1033 = vld [vmem:[#allocation4 + $0x3c8] sm:$0xff]
      %v1034 = vld [vmem:[#allocation4 + $0x3d0] sm:$0xff]
      %v1035 = vld [vmem:[#allocation4 + $0x3d8] sm:$0xff]
      %v1036 = vld [vmem:[#allocation4 + $0x3e0] sm:$0xff]
      %v1037 = vld [vmem:[#allocation4 + $0x3e8] sm:$0xff]
      %v1038 = vld [vmem:[#allocation4 + $0x3f0] sm:$0xff]
      %v1039 = vld [vmem:[#allocation4 + $0x3f8] sm:$0xff]
      %v1040 = vld [vmem:[#allocation4 + $0x400] sm:$0xff]
      %v1041 = vld [vmem:[#allocation4 + $0x408] sm:$0xff]
      %v1042 = vld [vmem:[#allocation4 + $0x410] sm:$0xff]
      %v1043 = vld [vmem:[#allocation4 + $0x418] sm:$0xff]
      %v1044 = vld [vmem:[#allocation4 + $0x420] sm:$0xff]
      %v1045 = vld [vmem:[#allocation4 + $0x428] sm:$0xff]
      %v1046 = vld [vmem:[#allocation4 + $0x430] sm:$0xff]
      %v1047 = vld [vmem:[#allocation4 + $0x438] sm:$0xff]
      %v1048 = vld [vmem:[#allocation4 + $0x440] sm:$0xff]
      %v1049 = vld [vmem:[#allocation4 + $0x448] sm:$0xff]
      %v1050 = vld [vmem:[#allocation4 + $0x450] sm:$0xff]
      %v1051 = vld [vmem:[#allocation4 + $0x458] sm:$0xff]
      %v1052 = vld [vmem:[#allocation4 + $0x460] sm:$0xff]
      %v1053 = vld [vmem:[#allocation4 + $0x468] sm:$0xff]
      %v1054 = vld [vmem:[#allocation4 + $0x470] sm:$0xff]
      %v1055 = vld [vmem:[#allocation4 + $0x478] sm:$0xff]
      %v1056 = vld [vmem:[#allocation4 + $0x480] sm:$0xff]
      %v1057 = vld [vmem:[#allocation4 + $0x488] sm:$0xff]
      %v1058 = vld [vmem:[#allocation4 + $0x490] sm:$0xff]
      %v1059 = vld [vmem:[#allocation4 + $0x498] sm:$0xff]
      %v1060 = vld [vmem:[#allocation4 + $0x4a0] sm:$0xff]
      %v1061 = vld [vmem:[#allocation4 + $0x4a8] sm:$0xff]
      %v1062 = vld [vmem:[#allocation4 + $0x4b0] sm:$0xff]
      %v1063 = vld [vmem:[#allocation4 + $0x4b8] sm:$0xff]
      %v1064 = vld [vmem:[#allocation4 + $0x4c0] sm:$0xff]
      %v1065 = vld [vmem:[#allocation4 + $0x4c8] sm:$0xff]
      %v1066 = vld [vmem:[#allocation4 + $0x4d0] sm:$0xff]
      %v1067 = vld [vmem:[#allocation4 + $0x4d8] sm:$0xff]
      %v1068 = vld [vmem:[#allocation4 + $0x4e0] sm:$0xff]
      %v1069 = vld [vmem:[#allocation4 + $0x4e8] sm:$0xff]
      %v1070 = vld [vmem:[#allocation4 + $0x4f0] sm:$0xff]
      %v1071 = vld [vmem:[#allocation4 + $0x4f8] sm:$0xff]
      %v1072 = vld [vmem:[#allocation4 + $0x500] sm:$0xff]
      %v1073 = vld [vmem:[#allocation4 + $0x508] sm:$0xff]
      %v1074 = vld [vmem:[#allocation4 + $0x510] sm:$0xff]
      %v1075 = vld [vmem:[#allocation4 + $0x518] sm:$0xff]
      %v1076 = vld [vmem:[#allocation4 + $0x520] sm:$0xff]
      %v1077 = vld [vmem:[#allocation4 + $0x528] sm:$0xff]
      %v1078 = vld [vmem:[#allocation4 + $0x530] sm:$0xff]
      %v1079 = vld [vmem:[#allocation4 + $0x538] sm:$0xff]
      %v1080 = vld [vmem:[#allocation4 + $0x540] sm:$0xff]
      %v1081 = vld [vmem:[#allocation4 + $0x548] sm:$0xff]
      %v1082 = vld [vmem:[#allocation4 + $0x550] sm:$0xff]
      %v1083 = vld [vmem:[#allocation4 + $0x558] sm:$0xff]
      %v1084 = vld [vmem:[#allocation4 + $0x560] sm:$0xff]
      %v1085 = vld [vmem:[#allocation4 + $0x568] sm:$0xff]
      %v1086 = vld [vmem:[#allocation4 + $0x570] sm:$0xff]
      %v1087 = vld [vmem:[#allocation4 + $0x578] sm:$0xff]
      %v1088 = vld [vmem:[#allocation4 + $0x580] sm:$0xff]
      %v1089 = vld [vmem:[#allocation4 + $0x588] sm:$0xff]
      %v1090 = vld [vmem:[#allocation4 + $0x590] sm:$0xff]
      %v1091 = vld [vmem:[#allocation4 + $0x598] sm:$0xff]
      %v1092 = vld [vmem:[#allocation4 + $0x5a0] sm:$0xff]
      %v1093 = vld [vmem:[#allocation4 + $0x5a8] sm:$0xff]
      %v1094 = vld [vmem:[#allocation4 + $0x5b0] sm:$0xff]
      %v1095 = vld [vmem:[#allocation4 + $0x5b8] sm:$0xff]
      %v1096 = vld [vmem:[#allocation4 + $0x5c0] sm:$0xff]
      %v1097 = vld [vmem:[#allocation4 + $0x5c8] sm:$0xff]
      %v1098 = vld [vmem:[#allocation4 + $0x5d0] sm:$0xff]
      %v1099 = vld [vmem:[#allocation4 + $0x5d8] sm:$0xff]
      %v1100 = vld [vmem:[#allocation4 + $0x5e0] sm:$0xff]
      %v1101 = vld [vmem:[#allocation4 + $0x5e8] sm:$0xff]
      %v1102 = vld [vmem:[#allocation4 + $0x5f0] sm:$0xff]
      %v1103 = vld [vmem:[#allocation4 + $0x5f8] sm:$0xff]
      %v1104 = vld [vmem:[#allocation4 + $0x600] sm:$0xff]
      %v1105 = vld [vmem:[#allocation4 + $0x608] sm:$0xff]
      %v1106 = vld [vmem:[#allocation4 + $0x610] sm:$0xff]
      %v1107 = vld [vmem:[#allocation4 + $0x618] sm:$0xff]
      %v1108 = vld [vmem:[#allocation4 + $0x620] sm:$0xff]
      %v1109 = vld [vmem:[#allocation4 + $0x628] sm:$0xff]
      %v1110 = vld [vmem:[#allocation4 + $0x630] sm:$0xff]
      %v1111 = vld [vmem:[#allocation4 + $0x638] sm:$0xff]
      %v1112 = vld [vmem:[#allocation4 + $0x640] sm:$0xff]
      %v1113 = vld [vmem:[#allocation4 + $0x648] sm:$0xff]
      %v1114 = vld [vmem:[#allocation4 + $0x650] sm:$0xff]
      %v1115 = vld [vmem:[#allocation4 + $0x658] sm:$0xff]
      %v1116 = vld [vmem:[#allocation4 + $0x660] sm:$0xff]
      %v1117 = vld [vmem:[#allocation4 + $0x668] sm:$0xff]
      %v1118 = vld [vmem:[#allocation4 + $0x670] sm:$0xff]
      %v1119 = vld [vmem:[#allocation4 + $0x678] sm:$0xff]
      %v1120 = vld [vmem:[#allocation4 + $0x680] sm:$0xff]
      %v1121 = vld [vmem:[#allocation4 + $0x688] sm:$0xff]
      %v1122 = vld [vmem:[#allocation4 + $0x690] sm:$0xff]
      %v1123 = vld [vmem:[#allocation4 + $0x698] sm:$0xff]
      %v1124 = vld [vmem:[#allocation4 + $0x6a0] sm:$0xff]
      %v1125 = vld [vmem:[#allocation4 + $0x6a8] sm:$0xff]
      %v1126 = vld [vmem:[#allocation4 + $0x6b0] sm:$0xff]
      %v1127 = vld [vmem:[#allocation4 + $0x6b8] sm:$0xff]
      %v1128 = vld [vmem:[#allocation4 + $0x6c0] sm:$0xff]
      %v1129 = vld [vmem:[#allocation4 + $0x6c8] sm:$0xff]
      %v1130 = vld [vmem:[#allocation4 + $0x6d0] sm:$0xff]
      %v1131 = vld [vmem:[#allocation4 + $0x6d8] sm:$0xff]
      %v1132 = vld [vmem:[#allocation4 + $0x6e0] sm:$0xff]
      %v1133 = vld [vmem:[#allocation4 + $0x6e8] sm:$0xff]
      %v1134 = vld [vmem:[#allocation4 + $0x6f0] sm:$0xff]
      %v1135 = vld [vmem:[#allocation4 + $0x6f8] sm:$0xff]
      %v1136 = vld [vmem:[#allocation4 + $0x700] sm:$0xff]
      %v1137 = vld [vmem:[#allocation4 + $0x708] sm:$0xff]
      %v1138 = vld [vmem:[#allocation4 + $0x710] sm:$0xff]
      %v1139 = vld [vmem:[#allocation4 + $0x718] sm:$0xff]
      %v1140 = vld [vmem:[#allocation4 + $0x720] sm:$0xff]
      %v1141 = vld [vmem:[#allocation4 + $0x728] sm:$0xff]
      %v1142 = vld [vmem:[#allocation4 + $0x730] sm:$0xff]
      %v1143 = vld [vmem:[#allocation4 + $0x738] sm:$0xff]
      %v1144 = vld [vmem:[#allocation4 + $0x740] sm:$0xff]
      %v1145 = vld [vmem:[#allocation4 + $0x748] sm:$0xff]
      %v1146 = vld [vmem:[#allocation4 + $0x750] sm:$0xff]
      %v1147 = vld [vmem:[#allocation4 + $0x758] sm:$0xff]
      %v1148 = vld [vmem:[#allocation4 + $0x760] sm:$0xff]
      %v1149 = vld [vmem:[#allocation4 + $0x768] sm:$0xff]
      %v1150 = vld [vmem:[#allocation4 + $0x770] sm:$0xff]
      %v1151 = vld [vmem:[#allocation4 + $0x778] sm:$0xff]
      %v1152 = vld [vmem:[#allocation4 + $0x780] sm:$0xff]
      %v1153 = vld [vmem:[#allocation4 + $0x788] sm:$0xff]
      %v1154 = vld [vmem:[#allocation4 + $0x790] sm:$0xff]
      %v1155 = vld [vmem:[#allocation4 + $0x798] sm:$0xff]
      %v1156 = vld [vmem:[#allocation4 + $0x7a0] sm:$0xff]
      %v1157 = vld [vmem:[#allocation4 + $0x7a8] sm:$0xff]
      %v1158 = vld [vmem:[#allocation4 + $0x7b0] sm:$0xff]
      %v1159 = vld [vmem:[#allocation4 + $0x7b8] sm:$0xff]
      %v1160 = vld [vmem:[#allocation4 + $0x7c0] sm:$0xff]
      %v1161 = vld [vmem:[#allocation4 + $0x7c8] sm:$0xff]
      %v1162 = vld [vmem:[#allocation4 + $0x7d0] sm:$0xff]
      %v1163 = vld [vmem:[#allocation4 + $0x7d8] sm:$0xff]
      %v1164 = vld [vmem:[#allocation4 + $0x7e0] sm:$0xff]
      %v1165 = vld [vmem:[#allocation4 + $0x7e8] sm:$0xff]
      %v1166 = vld [vmem:[#allocation4 + $0x7f0] sm:$0xff]
      %v1167 = vld [vmem:[#allocation4 + $0x7f8] sm:$0xff]
      %v1168 = vld [vmem:[#allocation4 + $0x800] sm:$0xff]
      %v1169 = vld [vmem:[#allocation4 + $0x808] sm:$0xff]
      %v1170 = vld [vmem:[#allocation4 + $0x810] sm:$0xff]
      %v1171 = vld [vmem:[#allocation4 + $0x818] sm:$0xff]
      %v1172 = vld [vmem:[#allocation4 + $0x820] sm:$0xff]
      %v1173 = vld [vmem:[#allocation4 + $0x828] sm:$0xff]
      %v1174 = vld [vmem:[#allocation4 + $0x830] sm:$0xff]
      %v1175 = vld [vmem:[#allocation4 + $0x838] sm:$0xff]
      %v1176 = vld [vmem:[#allocation4 + $0x840] sm:$0xff]
      %v1177 = vld [vmem:[#allocation4 + $0x848] sm:$0xff]
      %v1178 = vld [vmem:[#allocation4 + $0x850] sm:$0xff]
      %v1179 = vld [vmem:[#allocation4 + $0x858] sm:$0xff]
      %v1180 = vld [vmem:[#allocation4 + $0x860] sm:$0xff]
      %v1181 = vld [vmem:[#allocation4 + $0x868] sm:$0xff]
      %v1182 = vld [vmem:[#allocation4 + $0x870] sm:$0xff]
      %v1183 = vld [vmem:[#allocation4 + $0x878] sm:$0xff]
      %v1184 = vld [vmem:[#allocation4 + $0x880] sm:$0xff]
      %v1185 = vld [vmem:[#allocation4 + $0x888] sm:$0xff]
      %v1186 = vld [vmem:[#allocation4 + $0x890] sm:$0xff]
      %v1187 = vld [vmem:[#allocation4 + $0x898] sm:$0xff]
      %v1188 = vld [vmem:[#allocation4 + $0x8a0] sm:$0xff]
      %v1189 = vld [vmem:[#allocation4 + $0x8a8] sm:$0xff]
      %v1190 = vld [vmem:[#allocation4 + $0x8b0] sm:$0xff]
      %v1191 = vld [vmem:[#allocation4 + $0x8b8] sm:$0xff]
      %v1192 = vld [vmem:[#allocation4 + $0x8c0] sm:$0xff]
      %v1193 = vld [vmem:[#allocation4 + $0x8c8] sm:$0xff]
      %v1194 = vld [vmem:[#allocation4 + $0x8d0] sm:$0xff]
      %v1195 = vld [vmem:[#allocation4 + $0x8d8] sm:$0xff]
      %v1196 = vld [vmem:[#allocation4 + $0x8e0] sm:$0xff]
      %v1197 = vld [vmem:[#allocation4 + $0x8e8] sm:$0xff]
      %v1198 = vld [vmem:[#allocation4 + $0x8f0] sm:$0xff]
      %v1199 = vld [vmem:[#allocation4 + $0x8f8] sm:$0xff]
      %v1200 = vld [vmem:[%s1] sm:$0xff]
      %v1201 = vld [vmem:[%s1 + $0x8] sm:$0xff]
      %v1202 = vld [vmem:[%s1 + $0x10] sm:$0xff]
      %v1203 = vld [vmem:[%s1 + $0x18] sm:$0xff]
      %v1204 = vld [vmem:[%s1 + $0x20] sm:$0xff]
      %v1205 = vld [vmem:[%s1 + $0x28] sm:$0xff]
      %v1206 = vld [vmem:[%s1 + $0x30] sm:$0xff]
      %v1207 = vld [vmem:[%s1 + $0x38] sm:$0xff]
      %v1208 = vld [vmem:[%s1 + $0x40] sm:$0xff]
      %v1209 = vld [vmem:[%s1 + $0x48] sm:$0xff]
      %v1210 = vld [vmem:[%s1 + $0x50] sm:$0xff]
      %v1211 = vld [vmem:[%s1 + $0x58] sm:$0xff]
      %v1212 = vld [vmem:[%s1 + $0x60] sm:$0xff]
      %v1213 = vld [vmem:[%s1 + $0x68] sm:$0xff]
      %v1214 = vld [vmem:[%s1 + $0x70] sm:$0xff]
      %v1215 = vld [vmem:[%s1 + $0x78] sm:$0xff]
      %v1216 = vld [vmem:[%s1 + $0x80] sm:$0xff]
      %v1217 = vld [vmem:[%s1 + $0x88] sm:$0xff]
      %v1218 = vld [vmem:[%s1 + $0x90] sm:$0xff]
      %v1219 = vld [vmem:[%s1 + $0x98] sm:$0xff]
      %v1220 = vld [vmem:[%s1 + $0xa0] sm:$0xff]
      %v1221 = vld [vmem:[%s1 + $0xa8] sm:$0xff]
      %v1222 = vld [vmem:[%s1 + $0xb0] sm:$0xff]
      %v1223 = vld [vmem:[%s1 + $0xb8] sm:$0xff]
      %v1224 = vld [vmem:[%s1 + $0xc0] sm:$0xff]
      %v1225 = vld [vmem:[%s1 + $0xc8] sm:$0xff]
      %v1226 = vld [vmem:[%s1 + $0xd0] sm:$0xff]
      %v1227 = vld [vmem:[%s1 + $0xd8] sm:$0xff]
      %v1228 = vld [vmem:[%s1 + $0xe0] sm:$0xff]
      %v1229 = vld [vmem:[%s1 + $0xe8] sm:$0xff]
      %v1230 = vld [vmem:[%s1 + $0xf0] sm:$0xff]
      %v1231 = vld [vmem:[%s1 + $0xf8] sm:$0xff]
      %v1232 = vld [vmem:[%s1 + $0x100] sm:$0xff]
      %v1233 = vld [vmem:[%s1 + $0x108] sm:$0xff]
      %v1234 = vld [vmem:[%s1 + $0x110] sm:$0xff]
      %v1235 = vld [vmem:[%s1 + $0x118] sm:$0xff]
      %v1236 = vld [vmem:[%s1 + $0x120] sm:$0xff]
      %v1237 = vld [vmem:[%s1 + $0x128] sm:$0xff]
      %v1238 = vld [vmem:[%s1 + $0x130] sm:$0xff]
      %v1239 = vld [vmem:[%s1 + $0x138] sm:$0xff]
      %v1240 = vld [vmem:[%s1 + $0x140] sm:$0xff]
      %v1241 = vld [vmem:[%s1 + $0x148] sm:$0xff]
      %v1242 = vld [vmem:[%s1 + $0x150] sm:$0xff]
      %v1243 = vld [vmem:[%s1 + $0x158] sm:$0xff]
      %v1244 = vld [vmem:[%s1 + $0x160] sm:$0xff]
      %v1245 = vld [vmem:[%s1 + $0x168] sm:$0xff]
      %v1246 = vld [vmem:[%s1 + $0x170] sm:$0xff]
      %v1247 = vld [vmem:[%s1 + $0x178] sm:$0xff]
      %v1248 = vld [vmem:[%s1 + $0x180] sm:$0xff]
      %v1249 = vld [vmem:[%s1 + $0x188] sm:$0xff]
      %v1250 = vld [vmem:[%s1 + $0x190] sm:$0xff]
      %v1251 = vld [vmem:[%s1 + $0x198] sm:$0xff]
      %v1252 = vld [vmem:[%s1 + $0x1a0] sm:$0xff]
      %v1253 = vld [vmem:[%s1 + $0x1a8] sm:$0xff]
      %v1254 = vld [vmem:[%s1 + $0x1b0] sm:$0xff]
      %v1255 = vld [vmem:[%s1 + $0x1b8] sm:$0xff]
      %v1256 = vld [vmem:[%s1 + $0x1c0] sm:$0xff]
      %v1257 = vld [vmem:[%s1 + $0x1c8] sm:$0xff]
      %v1258 = vld [vmem:[%s1 + $0x1d0] sm:$0xff]
      %v1259 = vld [vmem:[%s1 + $0x1d8] sm:$0xff]
      %v1260 = vld [vmem:[%s1 + $0x1e0] sm:$0xff]
      %v1261 = vld [vmem:[%s1 + $0x1e8] sm:$0xff]
      %v1262 = vld [vmem:[%s1 + $0x1f0] sm:$0xff]
      %v1263 = vld [vmem:[%s1 + $0x1f8] sm:$0xff]
      %v1264 = vld [vmem:[%s1 + $0x200] sm:$0xff]
      %v1265 = vld [vmem:[%s1 + $0x208] sm:$0xff]
      %v1266 = vld [vmem:[%s1 + $0x210] sm:$0xff]
      %v1267 = vld [vmem:[%s1 + $0x218] sm:$0xff]
      %v1268 = vld [vmem:[%s1 + $0x220] sm:$0xff]
      %v1269 = vld [vmem:[%s1 + $0x228] sm:$0xff]
      %v1270 = vld [vmem:[%s1 + $0x230] sm:$0xff]
      %v1271 = vld [vmem:[%s1 + $0x238] sm:$0xff]
      %v1272 = vld [vmem:[%s1 + $0x240] sm:$0xff]
      %v1273 = vld [vmem:[%s1 + $0x248] sm:$0xff]
      %v1274 = vld [vmem:[%s1 + $0x250] sm:$0xff]
      %v1275 = vld [vmem:[%s1 + $0x258] sm:$0xff]
      %v1276 = vld [vmem:[%s1 + $0x260] sm:$0xff]
      %v1277 = vld [vmem:[%s1 + $0x268] sm:$0xff]
      %v1278 = vld [vmem:[%s1 + $0x270] sm:$0xff]
      %v1279 = vld [vmem:[%s1 + $0x278] sm:$0xff]
      %v1280 = vld [vmem:[%s1 + $0x280] sm:$0xff]
      %v1281 = vld [vmem:[%s1 + $0x288] sm:$0xff]
      %v1282 = vld [vmem:[%s1 + $0x290] sm:$0xff]
      %v1283 = vld [vmem:[%s1 + $0x298] sm:$0xff]
      %v1284 = vld [vmem:[%s1 + $0x2a0] sm:$0xff]
      %v1285 = vld [vmem:[%s1 + $0x2a8] sm:$0xff]
      %v1286 = vld [vmem:[%s1 + $0x2b0] sm:$0xff]
      %v1287 = vld [vmem:[%s1 + $0x2b8] sm:$0xff]
      %v1288 = vld [vmem:[%s1 + $0x2c0] sm:$0xff]
      %v1289 = vld [vmem:[%s1 + $0x2c8] sm:$0xff]
      %v1290 = vld [vmem:[%s1 + $0x2d0] sm:$0xff]
      %v1291 = vld [vmem:[%s1 + $0x2d8] sm:$0xff]
      %v1292 = vld [vmem:[%s1 + $0x2e0] sm:$0xff]
      %v1293 = vld [vmem:[%s1 + $0x2e8] sm:$0xff]
      %v1294 = vld [vmem:[%s1 + $0x2f0] sm:$0xff]
      %v1295 = vld [vmem:[%s1 + $0x2f8] sm:$0xff]
      %v1296 = vld [vmem:[%s1 + $0x300] sm:$0xff]
      %v1297 = vld [vmem:[%s1 + $0x308] sm:$0xff]
      %v1298 = vld [vmem:[%s1 + $0x310] sm:$0xff]
      %v1299 = vld [vmem:[%s1 + $0x318] sm:$0xff]
      %v1300 = vld [vmem:[%s1 + $0x320] sm:$0xff]
      %v1301 = vld [vmem:[%s1 + $0x328] sm:$0xff]
      %v1302 = vld [vmem:[%s1 + $0x330] sm:$0xff]
      %v1303 = vld [vmem:[%s1 + $0x338] sm:$0xff]
      %v1304 = vld [vmem:[%s1 + $0x340] sm:$0xff]
      %v1305 = vld [vmem:[%s1 + $0x348] sm:$0xff]
      %v1306 = vld [vmem:[%s1 + $0x350] sm:$0xff]
      %v1307 = vld [vmem:[%s1 + $0x358] sm:$0xff]
      %v1308 = vld [vmem:[%s1 + $0x360] sm:$0xff]
      %v1309 = vld [vmem:[%s1 + $0x368] sm:$0xff]
      %v1310 = vld [vmem:[%s1 + $0x370] sm:$0xff]
      %v1311 = vld [vmem:[%s1 + $0x378] sm:$0xff]
      %v1312 = vld [vmem:[%s1 + $0x380] sm:$0xff]
      %v1313 = vld [vmem:[%s1 + $0x388] sm:$0xff]
      %v1314 = vld [vmem:[%s1 + $0x390] sm:$0xff]
      %v1315 = vld [vmem:[%s1 + $0x398] sm:$0xff]
      %v1316 = vld [vmem:[%s1 + $0x3a0] sm:$0xff]
      %v1317 = vld [vmem:[%s1 + $0x3a8] sm:$0xff]
      %v1318 = vld [vmem:[%s1 + $0x3b0] sm:$0xff]
      %v1319 = vld [vmem:[%s1 + $0x3b8] sm:$0xff]
      %v1320 = vld [vmem:[%s1 + $0x3c0] sm:$0xff]
      %v1321 = vld [vmem:[%s1 + $0x3c8] sm:$0xff]
      %v1322 = vld [vmem:[%s1 + $0x3d0] sm:$0xff]
      %v1323 = vld [vmem:[%s1 + $0x3d8] sm:$0xff]
      %v1324 = vld [vmem:[%s1 + $0x3e0] sm:$0xff]
      %v1325 = vld [vmem:[%s1 + $0x3e8] sm:$0xff]
      %v1326 = vld [vmem:[%s1 + $0x3f0] sm:$0xff]
      %v1327 = vld [vmem:[%s1 + $0x3f8] sm:$0xff]
      %v1328 = vld [vmem:[%s1 + $0x400] sm:$0xff]
      %v1329 = vld [vmem:[%s1 + $0x408] sm:$0xff]
      %v1330 = vld [vmem:[%s1 + $0x410] sm:$0xff]
      %v1331 = vld [vmem:[%s1 + $0x418] sm:$0xff]
      %v1332 = vld [vmem:[%s1 + $0x420] sm:$0xff]
      %v1333 = vld [vmem:[%s1 + $0x428] sm:$0xff]
      %v1334 = vld [vmem:[%s1 + $0x430] sm:$0xff]
      %v1335 = vld [vmem:[%s1 + $0x438] sm:$0xff]
      %v1336 = vld [vmem:[%s1 + $0x440] sm:$0xff]
      %v1337 = vld [vmem:[%s1 + $0x448] sm:$0xff]
      %v1338 = vld [vmem:[%s1 + $0x450] sm:$0xff]
      %v1339 = vld [vmem:[%s1 + $0x458] sm:$0xff]
      %v1340 = vld [vmem:[%s1 + $0x460] sm:$0xff]
      %v1341 = vld [vmem:[%s1 + $0x468] sm:$0xff]
      %v1342 = vld [vmem:[%s1 + $0x470] sm:$0xff]
      %v1343 = vld [vmem:[%s1 + $0x478] sm:$0xff]
      %1344 = vmatpush.msra.mxu0 %v1215
      %1345 = vmatpush.msra.mxu0 %v1214
      %1346 = vmatpush.msra.mxu0 %v1213
      %1347 = vmatpush.msra.mxu0 %v1212
      %1348 = vmatpush.msra.mxu0 %v1211
      %1349 = vmatpush.msra.mxu0 %v1210
      %1350 = vmatpush.msra.mxu0 %v1209
      %1351 = vmatpush.msra.mxu0 %v1208
      %1352 = vmatpush.msra.mxu0 %v1207
      %1353 = vmatpush.msra.mxu0 %v1206
      %1354 = vmatpush.msra.mxu0 %v1205
      %1355 = vmatpush.msra.mxu0 %v1204
      %1356 = vmatpush.msra.mxu0 %v1203
      %1357 = vmatpush.msra.mxu0 %v1202
      %1358 = vmatpush.msra.mxu0 %v1201
      %1359 = vmatpush.msra.mxu0 %v1200
      %1360 = vmatmul.f32.gmra.mxu0 %v912
      %v1361 = vpop.f32.mrf.mxu0
      %v1362 = vadd.f32 0.0, %v1361
      %1363 = vmatmul.f32.gmra.mxu0 %v921
      %v1364 = vpop.f32.mrf.mxu0
      %v1365 = vadd.f32 0.0, %v1364
      %1366 = vmatmul.f32.gmra.mxu0 %v930
      %v1367 = vpop.f32.mrf.mxu0
      %v1368 = vadd.f32 0.0, %v1367
      %1369 = vmatmul.f32.gmra.mxu0 %v939
      %v1370 = vpop.f32.mrf.mxu0
      %v1371 = vadd.f32 0.0, %v1370
      %1372 = vmatmul.f32.gmra.mxu0 %v948
      %v1373 = vpop.f32.mrf.mxu0
      %v1374 = vadd.f32 0.0, %v1373
      %1375 = vmatmul.f32.gmra.mxu0 %v957
      %v1376 = vpop.f32.mrf.mxu0
      %v1377 = vadd.f32 0.0, %v1376
      %1378 = vmatmul.f32.gmra.mxu0 %v966
      %v1379 = vpop.f32.mrf.mxu0
      %v1380 = vadd.f32 0.0, %v1379
      %1381 = vmatmul.f32.gmra.mxu0 %v975
      %v1382 = vpop.f32.mrf.mxu0
      %v1383 = vadd.f32 0.0, %v1382
      %1384 = vmatmul.f32.gmra.mxu0 %v984
      %v1385 = vpop.f32.mrf.mxu0
      %v1386 = vadd.f32 0.0, %v1385
      %1387 = vmatmul.f32.gmra.mxu0 %v993
      %v1388 = vpop.f32.mrf.mxu0
      %v1389 = vadd.f32 0.0, %v1388
      %1390 = vmatmul.f32.gmra.mxu0 %v1002
      %v1391 = vpop.f32.mrf.mxu0
      %v1392 = vadd.f32 0.0, %v1391
      %1393 = vmatmul.f32.gmra.mxu0 %v1011
      %v1394 = vpop.f32.mrf.mxu0
      %v1395 = vadd.f32 0.0, %v1394
      %1396 = vmatmul.f32.gmra.mxu0 %v1020
      %v1397 = vpop.f32.mrf.mxu0
      %v1398 = vadd.f32 0.0, %v1397
      %1399 = vmatmul.f32.gmra.mxu0 %v1029
      %v1400 = vpop.f32.mrf.mxu0
      %v1401 = vadd.f32 0.0, %v1400
      %1402 = vmatmul.f32.gmra.mxu0 %v1038
      %v1403 = vpop.f32.mrf.mxu0
      %v1404 = vadd.f32 0.0, %v1403
      %1405 = vmatmul.f32.gmra.mxu0 %v1047
      %v1406 = vpop.f32.mrf.mxu0
      %v1407 = vadd.f32 0.0, %v1406
      %1408 = vmatmul.f32.gmra.mxu0 %v1056
      %v1409 = vpop.f32.mrf.mxu0
      %v1410 = vadd.f32 0.0, %v1409
      %1411 = vmatmul.f32.gmra.mxu0 %v1065
      %v1412 = vpop.f32.mrf.mxu0
      %v1413 = vadd.f32 0.0, %v1412
      %1414 = vmatmul.f32.gmra.mxu0 %v1074
      %v1415 = vpop.f32.mrf.mxu0
      %v1416 = vadd.f32 0.0, %v1415
      %1417 = vmatmul.f32.gmra.mxu0 %v1083
      %v1418 = vpop.f32.mrf.mxu0
      %v1419 = vadd.f32 0.0, %v1418
      %1420 = vmatmul.f32.gmra.mxu0 %v1092
      %v1421 = vpop.f32.mrf.mxu0
      %v1422 = vadd.f32 0.0, %v1421
      %1423 = vmatmul.f32.gmra.mxu0 %v1101
      %v1424 = vpop.f32.mrf.mxu0
      %v1425 = vadd.f32 0.0, %v1424
      %1426 = vmatmul.f32.gmra.mxu0 %v1110
      %v1427 = vpop.f32.mrf.mxu0
      %v1428 = vadd.f32 0.0, %v1427
      %1429 = vmatmul.f32.gmra.mxu0 %v1119
      %v1430 = vpop.f32.mrf.mxu0
      %v1431 = vadd.f32 0.0, %v1430
      %1432 = vmatmul.f32.gmra.mxu0 %v1128
      %v1433 = vpop.f32.mrf.mxu0
      %v1434 = vadd.f32 0.0, %v1433
      %1435 = vmatmul.f32.gmra.mxu0 %v1137
      %v1436 = vpop.f32.mrf.mxu0
      %v1437 = vadd.f32 0.0, %v1436
      %1438 = vmatmul.f32.gmra.mxu0 %v1146
      %v1439 = vpop.f32.mrf.mxu0
      %v1440 = vadd.f32 0.0, %v1439
      %1441 = vmatmul.f32.gmra.mxu0 %v1155
      %v1442 = vpop.f32.mrf.mxu0
      %v1443 = vadd.f32 0.0, %v1442
      %1444 = vmatmul.f32.gmra.mxu0 %v1164
      %v1445 = vpop.f32.mrf.mxu0
      %v1446 = vadd.f32 0.0, %v1445
      %1447 = vmatmul.f32.gmra.mxu0 %v1173
      %v1448 = vpop.f32.mrf.mxu0
      %v1449 = vadd.f32 0.0, %v1448
      %1450 = vmatmul.f32.gmra.mxu0 %v1182
      %v1451 = vpop.f32.mrf.mxu0
      %v1452 = vadd.f32 0.0, %v1451
      %1453 = vmatmul.f32.gmra.mxu0 %v1191
      %v1454 = vpop.f32.mrf.mxu0
      %v1455 = vadd.f32 0.0, %v1454
      %1456 = vdwg.mxu0
      %1457 = vmatpush.msra.mxu0 %v1231
      %1458 = vmatpush.msra.mxu0 %v1230
      %1459 = vmatpush.msra.mxu0 %v1229
      %1460 = vmatpush.msra.mxu0 %v1228
      %1461 = vmatpush.msra.mxu0 %v1227
      %1462 = vmatpush.msra.mxu0 %v1226
      %1463 = vmatpush.msra.mxu0 %v1225
      %1464 = vmatpush.msra.mxu0 %v1224
      %1465 = vmatpush.msra.mxu0 %v1223
      %1466 = vmatpush.msra.mxu0 %v1222
      %1467 = vmatpush.msra.mxu0 %v1221
      %1468 = vmatpush.msra.mxu0 %v1220
      %1469 = vmatpush.msra.mxu0 %v1219
      %1470 = vmatpush.msra.mxu0 %v1218
      %1471 = vmatpush.msra.mxu0 %v1217
      %1472 = vmatpush.msra.mxu0 %v1216
      %1473 = vmatmul.f32.gmra.mxu0 %v913
      %v1474 = vpop.f32.mrf.mxu0
      %v1475 = vadd.f32 %v1362, %v1474
      %1476 = vmatmul.f32.gmra.mxu0 %v922
      %v1477 = vpop.f32.mrf.mxu0
      %v1478 = vadd.f32 %v1365, %v1477
      %1479 = vmatmul.f32.gmra.mxu0 %v931
      %v1480 = vpop.f32.mrf.mxu0
      %v1481 = vadd.f32 %v1368, %v1480
      %1482 = vmatmul.f32.gmra.mxu0 %v940
      %v1483 = vpop.f32.mrf.mxu0
      %v1484 = vadd.f32 %v1371, %v1483
      %1485 = vmatmul.f32.gmra.mxu0 %v949
      %v1486 = vpop.f32.mrf.mxu0
      %v1487 = vadd.f32 %v1374, %v1486
      %1488 = vmatmul.f32.gmra.mxu0 %v958
      %v1489 = vpop.f32.mrf.mxu0
      %v1490 = vadd.f32 %v1377, %v1489
      %1491 = vmatmul.f32.gmra.mxu0 %v967
      %v1492 = vpop.f32.mrf.mxu0
      %v1493 = vadd.f32 %v1380, %v1492
      %1494 = vmatmul.f32.gmra.mxu0 %v976
      %v1495 = vpop.f32.mrf.mxu0
      %v1496 = vadd.f32 %v1383, %v1495
      %1497 = vmatmul.f32.gmra.mxu0 %v985
      %v1498 = vpop.f32.mrf.mxu0
      %v1499 = vadd.f32 %v1386, %v1498
      %1500 = vmatmul.f32.gmra.mxu0 %v994
      %v1501 = vpop.f32.mrf.mxu0
      %v1502 = vadd.f32 %v1389, %v1501
      %1503 = vmatmul.f32.gmra.mxu0 %v1003
      %v1504 = vpop.f32.mrf.mxu0
      %v1505 = vadd.f32 %v1392, %v1504
      %1506 = vmatmul.f32.gmra.mxu0 %v1012
      %v1507 = vpop.f32.mrf.mxu0
      %v1508 = vadd.f32 %v1395, %v1507
      %1509 = vmatmul.f32.gmra.mxu0 %v1021
      %v1510 = vpop.f32.mrf.mxu0
      %v1511 = vadd.f32 %v1398, %v1510
      %1512 = vmatmul.f32.gmra.mxu0 %v1030
      %v1513 = vpop.f32.mrf.mxu0
      %v1514 = vadd.f32 %v1401, %v1513
      %1515 = vmatmul.f32.gmra.mxu0 %v1039
      %v1516 = vpop.f32.mrf.mxu0
      %v1517 = vadd.f32 %v1404, %v1516
      %1518 = vmatmul.f32.gmra.mxu0 %v1048
      %v1519 = vpop.f32.mrf.mxu0
      %v1520 = vadd.f32 %v1407, %v1519
      %1521 = vmatmul.f32.gmra.mxu0 %v1057
      %v1522 = vpop.f32.mrf.mxu0
      %v1523 = vadd.f32 %v1410, %v1522
      %1524 = vmatmul.f32.gmra.mxu0 %v1066
      %v1525 = vpop.f32.mrf.mxu0
      %v1526 = vadd.f32 %v1413, %v1525
      %1527 = vmatmul.f32.gmra.mxu0 %v1075
      %v1528 = vpop.f32.mrf.mxu0
      %v1529 = vadd.f32 %v1416, %v1528
      %1530 = vmatmul.f32.gmra.mxu0 %v1084
      %v1531 = vpop.f32.mrf.mxu0
      %v1532 = vadd.f32 %v1419, %v1531
      %1533 = vmatmul.f32.gmra.mxu0 %v1093
      %v1534 = vpop.f32.mrf.mxu0
      %v1535 = vadd.f32 %v1422, %v1534
      %1536 = vmatmul.f32.gmra.mxu0 %v1102
      %v1537 = vpop.f32.mrf.mxu0
      %v1538 = vadd.f32 %v1425, %v1537
      %1539 = vmatmul.f32.gmra.mxu0 %v1111
      %v1540 = vpop.f32.mrf.mxu0
      %v1541 = vadd.f32 %v1428, %v1540
      %1542 = vmatmul.f32.gmra.mxu0 %v1120
      %v1543 = vpop.f32.mrf.mxu0
      %v1544 = vadd.f32 %v1431, %v1543
      %1545 = vmatmul.f32.gmra.mxu0 %v1129
      %v1546 = vpop.f32.mrf.mxu0
      %v1547 = vadd.f32 %v1434, %v1546
      %1548 = vmatmul.f32.gmra.mxu0 %v1138
      %v1549 = vpop.f32.mrf.mxu0
      %v1550 = vadd.f32 %v1437, %v1549
      %1551 = vmatmul.f32.gmra.mxu0 %v1147
      %v1552 = vpop.f32.mrf.mxu0
      %v1553 = vadd.f32 %v1440, %v1552
      %1554 = vmatmul.f32.gmra.mxu0 %v1156
      %v1555 = vpop.f32.mrf.mxu0
      %v1556 = vadd.f32 %v1443, %v1555
      %1557 = vmatmul.f32.gmra.mxu0 %v1165
      %v1558 = vpop.f32.mrf.mxu0
      %v1559 = vadd.f32 %v1446, %v1558
      %1560 = vmatmul.f32.gmra.mxu0 %v1174
      %v1561 = vpop.f32.mrf.mxu0
      %v1562 = vadd.f32 %v1449, %v1561
      %1563 = vmatmul.f32.gmra.mxu0 %v1183
      %v1564 = vpop.f32.mrf.mxu0
      %v1565 = vadd.f32 %v1452, %v1564
      %1566 = vmatmul.f32.gmra.mxu0 %v1192
      %v1567 = vpop.f32.mrf.mxu0
      %v1568 = vadd.f32 %v1455, %v1567
      %1569 = vdwg.mxu0
      %1570 = vmatpush.msra.mxu0 %v1247
      %1571 = vmatpush.msra.mxu0 %v1246
      %1572 = vmatpush.msra.mxu0 %v1245
      %1573 = vmatpush.msra.mxu0 %v1244
      %1574 = vmatpush.msra.mxu0 %v1243
      %1575 = vmatpush.msra.mxu0 %v1242
      %1576 = vmatpush.msra.mxu0 %v1241
      %1577 = vmatpush.msra.mxu0 %v1240
      %1578 = vmatpush.msra.mxu0 %v1239
      %1579 = vmatpush.msra.mxu0 %v1238
      %1580 = vmatpush.msra.mxu0 %v1237
      %1581 = vmatpush.msra.mxu0 %v1236
      %1582 = vmatpush.msra.mxu0 %v1235
      %1583 = vmatpush.msra.mxu0 %v1234
      %1584 = vmatpush.msra.mxu0 %v1233
      %1585 = vmatpush.msra.mxu0 %v1232
      %1586 = vmatmul.f32.gmra.mxu0 %v914
      %v1587 = vpop.f32.mrf.mxu0
      %v1588 = vadd.f32 %v1475, %v1587
      %1589 = vmatmul.f32.gmra.mxu0 %v923
      %v1590 = vpop.f32.mrf.mxu0
      %v1591 = vadd.f32 %v1478, %v1590
      %1592 = vmatmul.f32.gmra.mxu0 %v932
      %v1593 = vpop.f32.mrf.mxu0
      %v1594 = vadd.f32 %v1481, %v1593
      %1595 = vmatmul.f32.gmra.mxu0 %v941
      %v1596 = vpop.f32.mrf.mxu0
      %v1597 = vadd.f32 %v1484, %v1596
      %1598 = vmatmul.f32.gmra.mxu0 %v950
      %v1599 = vpop.f32.mrf.mxu0
      %v1600 = vadd.f32 %v1487, %v1599
      %1601 = vmatmul.f32.gmra.mxu0 %v959
      %v1602 = vpop.f32.mrf.mxu0
      %v1603 = vadd.f32 %v1490, %v1602
      %1604 = vmatmul.f32.gmra.mxu0 %v968
      %v1605 = vpop.f32.mrf.mxu0
      %v1606 = vadd.f32 %v1493, %v1605
      %1607 = vmatmul.f32.gmra.mxu0 %v977
      %v1608 = vpop.f32.mrf.mxu0
      %v1609 = vadd.f32 %v1496, %v1608
      %1610 = vmatmul.f32.gmra.mxu0 %v986
      %v1611 = vpop.f32.mrf.mxu0
      %v1612 = vadd.f32 %v1499, %v1611
      %1613 = vmatmul.f32.gmra.mxu0 %v995
      %v1614 = vpop.f32.mrf.mxu0
      %v1615 = vadd.f32 %v1502, %v1614
      %1616 = vmatmul.f32.gmra.mxu0 %v1004
      %v1617 = vpop.f32.mrf.mxu0
      %v1618 = vadd.f32 %v1505, %v1617
      %1619 = vmatmul.f32.gmra.mxu0 %v1013
      %v1620 = vpop.f32.mrf.mxu0
      %v1621 = vadd.f32 %v1508, %v1620
      %1622 = vmatmul.f32.gmra.mxu0 %v1022
      %v1623 = vpop.f32.mrf.mxu0
      %v1624 = vadd.f32 %v1511, %v1623
      %1625 = vmatmul.f32.gmra.mxu0 %v1031
      %v1626 = vpop.f32.mrf.mxu0
      %v1627 = vadd.f32 %v1514, %v1626
      %1628 = vmatmul.f32.gmra.mxu0 %v1040
      %v1629 = vpop.f32.mrf.mxu0
      %v1630 = vadd.f32 %v1517, %v1629
      %1631 = vmatmul.f32.gmra.mxu0 %v1049
      %v1632 = vpop.f32.mrf.mxu0
      %v1633 = vadd.f32 %v1520, %v1632
      %1634 = vmatmul.f32.gmra.mxu0 %v1058
      %v1635 = vpop.f32.mrf.mxu0
      %v1636 = vadd.f32 %v1523, %v1635
      %1637 = vmatmul.f32.gmra.mxu0 %v1067
      %v1638 = vpop.f32.mrf.mxu0
      %v1639 = vadd.f32 %v1526, %v1638
      %1640 = vmatmul.f32.gmra.mxu0 %v1076
      %v1641 = vpop.f32.mrf.mxu0
      %v1642 = vadd.f32 %v1529, %v1641
      %1643 = vmatmul.f32.gmra.mxu0 %v1085
      %v1644 = vpop.f32.mrf.mxu0
      %v1645 = vadd.f32 %v1532, %v1644
      %1646 = vmatmul.f32.gmra.mxu0 %v1094
      %v1647 = vpop.f32.mrf.mxu0
      %v1648 = vadd.f32 %v1535, %v1647
      %1649 = vmatmul.f32.gmra.mxu0 %v1103
      %v1650 = vpop.f32.mrf.mxu0
      %v1651 = vadd.f32 %v1538, %v1650
      %1652 = vmatmul.f32.gmra.mxu0 %v1112
      %v1653 = vpop.f32.mrf.mxu0
      %v1654 = vadd.f32 %v1541, %v1653
      %1655 = vmatmul.f32.gmra.mxu0 %v1121
      %v1656 = vpop.f32.mrf.mxu0
      %v1657 = vadd.f32 %v1544, %v1656
      %1658 = vmatmul.f32.gmra.mxu0 %v1130
      %v1659 = vpop.f32.mrf.mxu0
      %v1660 = vadd.f32 %v1547, %v1659
      %1661 = vmatmul.f32.gmra.mxu0 %v1139
      %v1662 = vpop.f32.mrf.mxu0
      %v1663 = vadd.f32 %v1550, %v1662
      %1664 = vmatmul.f32.gmra.mxu0 %v1148
      %v1665 = vpop.f32.mrf.mxu0
      %v1666 = vadd.f32 %v1553, %v1665
      %1667 = vmatmul.f32.gmra.mxu0 %v1157
      %v1668 = vpop.f32.mrf.mxu0
      %v1669 = vadd.f32 %v1556, %v1668
      %1670 = vmatmul.f32.gmra.mxu0 %v1166
      %v1671 = vpop.f32.mrf.mxu0
      %v1672 = vadd.f32 %v1559, %v1671
      %1673 = vmatmul.f32.gmra.mxu0 %v1175
      %v1674 = vpop.f32.mrf.mxu0
      %v1675 = vadd.f32 %v1562, %v1674
      %1676 = vmatmul.f32.gmra.mxu0 %v1184
      %v1677 = vpop.f32.mrf.mxu0
      %v1678 = vadd.f32 %v1565, %v1677
      %1679 = vmatmul.f32.gmra.mxu0 %v1193
      %v1680 = vpop.f32.mrf.mxu0
      %v1681 = vadd.f32 %v1568, %v1680
      %1682 = vdwg.mxu0
      %1683 = vmatpush.msra.mxu0 %v1263
      %1684 = vmatpush.msra.mxu0 %v1262
      %1685 = vmatpush.msra.mxu0 %v1261
      %1686 = vmatpush.msra.mxu0 %v1260
      %1687 = vmatpush.msra.mxu0 %v1259
      %1688 = vmatpush.msra.mxu0 %v1258
      %1689 = vmatpush.msra.mxu0 %v1257
      %1690 = vmatpush.msra.mxu0 %v1256
      %1691 = vmatpush.msra.mxu0 %v1255
      %1692 = vmatpush.msra.mxu0 %v1254
      %1693 = vmatpush.msra.mxu0 %v1253
      %1694 = vmatpush.msra.mxu0 %v1252
      %1695 = vmatpush.msra.mxu0 %v1251
      %1696 = vmatpush.msra.mxu0 %v1250
      %1697 = vmatpush.msra.mxu0 %v1249
      %1698 = vmatpush.msra.mxu0 %v1248
      %1699 = vmatmul.f32.gmra.mxu0 %v915
      %v1700 = vpop.f32.mrf.mxu0
      %v1701 = vadd.f32 %v1588, %v1700
      %1702 = vmatmul.f32.gmra.mxu0 %v924
      %v1703 = vpop.f32.mrf.mxu0
      %v1704 = vadd.f32 %v1591, %v1703
      %1705 = vmatmul.f32.gmra.mxu0 %v933
      %v1706 = vpop.f32.mrf.mxu0
      %v1707 = vadd.f32 %v1594, %v1706
      %1708 = vmatmul.f32.gmra.mxu0 %v942
      %v1709 = vpop.f32.mrf.mxu0
      %v1710 = vadd.f32 %v1597, %v1709
      %1711 = vmatmul.f32.gmra.mxu0 %v951
      %v1712 = vpop.f32.mrf.mxu0
      %v1713 = vadd.f32 %v1600, %v1712
      %1714 = vmatmul.f32.gmra.mxu0 %v960
      %v1715 = vpop.f32.mrf.mxu0
      %v1716 = vadd.f32 %v1603, %v1715
      %1717 = vmatmul.f32.gmra.mxu0 %v969
      %v1718 = vpop.f32.mrf.mxu0
      %v1719 = vadd.f32 %v1606, %v1718
      %1720 = vmatmul.f32.gmra.mxu0 %v978
      %v1721 = vpop.f32.mrf.mxu0
      %v1722 = vadd.f32 %v1609, %v1721
      %1723 = vmatmul.f32.gmra.mxu0 %v987
      %v1724 = vpop.f32.mrf.mxu0
      %v1725 = vadd.f32 %v1612, %v1724
      %1726 = vmatmul.f32.gmra.mxu0 %v996
      %v1727 = vpop.f32.mrf.mxu0
      %v1728 = vadd.f32 %v1615, %v1727
      %1729 = vmatmul.f32.gmra.mxu0 %v1005
      %v1730 = vpop.f32.mrf.mxu0
      %v1731 = vadd.f32 %v1618, %v1730
      %1732 = vmatmul.f32.gmra.mxu0 %v1014
      %v1733 = vpop.f32.mrf.mxu0
      %v1734 = vadd.f32 %v1621, %v1733
      %1735 = vmatmul.f32.gmra.mxu0 %v1023
      %v1736 = vpop.f32.mrf.mxu0
      %v1737 = vadd.f32 %v1624, %v1736
      %1738 = vmatmul.f32.gmra.mxu0 %v1032
      %v1739 = vpop.f32.mrf.mxu0
      %v1740 = vadd.f32 %v1627, %v1739
      %1741 = vmatmul.f32.gmra.mxu0 %v1041
      %v1742 = vpop.f32.mrf.mxu0
      %v1743 = vadd.f32 %v1630, %v1742
      %1744 = vmatmul.f32.gmra.mxu0 %v1050
      %v1745 = vpop.f32.mrf.mxu0
      %v1746 = vadd.f32 %v1633, %v1745
      %1747 = vmatmul.f32.gmra.mxu0 %v1059
      %v1748 = vpop.f32.mrf.mxu0
      %v1749 = vadd.f32 %v1636, %v1748
      %1750 = vmatmul.f32.gmra.mxu0 %v1068
      %v1751 = vpop.f32.mrf.mxu0
      %v1752 = vadd.f32 %v1639, %v1751
      %1753 = vmatmul.f32.gmra.mxu0 %v1077
      %v1754 = vpop.f32.mrf.mxu0
      %v1755 = vadd.f32 %v1642, %v1754
      %1756 = vmatmul.f32.gmra.mxu0 %v1086
      %v1757 = vpop.f32.mrf.mxu0
      %v1758 = vadd.f32 %v1645, %v1757
      %1759 = vmatmul.f32.gmra.mxu0 %v1095
      %v1760 = vpop.f32.mrf.mxu0
      %v1761 = vadd.f32 %v1648, %v1760
      %1762 = vmatmul.f32.gmra.mxu0 %v1104
      %v1763 = vpop.f32.mrf.mxu0
      %v1764 = vadd.f32 %v1651, %v1763
      %1765 = vmatmul.f32.gmra.mxu0 %v1113
      %v1766 = vpop.f32.mrf.mxu0
      %v1767 = vadd.f32 %v1654, %v1766
      %1768 = vmatmul.f32.gmra.mxu0 %v1122
      %v1769 = vpop.f32.mrf.mxu0
      %v1770 = vadd.f32 %v1657, %v1769
      %1771 = vmatmul.f32.gmra.mxu0 %v1131
      %v1772 = vpop.f32.mrf.mxu0
      %v1773 = vadd.f32 %v1660, %v1772
      %1774 = vmatmul.f32.gmra.mxu0 %v1140
      %v1775 = vpop.f32.mrf.mxu0
      %v1776 = vadd.f32 %v1663, %v1775
      %1777 = vmatmul.f32.gmra.mxu0 %v1149
      %v1778 = vpop.f32.mrf.mxu0
      %v1779 = vadd.f32 %v1666, %v1778
      %1780 = vmatmul.f32.gmra.mxu0 %v1158
      %v1781 = vpop.f32.mrf.mxu0
      %v1782 = vadd.f32 %v1669, %v1781
      %1783 = vmatmul.f32.gmra.mxu0 %v1167
      %v1784 = vpop.f32.mrf.mxu0
      %v1785 = vadd.f32 %v1672, %v1784
      %1786 = vmatmul.f32.gmra.mxu0 %v1176
      %v1787 = vpop.f32.mrf.mxu0
      %v1788 = vadd.f32 %v1675, %v1787
      %1789 = vmatmul.f32.gmra.mxu0 %v1185
      %v1790 = vpop.f32.mrf.mxu0
      %v1791 = vadd.f32 %v1678, %v1790
      %1792 = vmatmul.f32.gmra.mxu0 %v1194
      %v1793 = vpop.f32.mrf.mxu0
      %v1794 = vadd.f32 %v1681, %v1793
      %1795 = vdwg.mxu0
      %1796 = vmatpush.msra.mxu0 %v1279
      %1797 = vmatpush.msra.mxu0 %v1278
      %1798 = vmatpush.msra.mxu0 %v1277
      %1799 = vmatpush.msra.mxu0 %v1276
      %1800 = vmatpush.msra.mxu0 %v1275
      %1801 = vmatpush.msra.mxu0 %v1274
      %1802 = vmatpush.msra.mxu0 %v1273
      %1803 = vmatpush.msra.mxu0 %v1272
      %1804 = vmatpush.msra.mxu0 %v1271
      %1805 = vmatpush.msra.mxu0 %v1270
      %1806 = vmatpush.msra.mxu0 %v1269
      %1807 = vmatpush.msra.mxu0 %v1268
      %1808 = vmatpush.msra.mxu0 %v1267
      %1809 = vmatpush.msra.mxu0 %v1266
      %1810 = vmatpush.msra.mxu0 %v1265
      %1811 = vmatpush.msra.mxu0 %v1264
      %1812 = vmatmul.f32.gmra.mxu0 %v916
      %v1813 = vpop.f32.mrf.mxu0
      %v1814 = vadd.f32 %v1701, %v1813
      %1815 = vmatmul.f32.gmra.mxu0 %v925
      %v1816 = vpop.f32.mrf.mxu0
      %v1817 = vadd.f32 %v1704, %v1816
      %1818 = vmatmul.f32.gmra.mxu0 %v934
      %v1819 = vpop.f32.mrf.mxu0
      %v1820 = vadd.f32 %v1707, %v1819
      %1821 = vmatmul.f32.gmra.mxu0 %v943
      %v1822 = vpop.f32.mrf.mxu0
      %v1823 = vadd.f32 %v1710, %v1822
      %1824 = vmatmul.f32.gmra.mxu0 %v952
      %v1825 = vpop.f32.mrf.mxu0
      %v1826 = vadd.f32 %v1713, %v1825
      %1827 = vmatmul.f32.gmra.mxu0 %v961
      %v1828 = vpop.f32.mrf.mxu0
      %v1829 = vadd.f32 %v1716, %v1828
      %1830 = vmatmul.f32.gmra.mxu0 %v970
      %v1831 = vpop.f32.mrf.mxu0
      %v1832 = vadd.f32 %v1719, %v1831
      %1833 = vmatmul.f32.gmra.mxu0 %v979
      %v1834 = vpop.f32.mrf.mxu0
      %v1835 = vadd.f32 %v1722, %v1834
      %1836 = vmatmul.f32.gmra.mxu0 %v988
      %v1837 = vpop.f32.mrf.mxu0
      %v1838 = vadd.f32 %v1725, %v1837
      %1839 = vmatmul.f32.gmra.mxu0 %v997
      %v1840 = vpop.f32.mrf.mxu0
      %v1841 = vadd.f32 %v1728, %v1840
      %1842 = vmatmul.f32.gmra.mxu0 %v1006
      %v1843 = vpop.f32.mrf.mxu0
      %v1844 = vadd.f32 %v1731, %v1843
      %1845 = vmatmul.f32.gmra.mxu0 %v1015
      %v1846 = vpop.f32.mrf.mxu0
      %v1847 = vadd.f32 %v1734, %v1846
      %1848 = vmatmul.f32.gmra.mxu0 %v1024
      %v1849 = vpop.f32.mrf.mxu0
      %v1850 = vadd.f32 %v1737, %v1849
      %1851 = vmatmul.f32.gmra.mxu0 %v1033
      %v1852 = vpop.f32.mrf.mxu0
      %v1853 = vadd.f32 %v1740, %v1852
      %1854 = vmatmul.f32.gmra.mxu0 %v1042
      %v1855 = vpop.f32.mrf.mxu0
      %v1856 = vadd.f32 %v1743, %v1855
      %1857 = vmatmul.f32.gmra.mxu0 %v1051
      %v1858 = vpop.f32.mrf.mxu0
      %v1859 = vadd.f32 %v1746, %v1858
      %1860 = vmatmul.f32.gmra.mxu0 %v1060
      %v1861 = vpop.f32.mrf.mxu0
      %v1862 = vadd.f32 %v1749, %v1861
      %1863 = vmatmul.f32.gmra.mxu0 %v1069
      %v1864 = vpop.f32.mrf.mxu0
      %v1865 = vadd.f32 %v1752, %v1864
      %1866 = vmatmul.f32.gmra.mxu0 %v1078
      %v1867 = vpop.f32.mrf.mxu0
      %v1868 = vadd.f32 %v1755, %v1867
      %1869 = vmatmul.f32.gmra.mxu0 %v1087
      %v1870 = vpop.f32.mrf.mxu0
      %v1871 = vadd.f32 %v1758, %v1870
      %1872 = vmatmul.f32.gmra.mxu0 %v1096
      %v1873 = vpop.f32.mrf.mxu0
      %v1874 = vadd.f32 %v1761, %v1873
      %1875 = vmatmul.f32.gmra.mxu0 %v1105
      %v1876 = vpop.f32.mrf.mxu0
      %v1877 = vadd.f32 %v1764, %v1876
      %1878 = vmatmul.f32.gmra.mxu0 %v1114
      %v1879 = vpop.f32.mrf.mxu0
      %v1880 = vadd.f32 %v1767, %v1879
      %1881 = vmatmul.f32.gmra.mxu0 %v1123
      %v1882 = vpop.f32.mrf.mxu0
      %v1883 = vadd.f32 %v1770, %v1882
      %1884 = vmatmul.f32.gmra.mxu0 %v1132
      %v1885 = vpop.f32.mrf.mxu0
      %v1886 = vadd.f32 %v1773, %v1885
      %1887 = vmatmul.f32.gmra.mxu0 %v1141
      %v1888 = vpop.f32.mrf.mxu0
      %v1889 = vadd.f32 %v1776, %v1888
      %1890 = vmatmul.f32.gmra.mxu0 %v1150
      %v1891 = vpop.f32.mrf.mxu0
      %v1892 = vadd.f32 %v1779, %v1891
      %1893 = vmatmul.f32.gmra.mxu0 %v1159
      %v1894 = vpop.f32.mrf.mxu0
      %v1895 = vadd.f32 %v1782, %v1894
      %1896 = vmatmul.f32.gmra.mxu0 %v1168
      %v1897 = vpop.f32.mrf.mxu0
      %v1898 = vadd.f32 %v1785, %v1897
      %1899 = vmatmul.f32.gmra.mxu0 %v1177
      %v1900 = vpop.f32.mrf.mxu0
      %v1901 = vadd.f32 %v1788, %v1900
      %1902 = vmatmul.f32.gmra.mxu0 %v1186
      %v1903 = vpop.f32.mrf.mxu0
      %v1904 = vadd.f32 %v1791, %v1903
      %1905 = vmatmul.f32.gmra.mxu0 %v1195
      %v1906 = vpop.f32.mrf.mxu0
      %v1907 = vadd.f32 %v1794, %v1906
      %1908 = vdwg.mxu0
      %1909 = vmatpush.msra.mxu0 %v1295
      %1910 = vmatpush.msra.mxu0 %v1294
      %1911 = vmatpush.msra.mxu0 %v1293
      %1912 = vmatpush.msra.mxu0 %v1292
      %1913 = vmatpush.msra.mxu0 %v1291
      %1914 = vmatpush.msra.mxu0 %v1290
      %1915 = vmatpush.msra.mxu0 %v1289
      %1916 = vmatpush.msra.mxu0 %v1288
      %1917 = vmatpush.msra.mxu0 %v1287
      %1918 = vmatpush.msra.mxu0 %v1286
      %1919 = vmatpush.msra.mxu0 %v1285
      %1920 = vmatpush.msra.mxu0 %v1284
      %1921 = vmatpush.msra.mxu0 %v1283
      %1922 = vmatpush.msra.mxu0 %v1282
      %1923 = vmatpush.msra.mxu0 %v1281
      %1924 = vmatpush.msra.mxu0 %v1280
      %1925 = vmatmul.f32.gmra.mxu0 %v917
      %v1926 = vpop.f32.mrf.mxu0
      %v1927 = vadd.f32 %v1814, %v1926
      %1928 = vmatmul.f32.gmra.mxu0 %v926
      %v1929 = vpop.f32.mrf.mxu0
      %v1930 = vadd.f32 %v1817, %v1929
      %1931 = vmatmul.f32.gmra.mxu0 %v935
      %v1932 = vpop.f32.mrf.mxu0
      %v1933 = vadd.f32 %v1820, %v1932
      %1934 = vmatmul.f32.gmra.mxu0 %v944
      %v1935 = vpop.f32.mrf.mxu0
      %v1936 = vadd.f32 %v1823, %v1935
      %1937 = vmatmul.f32.gmra.mxu0 %v953
      %v1938 = vpop.f32.mrf.mxu0
      %v1939 = vadd.f32 %v1826, %v1938
      %1940 = vmatmul.f32.gmra.mxu0 %v962
      %v1941 = vpop.f32.mrf.mxu0
      %v1942 = vadd.f32 %v1829, %v1941
      %1943 = vmatmul.f32.gmra.mxu0 %v971
      %v1944 = vpop.f32.mrf.mxu0
      %v1945 = vadd.f32 %v1832, %v1944
      %1946 = vmatmul.f32.gmra.mxu0 %v980
      %v1947 = vpop.f32.mrf.mxu0
      %v1948 = vadd.f32 %v1835, %v1947
      %1949 = vmatmul.f32.gmra.mxu0 %v989
      %v1950 = vpop.f32.mrf.mxu0
      %v1951 = vadd.f32 %v1838, %v1950
      %1952 = vmatmul.f32.gmra.mxu0 %v998
      %v1953 = vpop.f32.mrf.mxu0
      %v1954 = vadd.f32 %v1841, %v1953
      %1955 = vmatmul.f32.gmra.mxu0 %v1007
      %v1956 = vpop.f32.mrf.mxu0
      %v1957 = vadd.f32 %v1844, %v1956
      %1958 = vmatmul.f32.gmra.mxu0 %v1016
      %v1959 = vpop.f32.mrf.mxu0
      %v1960 = vadd.f32 %v1847, %v1959
      %1961 = vmatmul.f32.gmra.mxu0 %v1025
      %v1962 = vpop.f32.mrf.mxu0
      %v1963 = vadd.f32 %v1850, %v1962
      %1964 = vmatmul.f32.gmra.mxu0 %v1034
      %v1965 = vpop.f32.mrf.mxu0
      %v1966 = vadd.f32 %v1853, %v1965
      %1967 = vmatmul.f32.gmra.mxu0 %v1043
      %v1968 = vpop.f32.mrf.mxu0
      %v1969 = vadd.f32 %v1856, %v1968
      %1970 = vmatmul.f32.gmra.mxu0 %v1052
      %v1971 = vpop.f32.mrf.mxu0
      %v1972 = vadd.f32 %v1859, %v1971
      %1973 = vmatmul.f32.gmra.mxu0 %v1061
      %v1974 = vpop.f32.mrf.mxu0
      %v1975 = vadd.f32 %v1862, %v1974
      %1976 = vmatmul.f32.gmra.mxu0 %v1070
      %v1977 = vpop.f32.mrf.mxu0
      %v1978 = vadd.f32 %v1865, %v1977
      %1979 = vmatmul.f32.gmra.mxu0 %v1079
      %v1980 = vpop.f32.mrf.mxu0
      %v1981 = vadd.f32 %v1868, %v1980
      %1982 = vmatmul.f32.gmra.mxu0 %v1088
      %v1983 = vpop.f32.mrf.mxu0
      %v1984 = vadd.f32 %v1871, %v1983
      %1985 = vmatmul.f32.gmra.mxu0 %v1097
      %v1986 = vpop.f32.mrf.mxu0
      %v1987 = vadd.f32 %v1874, %v1986
      %1988 = vmatmul.f32.gmra.mxu0 %v1106
      %v1989 = vpop.f32.mrf.mxu0
      %v1990 = vadd.f32 %v1877, %v1989
      %1991 = vmatmul.f32.gmra.mxu0 %v1115
      %v1992 = vpop.f32.mrf.mxu0
      %v1993 = vadd.f32 %v1880, %v1992
      %1994 = vmatmul.f32.gmra.mxu0 %v1124
      %v1995 = vpop.f32.mrf.mxu0
      %v1996 = vadd.f32 %v1883, %v1995
      %1997 = vmatmul.f32.gmra.mxu0 %v1133
      %v1998 = vpop.f32.mrf.mxu0
      %v1999 = vadd.f32 %v1886, %v1998
      %2000 = vmatmul.f32.gmra.mxu0 %v1142
      %v2001 = vpop.f32.mrf.mxu0
      %v2002 = vadd.f32 %v1889, %v2001
      %2003 = vmatmul.f32.gmra.mxu0 %v1151
      %v2004 = vpop.f32.mrf.mxu0
      %v2005 = vadd.f32 %v1892, %v2004
      %2006 = vmatmul.f32.gmra.mxu0 %v1160
      %v2007 = vpop.f32.mrf.mxu0
      %v2008 = vadd.f32 %v1895, %v2007
      %2009 = vmatmul.f32.gmra.mxu0 %v1169
      %v2010 = vpop.f32.mrf.mxu0
      %v2011 = vadd.f32 %v1898, %v2010
      %2012 = vmatmul.f32.gmra.mxu0 %v1178
      %v2013 = vpop.f32.mrf.mxu0
      %v2014 = vadd.f32 %v1901, %v2013
      %2015 = vmatmul.f32.gmra.mxu0 %v1187
      %v2016 = vpop.f32.mrf.mxu0
      %v2017 = vadd.f32 %v1904, %v2016
      %2018 = vmatmul.f32.gmra.mxu0 %v1196
      %v2019 = vpop.f32.mrf.mxu0
      %v2020 = vadd.f32 %v1907, %v2019
      %2021 = vdwg.mxu0
      %2022 = vmatpush.msra.mxu0 %v1311
      %2023 = vmatpush.msra.mxu0 %v1310
      %2024 = vmatpush.msra.mxu0 %v1309
      %2025 = vmatpush.msra.mxu0 %v1308
      %2026 = vmatpush.msra.mxu0 %v1307
      %2027 = vmatpush.msra.mxu0 %v1306
      %2028 = vmatpush.msra.mxu0 %v1305
      %2029 = vmatpush.msra.mxu0 %v1304
      %2030 = vmatpush.msra.mxu0 %v1303
      %2031 = vmatpush.msra.mxu0 %v1302
      %2032 = vmatpush.msra.mxu0 %v1301
      %2033 = vmatpush.msra.mxu0 %v1300
      %2034 = vmatpush.msra.mxu0 %v1299
      %2035 = vmatpush.msra.mxu0 %v1298
      %2036 = vmatpush.msra.mxu0 %v1297
      %2037 = vmatpush.msra.mxu0 %v1296
      %2038 = vmatmul.f32.gmra.mxu0 %v918
      %v2039 = vpop.f32.mrf.mxu0
      %v2040 = vadd.f32 %v1927, %v2039
      %2041 = vmatmul.f32.gmra.mxu0 %v927
      %v2042 = vpop.f32.mrf.mxu0
      %v2043 = vadd.f32 %v1930, %v2042
      %2044 = vmatmul.f32.gmra.mxu0 %v936
      %v2045 = vpop.f32.mrf.mxu0
      %v2046 = vadd.f32 %v1933, %v2045
      %2047 = vmatmul.f32.gmra.mxu0 %v945
      %v2048 = vpop.f32.mrf.mxu0
      %v2049 = vadd.f32 %v1936, %v2048
      %2050 = vmatmul.f32.gmra.mxu0 %v954
      %v2051 = vpop.f32.mrf.mxu0
      %v2052 = vadd.f32 %v1939, %v2051
      %2053 = vmatmul.f32.gmra.mxu0 %v963
      %v2054 = vpop.f32.mrf.mxu0
      %v2055 = vadd.f32 %v1942, %v2054
      %2056 = vmatmul.f32.gmra.mxu0 %v972
      %v2057 = vpop.f32.mrf.mxu0
      %v2058 = vadd.f32 %v1945, %v2057
      %2059 = vmatmul.f32.gmra.mxu0 %v981
      %v2060 = vpop.f32.mrf.mxu0
      %v2061 = vadd.f32 %v1948, %v2060
      %2062 = vmatmul.f32.gmra.mxu0 %v990
      %v2063 = vpop.f32.mrf.mxu0
      %v2064 = vadd.f32 %v1951, %v2063
      %2065 = vmatmul.f32.gmra.mxu0 %v999
      %v2066 = vpop.f32.mrf.mxu0
      %v2067 = vadd.f32 %v1954, %v2066
      %2068 = vmatmul.f32.gmra.mxu0 %v1008
      %v2069 = vpop.f32.mrf.mxu0
      %v2070 = vadd.f32 %v1957, %v2069
      %2071 = vmatmul.f32.gmra.mxu0 %v1017
      %v2072 = vpop.f32.mrf.mxu0
      %v2073 = vadd.f32 %v1960, %v2072
      %2074 = vmatmul.f32.gmra.mxu0 %v1026
      %v2075 = vpop.f32.mrf.mxu0
      %v2076 = vadd.f32 %v1963, %v2075
      %2077 = vmatmul.f32.gmra.mxu0 %v1035
      %v2078 = vpop.f32.mrf.mxu0
      %v2079 = vadd.f32 %v1966, %v2078
      %2080 = vmatmul.f32.gmra.mxu0 %v1044
      %v2081 = vpop.f32.mrf.mxu0
      %v2082 = vadd.f32 %v1969, %v2081
      %2083 = vmatmul.f32.gmra.mxu0 %v1053
      %v2084 = vpop.f32.mrf.mxu0
      %v2085 = vadd.f32 %v1972, %v2084
      %2086 = vmatmul.f32.gmra.mxu0 %v1062
      %v2087 = vpop.f32.mrf.mxu0
      %v2088 = vadd.f32 %v1975, %v2087
      %2089 = vmatmul.f32.gmra.mxu0 %v1071
      %v2090 = vpop.f32.mrf.mxu0
      %v2091 = vadd.f32 %v1978, %v2090
      %2092 = vmatmul.f32.gmra.mxu0 %v1080
      %v2093 = vpop.f32.mrf.mxu0
      %v2094 = vadd.f32 %v1981, %v2093
      %2095 = vmatmul.f32.gmra.mxu0 %v1089
      %v2096 = vpop.f32.mrf.mxu0
      %v2097 = vadd.f32 %v1984, %v2096
      %2098 = vmatmul.f32.gmra.mxu0 %v1098
      %v2099 = vpop.f32.mrf.mxu0
      %v2100 = vadd.f32 %v1987, %v2099
      %2101 = vmatmul.f32.gmra.mxu0 %v1107
      %v2102 = vpop.f32.mrf.mxu0
      %v2103 = vadd.f32 %v1990, %v2102
      %2104 = vmatmul.f32.gmra.mxu0 %v1116
      %v2105 = vpop.f32.mrf.mxu0
      %v2106 = vadd.f32 %v1993, %v2105
      %2107 = vmatmul.f32.gmra.mxu0 %v1125
      %v2108 = vpop.f32.mrf.mxu0
      %v2109 = vadd.f32 %v1996, %v2108
      %2110 = vmatmul.f32.gmra.mxu0 %v1134
      %v2111 = vpop.f32.mrf.mxu0
      %v2112 = vadd.f32 %v1999, %v2111
      %2113 = vmatmul.f32.gmra.mxu0 %v1143
      %v2114 = vpop.f32.mrf.mxu0
      %v2115 = vadd.f32 %v2002, %v2114
      %2116 = vmatmul.f32.gmra.mxu0 %v1152
      %v2117 = vpop.f32.mrf.mxu0
      %v2118 = vadd.f32 %v2005, %v2117
      %2119 = vmatmul.f32.gmra.mxu0 %v1161
      %v2120 = vpop.f32.mrf.mxu0
      %v2121 = vadd.f32 %v2008, %v2120
      %2122 = vmatmul.f32.gmra.mxu0 %v1170
      %v2123 = vpop.f32.mrf.mxu0
      %v2124 = vadd.f32 %v2011, %v2123
      %2125 = vmatmul.f32.gmra.mxu0 %v1179
      %v2126 = vpop.f32.mrf.mxu0
      %v2127 = vadd.f32 %v2014, %v2126
      %2128 = vmatmul.f32.gmra.mxu0 %v1188
      %v2129 = vpop.f32.mrf.mxu0
      %v2130 = vadd.f32 %v2017, %v2129
      %2131 = vmatmul.f32.gmra.mxu0 %v1197
      %v2132 = vpop.f32.mrf.mxu0
      %v2133 = vadd.f32 %v2020, %v2132
      %2134 = vdwg.mxu0
      %2135 = vmatpush.msra.mxu0 %v1327
      %2136 = vmatpush.msra.mxu0 %v1326
      %2137 = vmatpush.msra.mxu0 %v1325
      %2138 = vmatpush.msra.mxu0 %v1324
      %2139 = vmatpush.msra.mxu0 %v1323
      %2140 = vmatpush.msra.mxu0 %v1322
      %2141 = vmatpush.msra.mxu0 %v1321
      %2142 = vmatpush.msra.mxu0 %v1320
      %2143 = vmatpush.msra.mxu0 %v1319
      %2144 = vmatpush.msra.mxu0 %v1318
      %2145 = vmatpush.msra.mxu0 %v1317
      %2146 = vmatpush.msra.mxu0 %v1316
      %2147 = vmatpush.msra.mxu0 %v1315
      %2148 = vmatpush.msra.mxu0 %v1314
      %2149 = vmatpush.msra.mxu0 %v1313
      %2150 = vmatpush.msra.mxu0 %v1312
      %2151 = vmatmul.f32.gmra.mxu0 %v919
      %v2152 = vpop.f32.mrf.mxu0
      %v2153 = vadd.f32 %v2040, %v2152
      %2154 = vmatmul.f32.gmra.mxu0 %v928
      %v2155 = vpop.f32.mrf.mxu0
      %v2156 = vadd.f32 %v2043, %v2155
      %2157 = vmatmul.f32.gmra.mxu0 %v937
      %v2158 = vpop.f32.mrf.mxu0
      %v2159 = vadd.f32 %v2046, %v2158
      %2160 = vmatmul.f32.gmra.mxu0 %v946
      %v2161 = vpop.f32.mrf.mxu0
      %v2162 = vadd.f32 %v2049, %v2161
      %2163 = vmatmul.f32.gmra.mxu0 %v955
      %v2164 = vpop.f32.mrf.mxu0
      %v2165 = vadd.f32 %v2052, %v2164
      %2166 = vmatmul.f32.gmra.mxu0 %v964
      %v2167 = vpop.f32.mrf.mxu0
      %v2168 = vadd.f32 %v2055, %v2167
      %2169 = vmatmul.f32.gmra.mxu0 %v973
      %v2170 = vpop.f32.mrf.mxu0
      %v2171 = vadd.f32 %v2058, %v2170
      %2172 = vmatmul.f32.gmra.mxu0 %v982
      %v2173 = vpop.f32.mrf.mxu0
      %v2174 = vadd.f32 %v2061, %v2173
      %2175 = vmatmul.f32.gmra.mxu0 %v991
      %v2176 = vpop.f32.mrf.mxu0
      %v2177 = vadd.f32 %v2064, %v2176
      %2178 = vmatmul.f32.gmra.mxu0 %v1000
      %v2179 = vpop.f32.mrf.mxu0
      %v2180 = vadd.f32 %v2067, %v2179
      %2181 = vmatmul.f32.gmra.mxu0 %v1009
      %v2182 = vpop.f32.mrf.mxu0
      %v2183 = vadd.f32 %v2070, %v2182
      %2184 = vmatmul.f32.gmra.mxu0 %v1018
      %v2185 = vpop.f32.mrf.mxu0
      %v2186 = vadd.f32 %v2073, %v2185
      %2187 = vmatmul.f32.gmra.mxu0 %v1027
      %v2188 = vpop.f32.mrf.mxu0
      %v2189 = vadd.f32 %v2076, %v2188
      %2190 = vmatmul.f32.gmra.mxu0 %v1036
      %v2191 = vpop.f32.mrf.mxu0
      %v2192 = vadd.f32 %v2079, %v2191
      %2193 = vmatmul.f32.gmra.mxu0 %v1045
      %v2194 = vpop.f32.mrf.mxu0
      %v2195 = vadd.f32 %v2082, %v2194
      %2196 = vmatmul.f32.gmra.mxu0 %v1054
      %v2197 = vpop.f32.mrf.mxu0
      %v2198 = vadd.f32 %v2085, %v2197
      %2199 = vmatmul.f32.gmra.mxu0 %v1063
      %v2200 = vpop.f32.mrf.mxu0
      %v2201 = vadd.f32 %v2088, %v2200
      %2202 = vmatmul.f32.gmra.mxu0 %v1072
      %v2203 = vpop.f32.mrf.mxu0
      %v2204 = vadd.f32 %v2091, %v2203
      %2205 = vmatmul.f32.gmra.mxu0 %v1081
      %v2206 = vpop.f32.mrf.mxu0
      %v2207 = vadd.f32 %v2094, %v2206
      %2208 = vmatmul.f32.gmra.mxu0 %v1090
      %v2209 = vpop.f32.mrf.mxu0
      %v2210 = vadd.f32 %v2097, %v2209
      %2211 = vmatmul.f32.gmra.mxu0 %v1099
      %v2212 = vpop.f32.mrf.mxu0
      %v2213 = vadd.f32 %v2100, %v2212
      %2214 = vmatmul.f32.gmra.mxu0 %v1108
      %v2215 = vpop.f32.mrf.mxu0
      %v2216 = vadd.f32 %v2103, %v2215
      %2217 = vmatmul.f32.gmra.mxu0 %v1117
      %v2218 = vpop.f32.mrf.mxu0
      %v2219 = vadd.f32 %v2106, %v2218
      %2220 = vmatmul.f32.gmra.mxu0 %v1126
      %v2221 = vpop.f32.mrf.mxu0
      %v2222 = vadd.f32 %v2109, %v2221
      %2223 = vmatmul.f32.gmra.mxu0 %v1135
      %v2224 = vpop.f32.mrf.mxu0
      %v2225 = vadd.f32 %v2112, %v2224
      %2226 = vmatmul.f32.gmra.mxu0 %v1144
      %v2227 = vpop.f32.mrf.mxu0
      %v2228 = vadd.f32 %v2115, %v2227
      %2229 = vmatmul.f32.gmra.mxu0 %v1153
      %v2230 = vpop.f32.mrf.mxu0
      %v2231 = vadd.f32 %v2118, %v2230
      %2232 = vmatmul.f32.gmra.mxu0 %v1162
      %v2233 = vpop.f32.mrf.mxu0
      %v2234 = vadd.f32 %v2121, %v2233
      %2235 = vmatmul.f32.gmra.mxu0 %v1171
      %v2236 = vpop.f32.mrf.mxu0
      %v2237 = vadd.f32 %v2124, %v2236
      %2238 = vmatmul.f32.gmra.mxu0 %v1180
      %v2239 = vpop.f32.mrf.mxu0
      %v2240 = vadd.f32 %v2127, %v2239
      %2241 = vmatmul.f32.gmra.mxu0 %v1189
      %v2242 = vpop.f32.mrf.mxu0
      %v2243 = vadd.f32 %v2130, %v2242
      %2244 = vmatmul.f32.gmra.mxu0 %v1198
      %v2245 = vpop.f32.mrf.mxu0
      %v2246 = vadd.f32 %v2133, %v2245
      %2247 = vdwg.mxu0
      %2248 = vmatpush.msra.mxu0 %v1343
      %2249 = vmatpush.msra.mxu0 %v1342
      %2250 = vmatpush.msra.mxu0 %v1341
      %2251 = vmatpush.msra.mxu0 %v1340
      %2252 = vmatpush.msra.mxu0 %v1339
      %2253 = vmatpush.msra.mxu0 %v1338
      %2254 = vmatpush.msra.mxu0 %v1337
      %2255 = vmatpush.msra.mxu0 %v1336
      %2256 = vmatpush.msra.mxu0 %v1335
      %2257 = vmatpush.msra.mxu0 %v1334
      %2258 = vmatpush.msra.mxu0 %v1333
      %2259 = vmatpush.msra.mxu0 %v1332
      %2260 = vmatpush.msra.mxu0 %v1331
      %2261 = vmatpush.msra.mxu0 %v1330
      %2262 = vmatpush.msra.mxu0 %v1329
      %2263 = vmatpush.msra.mxu0 %v1328
      %2264 = vmatmul.f32.gmra.mxu0 %v920
      %v2265 = vpop.f32.mrf.mxu0
      %v2266 = vadd.f32 %v2153, %v2265
      %2267 = vmatmul.f32.gmra.mxu0 %v929
      %v2268 = vpop.f32.mrf.mxu0
      %v2269 = vadd.f32 %v2156, %v2268
      %2270 = vmatmul.f32.gmra.mxu0 %v938
      %v2271 = vpop.f32.mrf.mxu0
      %v2272 = vadd.f32 %v2159, %v2271
      %2273 = vmatmul.f32.gmra.mxu0 %v947
      %v2274 = vpop.f32.mrf.mxu0
      %v2275 = vadd.f32 %v2162, %v2274
      %2276 = vmatmul.f32.gmra.mxu0 %v956
      %v2277 = vpop.f32.mrf.mxu0
      %v2278 = vadd.f32 %v2165, %v2277
      %2279 = vmatmul.f32.gmra.mxu0 %v965
      %v2280 = vpop.f32.mrf.mxu0
      %v2281 = vadd.f32 %v2168, %v2280
      %2282 = vmatmul.f32.gmra.mxu0 %v974
      %v2283 = vpop.f32.mrf.mxu0
      %v2284 = vadd.f32 %v2171, %v2283
      %2285 = vmatmul.f32.gmra.mxu0 %v983
      %v2286 = vpop.f32.mrf.mxu0
      %v2287 = vadd.f32 %v2174, %v2286
      %2288 = vmatmul.f32.gmra.mxu0 %v992
      %v2289 = vpop.f32.mrf.mxu0
      %v2290 = vadd.f32 %v2177, %v2289
      %2291 = vmatmul.f32.gmra.mxu0 %v1001
      %v2292 = vpop.f32.mrf.mxu0
      %v2293 = vadd.f32 %v2180, %v2292
      %2294 = vmatmul.f32.gmra.mxu0 %v1010
      %v2295 = vpop.f32.mrf.mxu0
      %v2296 = vadd.f32 %v2183, %v2295
      %2297 = vmatmul.f32.gmra.mxu0 %v1019
      %v2298 = vpop.f32.mrf.mxu0
      %v2299 = vadd.f32 %v2186, %v2298
      %2300 = vmatmul.f32.gmra.mxu0 %v1028
      %v2301 = vpop.f32.mrf.mxu0
      %v2302 = vadd.f32 %v2189, %v2301
      %2303 = vmatmul.f32.gmra.mxu0 %v1037
      %v2304 = vpop.f32.mrf.mxu0
      %v2305 = vadd.f32 %v2192, %v2304
      %2306 = vmatmul.f32.gmra.mxu0 %v1046
      %v2307 = vpop.f32.mrf.mxu0
      %v2308 = vadd.f32 %v2195, %v2307
      %2309 = vmatmul.f32.gmra.mxu0 %v1055
      %v2310 = vpop.f32.mrf.mxu0
      %v2311 = vadd.f32 %v2198, %v2310
      %2312 = vmatmul.f32.gmra.mxu0 %v1064
      %v2313 = vpop.f32.mrf.mxu0
      %v2314 = vadd.f32 %v2201, %v2313
      %2315 = vmatmul.f32.gmra.mxu0 %v1073
      %v2316 = vpop.f32.mrf.mxu0
      %v2317 = vadd.f32 %v2204, %v2316
      %2318 = vmatmul.f32.gmra.mxu0 %v1082
      %v2319 = vpop.f32.mrf.mxu0
      %v2320 = vadd.f32 %v2207, %v2319
      %2321 = vmatmul.f32.gmra.mxu0 %v1091
      %v2322 = vpop.f32.mrf.mxu0
      %v2323 = vadd.f32 %v2210, %v2322
      %2324 = vmatmul.f32.gmra.mxu0 %v1100
      %v2325 = vpop.f32.mrf.mxu0
      %v2326 = vadd.f32 %v2213, %v2325
      %2327 = vmatmul.f32.gmra.mxu0 %v1109
      %v2328 = vpop.f32.mrf.mxu0
      %v2329 = vadd.f32 %v2216, %v2328
      %2330 = vmatmul.f32.gmra.mxu0 %v1118
      %v2331 = vpop.f32.mrf.mxu0
      %v2332 = vadd.f32 %v2219, %v2331
      %2333 = vmatmul.f32.gmra.mxu0 %v1127
      %v2334 = vpop.f32.mrf.mxu0
      %v2335 = vadd.f32 %v2222, %v2334
      %2336 = vmatmul.f32.gmra.mxu0 %v1136
      %v2337 = vpop.f32.mrf.mxu0
      %v2338 = vadd.f32 %v2225, %v2337
      %2339 = vmatmul.f32.gmra.mxu0 %v1145
      %v2340 = vpop.f32.mrf.mxu0
      %v2341 = vadd.f32 %v2228, %v2340
      %2342 = vmatmul.f32.gmra.mxu0 %v1154
      %v2343 = vpop.f32.mrf.mxu0
      %v2344 = vadd.f32 %v2231, %v2343
      %2345 = vmatmul.f32.gmra.mxu0 %v1163
      %v2346 = vpop.f32.mrf.mxu0
      %v2347 = vadd.f32 %v2234, %v2346
      %2348 = vmatmul.f32.gmra.mxu0 %v1172
      %v2349 = vpop.f32.mrf.mxu0
      %v2350 = vadd.f32 %v2237, %v2349
      %2351 = vmatmul.f32.gmra.mxu0 %v1181
      %v2352 = vpop.f32.mrf.mxu0
      %v2353 = vadd.f32 %v2240, %v2352
      %2354 = vmatmul.f32.gmra.mxu0 %v1190
      %v2355 = vpop.f32.mrf.mxu0
      %v2356 = vadd.f32 %v2243, %v2355
      %2357 = vmatmul.f32.gmra.mxu0 %v1199
      %v2358 = vpop.f32.mrf.mxu0
      %v2359 = vadd.f32 %v2246, %v2358
      %2360 = vdwg.mxu0
      %v2361 = vmax.f32 %v2266, 0.0
      %v2362 = vmax.f32 %v2269, 0.0
      %v2363 = vmax.f32 %v2272, 0.0
      %v2364 = vmax.f32 %v2275, 0.0
      %v2365 = vmax.f32 %v2278, 0.0
      %v2366 = vmax.f32 %v2281, 0.0
      %v2367 = vmax.f32 %v2284, 0.0
      %v2368 = vmax.f32 %v2287, 0.0
      %v2369 = vmax.f32 %v2290, 0.0
      %v2370 = vmax.f32 %v2293, 0.0
      %v2371 = vmax.f32 %v2296, 0.0
      %v2372 = vmax.f32 %v2299, 0.0
      %v2373 = vmax.f32 %v2302, 0.0
      %v2374 = vmax.f32 %v2305, 0.0
      %v2375 = vmax.f32 %v2308, 0.0
      %v2376 = vmax.f32 %v2311, 0.0
      %v2377 = vmax.f32 %v2314, 0.0
      %v2378 = vmax.f32 %v2317, 0.0
      %v2379 = vmax.f32 %v2320, 0.0
      %v2380 = vmax.f32 %v2323, 0.0
      %v2381 = vmax.f32 %v2326, 0.0
      %v2382 = vmax.f32 %v2329, 0.0
      %v2383 = vmax.f32 %v2332, 0.0
      %v2384 = vmax.f32 %v2335, 0.0
      %v2385 = vmax.f32 %v2338, 0.0
      %v2386 = vmax.f32 %v2341, 0.0
      %v2387 = vmax.f32 %v2344, 0.0
      %v2388 = vmax.f32 %v2347, 0.0
      %v2389 = vmax.f32 %v2350, 0.0
      %v2390 = vmax.f32 %v2353, 0.0
      %v2391 = vmax.f32 %v2356, 0.0
      %v2392 = vmax.f32 %v2359, 0.0
      %2393 = vst [vmem:[#allocation3] sm:$0xff] 0.0
      %2394 = vst [vmem:[#allocation3 + $0x8] sm:$0xff] 0.0
      %2395 = vst [vmem:[#allocation3 + $0x10] sm:$0xff] 0.0
      %2396 = vst [vmem:[#allocation3 + $0x18] sm:$0x1] 0.0
      %2397 = vst [vmem:[#allocation3 + $0x20] sm:$0xff] 0.0
      %2398 = vst [vmem:[#allocation3 + $0x28] sm:$0xff] 0.0
      %2399 = vst [vmem:[#allocation3 + $0x30] sm:$0xff] 0.0
      %2400 = vst [vmem:[#allocation3 + $0x38] sm:$0x1] 0.0
      %2401 = vst [vmem:[#allocation3 + $0x40] sm:$0xff] 0.0
      %2402 = vst [vmem:[#allocation3 + $0x48] sm:$0xff] 0.0
      %2403 = vst [vmem:[#allocation3 + $0x50] sm:$0xff] 0.0
      %2404 = vst [vmem:[#allocation3 + $0x58] sm:$0x1] 0.0
      %2405 = vst [vmem:[#allocation3 + $0x60] sm:$0xff] 0.0
      %2406 = vst [vmem:[#allocation3 + $0x68] sm:$0xff] 0.0
      %2407 = vst [vmem:[#allocation3 + $0x70] sm:$0xff] 0.0
      %2408 = vst [vmem:[#allocation3 + $0x78] sm:$0x1] 0.0
      %2409 = vst [vmem:[#allocation3 + $0x80] sm:$0xff] 0.0
      %2410 = vst [vmem:[#allocation3 + $0x88] sm:$0xff] 0.0
      %2411 = vst [vmem:[#allocation3 + $0x90] sm:$0xff] 0.0
      %2412 = vst [vmem:[#allocation3 + $0x98] sm:$0x1] 0.0
      %2413 = vst [vmem:[#allocation3 + $0xa0] sm:$0xff] 0.0
      %2414 = vst [vmem:[#allocation3 + $0xa8] sm:$0xff] 0.0
      %2415 = vst [vmem:[#allocation3 + $0xb0] sm:$0xff] 0.0
      %2416 = vst [vmem:[#allocation3 + $0xb8] sm:$0x1] 0.0
      %2417 = vst [vmem:[#allocation3 + $0xc0] sm:$0xff] 0.0
      %2418 = vst [vmem:[#allocation3 + $0xc8] sm:$0xff] 0.0
      %2419 = vst [vmem:[#allocation3 + $0xd0] sm:$0xff] 0.0
      %2420 = vst [vmem:[#allocation3 + $0xd8] sm:$0x1] 0.0
      %2421 = vst [vmem:[#allocation3 + $0xe0] sm:$0xff] 0.0
      %2422 = vst [vmem:[#allocation3 + $0xe8] sm:$0xff] 0.0
      %2423 = vst [vmem:[#allocation3 + $0xf0] sm:$0xff] 0.0
      %2424 = vst [vmem:[#allocation3 + $0xf8] sm:$0x1] 0.0
      %2425 = vst [vmem:[#allocation3 + $0x100] sm:$0xff] 0.0
      %2426 = vst [vmem:[#allocation3 + $0x108] sm:$0xff] 0.0
      %2427 = vst [vmem:[#allocation3 + $0x110] sm:$0xff] 0.0
      %2428 = vst [vmem:[#allocation3 + $0x118] sm:$0x1] 0.0
      %2429 = vst [vmem:[#allocation3 + $0x120] sm:$0xff] 0.0
      %2430 = vst [vmem:[#allocation3 + $0x128] sm:$0xff] 0.0
      %2431 = vst [vmem:[#allocation3 + $0x130] sm:$0xff] 0.0
      %2432 = vst [vmem:[#allocation3 + $0x138] sm:$0x1] 0.0
      %2433 = vst [vmem:[#allocation3 + $0x140] sm:$0xff] 0.0
      %2434 = vst [vmem:[#allocation3 + $0x148] sm:$0xff] 0.0
      %2435 = vst [vmem:[#allocation3 + $0x150] sm:$0xff] 0.0
      %2436 = vst [vmem:[#allocation3 + $0x158] sm:$0x1] 0.0
      %2437 = vst [vmem:[#allocation3 + $0x160] sm:$0xff] 0.0
      %2438 = vst [vmem:[#allocation3 + $0x168] sm:$0xff] 0.0
      %2439 = vst [vmem:[#allocation3 + $0x170] sm:$0xff] 0.0
      %2440 = vst [vmem:[#allocation3 + $0x178] sm:$0x1] 0.0
      %2441 = vst [vmem:[#allocation3 + $0x180] sm:$0xff] 0.0
      %2442 = vst [vmem:[#allocation3 + $0x188] sm:$0xff] 0.0
      %2443 = vst [vmem:[#allocation3 + $0x190] sm:$0xff] 0.0
      %2444 = vst [vmem:[#allocation3 + $0x198] sm:$0x1] 0.0
      %2445 = vst [vmem:[#allocation3 + $0x1a0] sm:$0xff] 0.0
      %2446 = vst [vmem:[#allocation3 + $0x1a8] sm:$0xff] 0.0
      %2447 = vst [vmem:[#allocation3 + $0x1b0] sm:$0xff] 0.0
      %2448 = vst [vmem:[#allocation3 + $0x1b8] sm:$0x1] 0.0
      %2449 = vst [vmem:[#allocation3 + $0x1c0] sm:$0xff] 0.0
      %2450 = vst [vmem:[#allocation3 + $0x1c8] sm:$0xff] 0.0
      %2451 = vst [vmem:[#allocation3 + $0x1d0] sm:$0xff] 0.0
      %2452 = vst [vmem:[#allocation3 + $0x1d8] sm:$0x1] 0.0
      %2453 = vst [vmem:[#allocation3 + $0x1e0] sm:$0xff] 0.0
      %2454 = vst [vmem:[#allocation3 + $0x1e8] sm:$0xff] 0.0
      %2455 = vst [vmem:[#allocation3 + $0x1f0] sm:$0xff] 0.0
      %2456 = vst [vmem:[#allocation3 + $0x1f8] sm:$0x1] 0.0
      %2457 = vst [vmem:[#allocation3 + $0x200] sm:$0xff] 0.0
      %2458 = vst [vmem:[#allocation3 + $0x208] sm:$0xff] 0.0
      %2459 = vst [vmem:[#allocation3 + $0x210] sm:$0xff] 0.0
      %2460 = vst [vmem:[#allocation3 + $0x218] sm:$0x1] 0.0
      %2461 = vst [vmem:[#allocation3 + $0x220] sm:$0xff] 0.0
      %2462 = vst [vmem:[#allocation3 + $0x228] sm:$0xff] 0.0
      %2463 = vst [vmem:[#allocation3 + $0x230] sm:$0xff] 0.0
      %2464 = vst [vmem:[#allocation3 + $0x238] sm:$0x1] 0.0
      %s2465 = scalar_lea.vmem [#allocation3], 32
      %2466 = vst [vmem:[%s2465 + $0x8] sm:$0xff] %v2361
      %2467 = vst [vmem:[%s2465 + $0x10] sm:$0xff] %v2362
      %2468 = vst [vmem:[%s2465 + $0x28] sm:$0xff] %v2363
      %2469 = vst [vmem:[%s2465 + $0x30] sm:$0xff] %v2364
      %2470 = vst [vmem:[%s2465 + $0x48] sm:$0xff] %v2365
      %2471 = vst [vmem:[%s2465 + $0x50] sm:$0xff] %v2366
      %2472 = vst [vmem:[%s2465 + $0x68] sm:$0xff] %v2367
      %2473 = vst [vmem:[%s2465 + $0x70] sm:$0xff] %v2368
      %2474 = vst [vmem:[%s2465 + $0x88] sm:$0xff] %v2369
      %2475 = vst [vmem:[%s2465 + $0x90] sm:$0xff] %v2370
      %2476 = vst [vmem:[%s2465 + $0xa8] sm:$0xff] %v2371
      %2477 = vst [vmem:[%s2465 + $0xb0] sm:$0xff] %v2372
      %2478 = vst [vmem:[%s2465 + $0xc8] sm:$0xff] %v2373
      %2479 = vst [vmem:[%s2465 + $0xd0] sm:$0xff] %v2374
      %2480 = vst [vmem:[%s2465 + $0xe8] sm:$0xff] %v2375
      %2481 = vst [vmem:[%s2465 + $0xf0] sm:$0xff] %v2376
      %2482 = vst [vmem:[%s2465 + $0x108] sm:$0xff] %v2377
      %2483 = vst [vmem:[%s2465 + $0x110] sm:$0xff] %v2378
      %2484 = vst [vmem:[%s2465 + $0x128] sm:$0xff] %v2379
      %2485 = vst [vmem:[%s2465 + $0x130] sm:$0xff] %v2380
      %2486 = vst [vmem:[%s2465 + $0x148] sm:$0xff] %v2381
      %2487 = vst [vmem:[%s2465 + $0x150] sm:$0xff] %v2382
      %2488 = vst [vmem:[%s2465 + $0x168] sm:$0xff] %v2383
      %2489 = vst [vmem:[%s2465 + $0x170] sm:$0xff] %v2384
      %2490 = vst [vmem:[%s2465 + $0x188] sm:$0xff] %v2385
      %2491 = vst [vmem:[%s2465 + $0x190] sm:$0xff] %v2386
      %2492 = vst [vmem:[%s2465 + $0x1a8] sm:$0xff] %v2387
      %2493 = vst [vmem:[%s2465 + $0x1b0] sm:$0xff] %v2388
      %2494 = vst [vmem:[%s2465 + $0x1c8] sm:$0xff] %v2389
      %2495 = vst [vmem:[%s2465 + $0x1d0] sm:$0xff] %v2390
      %2496 = vst [vmem:[%s2465 + $0x1e8] sm:$0xff] %v2391
      %2497 = vst [vmem:[%s2465 + $0x1f0] sm:$0xff] %v2392
      %v2498 = vld [vmem:[#allocation3 + $0x7] sm:$0xff]
      %v2499 = vld [vmem:[#allocation3 + $0xf] sm:$0xff]
      %v2500 = vld [vmem:[#allocation3 + $0x27] sm:$0xff]
      %v2501 = vld [vmem:[#allocation3 + $0x2f] sm:$0xff]
      %v2502 = vld [vmem:[#allocation3 + $0x47] sm:$0xff]
      %v2503 = vld [vmem:[#allocation3 + $0x4f] sm:$0xff]
      %v2504 = vld [vmem:[#allocation3 + $0x67] sm:$0xff]
      %v2505 = vld [vmem:[#allocation3 + $0x6f] sm:$0xff]
      %v2506 = vld [vmem:[#allocation3 + $0x87] sm:$0xff]
      %v2507 = vld [vmem:[#allocation3 + $0x8f] sm:$0xff]
      %v2508 = vld [vmem:[#allocation3 + $0xa7] sm:$0xff]
      %v2509 = vld [vmem:[#allocation3 + $0xaf] sm:$0xff]
      %v2510 = vld [vmem:[#allocation3 + $0xc7] sm:$0xff]
      %v2511 = vld [vmem:[#allocation3 + $0xcf] sm:$0xff]
      %v2512 = vld [vmem:[#allocation3 + $0xe7] sm:$0xff]
      %v2513 = vld [vmem:[#allocation3 + $0xef] sm:$0xff]
      %v2514 = vld [vmem:[#allocation3 + $0x107] sm:$0xff]
      %v2515 = vld [vmem:[#allocation3 + $0x10f] sm:$0xff]
      %v2516 = vld [vmem:[#allocation3 + $0x127] sm:$0xff]
      %v2517 = vld [vmem:[#allocation3 + $0x12f] sm:$0xff]
      %v2518 = vld [vmem:[#allocation3 + $0x147] sm:$0xff]
      %v2519 = vld [vmem:[#allocation3 + $0x14f] sm:$0xff]
      %v2520 = vld [vmem:[#allocation3 + $0x167] sm:$0xff]
      %v2521 = vld [vmem:[#allocation3 + $0x16f] sm:$0xff]
      %v2522 = vld [vmem:[#allocation3 + $0x187] sm:$0xff]
      %v2523 = vld [vmem:[#allocation3 + $0x18f] sm:$0xff]
      %v2524 = vld [vmem:[#allocation3 + $0x1a7] sm:$0xff]
      %v2525 = vld [vmem:[#allocation3 + $0x1af] sm:$0xff]
      %v2526 = vld [vmem:[#allocation3 + $0x1c7] sm:$0xff]
      %v2527 = vld [vmem:[#allocation3 + $0x1cf] sm:$0xff]
      %v2528 = vld [vmem:[#allocation3 + $0x1e7] sm:$0xff]
      %v2529 = vld [vmem:[#allocation3 + $0x1ef] sm:$0xff]
      %2530 = vst [vmem:[#allocation5] sm:$0xff] %v2498
      %2531 = vst [vmem:[#allocation5 + $0x48] sm:$0xff] %v2499
      %2532 = vst [vmem:[#allocation5 + $0x90] sm:$0xff] %v2500
      %2533 = vst [vmem:[#allocation5 + $0xd8] sm:$0xff] %v2501
      %2534 = vst [vmem:[#allocation5 + $0x120] sm:$0xff] %v2502
      %2535 = vst [vmem:[#allocation5 + $0x168] sm:$0xff] %v2503
      %2536 = vst [vmem:[#allocation5 + $0x1b0] sm:$0xff] %v2504
      %2537 = vst [vmem:[#allocation5 + $0x1f8] sm:$0xff] %v2505
      %2538 = vst [vmem:[#allocation5 + $0x240] sm:$0xff] %v2506
      %2539 = vst [vmem:[#allocation5 + $0x288] sm:$0xff] %v2507
      %2540 = vst [vmem:[#allocation5 + $0x2d0] sm:$0xff] %v2508
      %2541 = vst [vmem:[#allocation5 + $0x318] sm:$0xff] %v2509
      %2542 = vst [vmem:[#allocation5 + $0x360] sm:$0xff] %v2510
      %2543 = vst [vmem:[#allocation5 + $0x3a8] sm:$0xff] %v2511
      %2544 = vst [vmem:[#allocation5 + $0x3f0] sm:$0xff] %v2512
      %2545 = vst [vmem:[#allocation5 + $0x438] sm:$0xff] %v2513
      %2546 = vst [vmem:[#allocation5 + $0x480] sm:$0xff] %v2514
      %2547 = vst [vmem:[#allocation5 + $0x4c8] sm:$0xff] %v2515
      %2548 = vst [vmem:[#allocation5 + $0x510] sm:$0xff] %v2516
      %2549 = vst [vmem:[#allocation5 + $0x558] sm:$0xff] %v2517
      %2550 = vst [vmem:[#allocation5 + $0x5a0] sm:$0xff] %v2518
      %2551 = vst [vmem:[#allocation5 + $0x5e8] sm:$0xff] %v2519
      %2552 = vst [vmem:[#allocation5 + $0x630] sm:$0xff] %v2520
      %2553 = vst [vmem:[#allocation5 + $0x678] sm:$0xff] %v2521
      %2554 = vst [vmem:[#allocation5 + $0x6c0] sm:$0xff] %v2522
      %2555 = vst [vmem:[#allocation5 + $0x708] sm:$0xff] %v2523
      %2556 = vst [vmem:[#allocation5 + $0x750] sm:$0xff] %v2524
      %2557 = vst [vmem:[#allocation5 + $0x798] sm:$0xff] %v2525
      %2558 = vst [vmem:[#allocation5 + $0x7e0] sm:$0xff] %v2526
      %2559 = vst [vmem:[#allocation5 + $0x828] sm:$0xff] %v2527
      %2560 = vst [vmem:[#allocation5 + $0x870] sm:$0xff] %v2528
      %2561 = vst [vmem:[#allocation5 + $0x8b8] sm:$0xff] %v2529
      %v2562 = vld [vmem:[#allocation3 + $0x8] sm:$0xff]
      %v2563 = vld [vmem:[#allocation3 + $0x10] sm:$0xff]
      %v2564 = vld [vmem:[#allocation3 + $0x28] sm:$0xff]
      %v2565 = vld [vmem:[#allocation3 + $0x30] sm:$0xff]
      %v2566 = vld [vmem:[#allocation3 + $0x48] sm:$0xff]
      %v2567 = vld [vmem:[#allocation3 + $0x50] sm:$0xff]
      %v2568 = vld [vmem:[#allocation3 + $0x68] sm:$0xff]
      %v2569 = vld [vmem:[#allocation3 + $0x70] sm:$0xff]
      %v2570 = vld [vmem:[#allocation3 + $0x88] sm:$0xff]
      %v2571 = vld [vmem:[#allocation3 + $0x90] sm:$0xff]
      %v2572 = vld [vmem:[#allocation3 + $0xa8] sm:$0xff]
      %v2573 = vld [vmem:[#allocation3 + $0xb0] sm:$0xff]
      %v2574 = vld [vmem:[#allocation3 + $0xc8] sm:$0xff]
      %v2575 = vld [vmem:[#allocation3 + $0xd0] sm:$0xff]
      %v2576 = vld [vmem:[#allocation3 + $0xe8] sm:$0xff]
      %v2577 = vld [vmem:[#allocation3 + $0xf0] sm:$0xff]
      %v2578 = vld [vmem:[#allocation3 + $0x108] sm:$0xff]
      %v2579 = vld [vmem:[#allocation3 + $0x110] sm:$0xff]
      %v2580 = vld [vmem:[#allocation3 + $0x128] sm:$0xff]
      %v2581 = vld [vmem:[#allocation3 + $0x130] sm:$0xff]
      %v2582 = vld [vmem:[#allocation3 + $0x148] sm:$0xff]
      %v2583 = vld [vmem:[#allocation3 + $0x150] sm:$0xff]
      %v2584 = vld [vmem:[#allocation3 + $0x168] sm:$0xff]
      %v2585 = vld [vmem:[#allocation3 + $0x170] sm:$0xff]
      %v2586 = vld [vmem:[#allocation3 + $0x188] sm:$0xff]
      %v2587 = vld [vmem:[#allocation3 + $0x190] sm:$0xff]
      %v2588 = vld [vmem:[#allocation3 + $0x1a8] sm:$0xff]
      %v2589 = vld [vmem:[#allocation3 + $0x1b0] sm:$0xff]
      %v2590 = vld [vmem:[#allocation3 + $0x1c8] sm:$0xff]
      %v2591 = vld [vmem:[#allocation3 + $0x1d0] sm:$0xff]
      %v2592 = vld [vmem:[#allocation3 + $0x1e8] sm:$0xff]
      %v2593 = vld [vmem:[#allocation3 + $0x1f0] sm:$0xff]
      %2594 = vst [vmem:[#allocation5 + $0x8] sm:$0xff] %v2562
      %2595 = vst [vmem:[#allocation5 + $0x50] sm:$0xff] %v2563
      %2596 = vst [vmem:[#allocation5 + $0x98] sm:$0xff] %v2564
      %2597 = vst [vmem:[#allocation5 + $0xe0] sm:$0xff] %v2565
      %2598 = vst [vmem:[#allocation5 + $0x128] sm:$0xff] %v2566
      %2599 = vst [vmem:[#allocation5 + $0x170] sm:$0xff] %v2567
      %2600 = vst [vmem:[#allocation5 + $0x1b8] sm:$0xff] %v2568
      %2601 = vst [vmem:[#allocation5 + $0x200] sm:$0xff] %v2569
      %2602 = vst [vmem:[#allocation5 + $0x248] sm:$0xff] %v2570
      %2603 = vst [vmem:[#allocation5 + $0x290] sm:$0xff] %v2571
      %2604 = vst [vmem:[#allocation5 + $0x2d8] sm:$0xff] %v2572
      %2605 = vst [vmem:[#allocation5 + $0x320] sm:$0xff] %v2573
      %2606 = vst [vmem:[#allocation5 + $0x368] sm:$0xff] %v2574
      %2607 = vst [vmem:[#allocation5 + $0x3b0] sm:$0xff] %v2575
      %2608 = vst [vmem:[#allocation5 + $0x3f8] sm:$0xff] %v2576
      %2609 = vst [vmem:[#allocation5 + $0x440] sm:$0xff] %v2577
      %2610 = vst [vmem:[#allocation5 + $0x488] sm:$0xff] %v2578
      %2611 = vst [vmem:[#allocation5 + $0x4d0] sm:$0xff] %v2579
      %2612 = vst [vmem:[#allocation5 + $0x518] sm:$0xff] %v2580
      %2613 = vst [vmem:[#allocation5 + $0x560] sm:$0xff] %v2581
      %2614 = vst [vmem:[#allocation5 + $0x5a8] sm:$0xff] %v2582
      %2615 = vst [vmem:[#allocation5 + $0x5f0] sm:$0xff] %v2583
      %2616 = vst [vmem:[#allocation5 + $0x638] sm:$0xff] %v2584
      %2617 = vst [vmem:[#allocation5 + $0x680] sm:$0xff] %v2585
      %2618 = vst [vmem:[#allocation5 + $0x6c8] sm:$0xff] %v2586
      %2619 = vst [vmem:[#allocation5 + $0x710] sm:$0xff] %v2587
      %2620 = vst [vmem:[#allocation5 + $0x758] sm:$0xff] %v2588
      %2621 = vst [vmem:[#allocation5 + $0x7a0] sm:$0xff] %v2589
      %2622 = vst [vmem:[#allocation5 + $0x7e8] sm:$0xff] %v2590
      %2623 = vst [vmem:[#allocation5 + $0x830] sm:$0xff] %v2591
      %2624 = vst [vmem:[#allocation5 + $0x878] sm:$0xff] %v2592
      %2625 = vst [vmem:[#allocation5 + $0x8c0] sm:$0xff] %v2593
      %v2626 = vld [vmem:[#allocation3 + $0x9] sm:$0xff]
      %v2627 = vld [vmem:[#allocation3 + $0x11] sm:$0xff]
      %v2628 = vld [vmem:[#allocation3 + $0x29] sm:$0xff]
      %v2629 = vld [vmem:[#allocation3 + $0x31] sm:$0xff]
      %v2630 = vld [vmem:[#allocation3 + $0x49] sm:$0xff]
      %v2631 = vld [vmem:[#allocation3 + $0x51] sm:$0xff]
      %v2632 = vld [vmem:[#allocation3 + $0x69] sm:$0xff]
      %v2633 = vld [vmem:[#allocation3 + $0x71] sm:$0xff]
      %v2634 = vld [vmem:[#allocation3 + $0x89] sm:$0xff]
      %v2635 = vld [vmem:[#allocation3 + $0x91] sm:$0xff]
      %v2636 = vld [vmem:[#allocation3 + $0xa9] sm:$0xff]
      %v2637 = vld [vmem:[#allocation3 + $0xb1] sm:$0xff]
      %v2638 = vld [vmem:[#allocation3 + $0xc9] sm:$0xff]
      %v2639 = vld [vmem:[#allocation3 + $0xd1] sm:$0xff]
      %v2640 = vld [vmem:[#allocation3 + $0xe9] sm:$0xff]
      %v2641 = vld [vmem:[#allocation3 + $0xf1] sm:$0xff]
      %v2642 = vld [vmem:[#allocation3 + $0x109] sm:$0xff]
      %v2643 = vld [vmem:[#allocation3 + $0x111] sm:$0xff]
      %v2644 = vld [vmem:[#allocation3 + $0x129] sm:$0xff]
      %v2645 = vld [vmem:[#allocation3 + $0x131] sm:$0xff]
      %v2646 = vld [vmem:[#allocation3 + $0x149] sm:$0xff]
      %v2647 = vld [vmem:[#allocation3 + $0x151] sm:$0xff]
      %v2648 = vld [vmem:[#allocation3 + $0x169] sm:$0xff]
      %v2649 = vld [vmem:[#allocation3 + $0x171] sm:$0xff]
      %v2650 = vld [vmem:[#allocation3 + $0x189] sm:$0xff]
      %v2651 = vld [vmem:[#allocation3 + $0x191] sm:$0xff]
      %v2652 = vld [vmem:[#allocation3 + $0x1a9] sm:$0xff]
      %v2653 = vld [vmem:[#allocation3 + $0x1b1] sm:$0xff]
      %v2654 = vld [vmem:[#allocation3 + $0x1c9] sm:$0xff]
      %v2655 = vld [vmem:[#allocation3 + $0x1d1] sm:$0xff]
      %v2656 = vld [vmem:[#allocation3 + $0x1e9] sm:$0xff]
      %v2657 = vld [vmem:[#allocation3 + $0x1f1] sm:$0xff]
      %2658 = vst [vmem:[#allocation5 + $0x10] sm:$0xff] %v2626
      %2659 = vst [vmem:[#allocation5 + $0x58] sm:$0xff] %v2627
      %2660 = vst [vmem:[#allocation5 + $0xa0] sm:$0xff] %v2628
      %2661 = vst [vmem:[#allocation5 + $0xe8] sm:$0xff] %v2629
      %2662 = vst [vmem:[#allocation5 + $0x130] sm:$0xff] %v2630
      %2663 = vst [vmem:[#allocation5 + $0x178] sm:$0xff] %v2631
      %2664 = vst [vmem:[#allocation5 + $0x1c0] sm:$0xff] %v2632
      %2665 = vst [vmem:[#allocation5 + $0x208] sm:$0xff] %v2633
      %2666 = vst [vmem:[#allocation5 + $0x250] sm:$0xff] %v2634
      %2667 = vst [vmem:[#allocation5 + $0x298] sm:$0xff] %v2635
      %2668 = vst [vmem:[#allocation5 + $0x2e0] sm:$0xff] %v2636
      %2669 = vst [vmem:[#allocation5 + $0x328] sm:$0xff] %v2637
      %2670 = vst [vmem:[#allocation5 + $0x370] sm:$0xff] %v2638
      %2671 = vst [vmem:[#allocation5 + $0x3b8] sm:$0xff] %v2639
      %2672 = vst [vmem:[#allocation5 + $0x400] sm:$0xff] %v2640
      %2673 = vst [vmem:[#allocation5 + $0x448] sm:$0xff] %v2641
      %2674 = vst [vmem:[#allocation5 + $0x490] sm:$0xff] %v2642
      %2675 = vst [vmem:[#allocation5 + $0x4d8] sm:$0xff] %v2643
      %2676 = vst [vmem:[#allocation5 + $0x520] sm:$0xff] %v2644
      %2677 = vst [vmem:[#allocation5 + $0x568] sm:$0xff] %v2645
      %2678 = vst [vmem:[#allocation5 + $0x5b0] sm:$0xff] %v2646
      %2679 = vst [vmem:[#allocation5 + $0x5f8] sm:$0xff] %v2647
      %2680 = vst [vmem:[#allocation5 + $0x640] sm:$0xff] %v2648
      %2681 = vst [vmem:[#allocation5 + $0x688] sm:$0xff] %v2649
      %2682 = vst [vmem:[#allocation5 + $0x6d0] sm:$0xff] %v2650
      %2683 = vst [vmem:[#allocation5 + $0x718] sm:$0xff] %v2651
      %2684 = vst [vmem:[#allocation5 + $0x760] sm:$0xff] %v2652
      %2685 = vst [vmem:[#allocation5 + $0x7a8] sm:$0xff] %v2653
      %2686 = vst [vmem:[#allocation5 + $0x7f0] sm:$0xff] %v2654
      %2687 = vst [vmem:[#allocation5 + $0x838] sm:$0xff] %v2655
      %2688 = vst [vmem:[#allocation5 + $0x880] sm:$0xff] %v2656
      %2689 = vst [vmem:[#allocation5 + $0x8c8] sm:$0xff] %v2657
      %v2690 = vld [vmem:[%s2465 + $0x7] sm:$0xff]
      %v2691 = vld [vmem:[%s2465 + $0xf] sm:$0xff]
      %v2692 = vld [vmem:[%s2465 + $0x27] sm:$0xff]
      %v2693 = vld [vmem:[%s2465 + $0x2f] sm:$0xff]
      %v2694 = vld [vmem:[%s2465 + $0x47] sm:$0xff]
      %v2695 = vld [vmem:[%s2465 + $0x4f] sm:$0xff]
      %v2696 = vld [vmem:[%s2465 + $0x67] sm:$0xff]
      %v2697 = vld [vmem:[%s2465 + $0x6f] sm:$0xff]
      %v2698 = vld [vmem:[%s2465 + $0x87] sm:$0xff]
      %v2699 = vld [vmem:[%s2465 + $0x8f] sm:$0xff]
      %v2700 = vld [vmem:[%s2465 + $0xa7] sm:$0xff]
      %v2701 = vld [vmem:[%s2465 + $0xaf] sm:$0xff]
      %v2702 = vld [vmem:[%s2465 + $0xc7] sm:$0xff]
      %v2703 = vld [vmem:[%s2465 + $0xcf] sm:$0xff]
      %v2704 = vld [vmem:[%s2465 + $0xe7] sm:$0xff]
      %v2705 = vld [vmem:[%s2465 + $0xef] sm:$0xff]
      %v2706 = vld [vmem:[%s2465 + $0x107] sm:$0xff]
      %v2707 = vld [vmem:[%s2465 + $0x10f] sm:$0xff]
      %v2708 = vld [vmem:[%s2465 + $0x127] sm:$0xff]
      %v2709 = vld [vmem:[%s2465 + $0x12f] sm:$0xff]
      %v2710 = vld [vmem:[%s2465 + $0x147] sm:$0xff]
      %v2711 = vld [vmem:[%s2465 + $0x14f] sm:$0xff]
      %v2712 = vld [vmem:[%s2465 + $0x167] sm:$0xff]
      %v2713 = vld [vmem:[%s2465 + $0x16f] sm:$0xff]
      %v2714 = vld [vmem:[%s2465 + $0x187] sm:$0xff]
      %v2715 = vld [vmem:[%s2465 + $0x18f] sm:$0xff]
      %v2716 = vld [vmem:[%s2465 + $0x1a7] sm:$0xff]
      %v2717 = vld [vmem:[%s2465 + $0x1af] sm:$0xff]
      %v2718 = vld [vmem:[%s2465 + $0x1c7] sm:$0xff]
      %v2719 = vld [vmem:[%s2465 + $0x1cf] sm:$0xff]
      %v2720 = vld [vmem:[%s2465 + $0x1e7] sm:$0xff]
      %v2721 = vld [vmem:[%s2465 + $0x1ef] sm:$0xff]
      %2722 = vst [vmem:[#allocation5 + $0x18] sm:$0xff] %v2690
      %2723 = vst [vmem:[#allocation5 + $0x60] sm:$0xff] %v2691
      %2724 = vst [vmem:[#allocation5 + $0xa8] sm:$0xff] %v2692
      %2725 = vst [vmem:[#allocation5 + $0xf0] sm:$0xff] %v2693
      %2726 = vst [vmem:[#allocation5 + $0x138] sm:$0xff] %v2694
      %2727 = vst [vmem:[#allocation5 + $0x180] sm:$0xff] %v2695
      %2728 = vst [vmem:[#allocation5 + $0x1c8] sm:$0xff] %v2696
      %2729 = vst [vmem:[#allocation5 + $0x210] sm:$0xff] %v2697
      %2730 = vst [vmem:[#allocation5 + $0x258] sm:$0xff] %v2698
      %2731 = vst [vmem:[#allocation5 + $0x2a0] sm:$0xff] %v2699
      %2732 = vst [vmem:[#allocation5 + $0x2e8] sm:$0xff] %v2700
      %2733 = vst [vmem:[#allocation5 + $0x330] sm:$0xff] %v2701
      %2734 = vst [vmem:[#allocation5 + $0x378] sm:$0xff] %v2702
      %2735 = vst [vmem:[#allocation5 + $0x3c0] sm:$0xff] %v2703
      %2736 = vst [vmem:[#allocation5 + $0x408] sm:$0xff] %v2704
      %2737 = vst [vmem:[#allocation5 + $0x450] sm:$0xff] %v2705
      %2738 = vst [vmem:[#allocation5 + $0x498] sm:$0xff] %v2706
      %2739 = vst [vmem:[#allocation5 + $0x4e0] sm:$0xff] %v2707
      %2740 = vst [vmem:[#allocation5 + $0x528] sm:$0xff] %v2708
      %2741 = vst [vmem:[#allocation5 + $0x570] sm:$0xff] %v2709
      %2742 = vst [vmem:[#allocation5 + $0x5b8] sm:$0xff] %v2710
      %2743 = vst [vmem:[#allocation5 + $0x600] sm:$0xff] %v2711
      %2744 = vst [vmem:[#allocation5 + $0x648] sm:$0xff] %v2712
      %2745 = vst [vmem:[#allocation5 + $0x690] sm:$0xff] %v2713
      %2746 = vst [vmem:[#allocation5 + $0x6d8] sm:$0xff] %v2714
      %2747 = vst [vmem:[#allocation5 + $0x720] sm:$0xff] %v2715
      %2748 = vst [vmem:[#allocation5 + $0x768] sm:$0xff] %v2716
      %2749 = vst [vmem:[#allocation5 + $0x7b0] sm:$0xff] %v2717
      %2750 = vst [vmem:[#allocation5 + $0x7f8] sm:$0xff] %v2718
      %2751 = vst [vmem:[#allocation5 + $0x840] sm:$0xff] %v2719
      %2752 = vst [vmem:[#allocation5 + $0x888] sm:$0xff] %v2720
      %2753 = vst [vmem:[#allocation5 + $0x8d0] sm:$0xff] %v2721
      %v2754 = vld [vmem:[%s2465 + $0x8] sm:$0xff]
      %v2755 = vld [vmem:[%s2465 + $0x10] sm:$0xff]
      %v2756 = vld [vmem:[%s2465 + $0x28] sm:$0xff]
      %v2757 = vld [vmem:[%s2465 + $0x30] sm:$0xff]
      %v2758 = vld [vmem:[%s2465 + $0x48] sm:$0xff]
      %v2759 = vld [vmem:[%s2465 + $0x50] sm:$0xff]
      %v2760 = vld [vmem:[%s2465 + $0x68] sm:$0xff]
      %v2761 = vld [vmem:[%s2465 + $0x70] sm:$0xff]
      %v2762 = vld [vmem:[%s2465 + $0x88] sm:$0xff]
      %v2763 = vld [vmem:[%s2465 + $0x90] sm:$0xff]
      %v2764 = vld [vmem:[%s2465 + $0xa8] sm:$0xff]
      %v2765 = vld [vmem:[%s2465 + $0xb0] sm:$0xff]
      %v2766 = vld [vmem:[%s2465 + $0xc8] sm:$0xff]
      %v2767 = vld [vmem:[%s2465 + $0xd0] sm:$0xff]
      %v2768 = vld [vmem:[%s2465 + $0xe8] sm:$0xff]
      %v2769 = vld [vmem:[%s2465 + $0xf0] sm:$0xff]
      %v2770 = vld [vmem:[%s2465 + $0x108] sm:$0xff]
      %v2771 = vld [vmem:[%s2465 + $0x110] sm:$0xff]
      %v2772 = vld [vmem:[%s2465 + $0x128] sm:$0xff]
      %v2773 = vld [vmem:[%s2465 + $0x130] sm:$0xff]
      %v2774 = vld [vmem:[%s2465 + $0x148] sm:$0xff]
      %v2775 = vld [vmem:[%s2465 + $0x150] sm:$0xff]
      %v2776 = vld [vmem:[%s2465 + $0x168] sm:$0xff]
      %v2777 = vld [vmem:[%s2465 + $0x170] sm:$0xff]
      %v2778 = vld [vmem:[%s2465 + $0x188] sm:$0xff]
      %v2779 = vld [vmem:[%s2465 + $0x190] sm:$0xff]
      %v2780 = vld [vmem:[%s2465 + $0x1a8] sm:$0xff]
      %v2781 = vld [vmem:[%s2465 + $0x1b0] sm:$0xff]
      %v2782 = vld [vmem:[%s2465 + $0x1c8] sm:$0xff]
      %v2783 = vld [vmem:[%s2465 + $0x1d0] sm:$0xff]
      %v2784 = vld [vmem:[%s2465 + $0x1e8] sm:$0xff]
      %v2785 = vld [vmem:[%s2465 + $0x1f0] sm:$0xff]
      %2786 = vst [vmem:[#allocation5 + $0x20] sm:$0xff] %v2754
      %2787 = vst [vmem:[#allocation5 + $0x68] sm:$0xff] %v2755
      %2788 = vst [vmem:[#allocation5 + $0xb0] sm:$0xff] %v2756
      %2789 = vst [vmem:[#allocation5 + $0xf8] sm:$0xff] %v2757
      %2790 = vst [vmem:[#allocation5 + $0x140] sm:$0xff] %v2758
      %2791 = vst [vmem:[#allocation5 + $0x188] sm:$0xff] %v2759
      %2792 = vst [vmem:[#allocation5 + $0x1d0] sm:$0xff] %v2760
      %2793 = vst [vmem:[#allocation5 + $0x218] sm:$0xff] %v2761
      %2794 = vst [vmem:[#allocation5 + $0x260] sm:$0xff] %v2762
      %2795 = vst [vmem:[#allocation5 + $0x2a8] sm:$0xff] %v2763
      %2796 = vst [vmem:[#allocation5 + $0x2f0] sm:$0xff] %v2764
      %2797 = vst [vmem:[#allocation5 + $0x338] sm:$0xff] %v2765
      %2798 = vst [vmem:[#allocation5 + $0x380] sm:$0xff] %v2766
      %2799 = vst [vmem:[#allocation5 + $0x3c8] sm:$0xff] %v2767
      %2800 = vst [vmem:[#allocation5 + $0x410] sm:$0xff] %v2768
      %2801 = vst [vmem:[#allocation5 + $0x458] sm:$0xff] %v2769
      %2802 = vst [vmem:[#allocation5 + $0x4a0] sm:$0xff] %v2770
      %2803 = vst [vmem:[#allocation5 + $0x4e8] sm:$0xff] %v2771
      %2804 = vst [vmem:[#allocation5 + $0x530] sm:$0xff] %v2772
      %2805 = vst [vmem:[#allocation5 + $0x578] sm:$0xff] %v2773
      %2806 = vst [vmem:[#allocation5 + $0x5c0] sm:$0xff] %v2774
      %2807 = vst [vmem:[#allocation5 + $0x608] sm:$0xff] %v2775
      %2808 = vst [vmem:[#allocation5 + $0x650] sm:$0xff] %v2776
      %2809 = vst [vmem:[#allocation5 + $0x698] sm:$0xff] %v2777
      %2810 = vst [vmem:[#allocation5 + $0x6e0] sm:$0xff] %v2778
      %2811 = vst [vmem:[#allocation5 + $0x728] sm:$0xff] %v2779
      %2812 = vst [vmem:[#allocation5 + $0x770] sm:$0xff] %v2780
      %2813 = vst [vmem:[#allocation5 + $0x7b8] sm:$0xff] %v2781
      %2814 = vst [vmem:[#allocation5 + $0x800] sm:$0xff] %v2782
      %2815 = vst [vmem:[#allocation5 + $0x848] sm:$0xff] %v2783
      %2816 = vst [vmem:[#allocation5 + $0x890] sm:$0xff] %v2784
      %2817 = vst [vmem:[#allocation5 + $0x8d8] sm:$0xff] %v2785
      %v2818 = vld [vmem:[%s2465 + $0x9] sm:$0xff]
      %v2819 = vld [vmem:[%s2465 + $0x11] sm:$0xff]
      %v2820 = vld [vmem:[%s2465 + $0x29] sm:$0xff]
      %v2821 = vld [vmem:[%s2465 + $0x31] sm:$0xff]
      %v2822 = vld [vmem:[%s2465 + $0x49] sm:$0xff]
      %v2823 = vld [vmem:[%s2465 + $0x51] sm:$0xff]
      %v2824 = vld [vmem:[%s2465 + $0x69] sm:$0xff]
      %v2825 = vld [vmem:[%s2465 + $0x71] sm:$0xff]
      %v2826 = vld [vmem:[%s2465 + $0x89] sm:$0xff]
      %v2827 = vld [vmem:[%s2465 + $0x91] sm:$0xff]
      %v2828 = vld [vmem:[%s2465 + $0xa9] sm:$0xff]
      %v2829 = vld [vmem:[%s2465 + $0xb1] sm:$0xff]
      %v2830 = vld [vmem:[%s2465 + $0xc9] sm:$0xff]
      %v2831 = vld [vmem:[%s2465 + $0xd1] sm:$0xff]
      %v2832 = vld [vmem:[%s2465 + $0xe9] sm:$0xff]
      %v2833 = vld [vmem:[%s2465 + $0xf1] sm:$0xff]
      %v2834 = vld [vmem:[%s2465 + $0x109] sm:$0xff]
      %v2835 = vld [vmem:[%s2465 + $0x111] sm:$0xff]
      %v2836 = vld [vmem:[%s2465 + $0x129] sm:$0xff]
      %v2837 = vld [vmem:[%s2465 + $0x131] sm:$0xff]
      %v2838 = vld [vmem:[%s2465 + $0x149] sm:$0xff]
      %v2839 = vld [vmem:[%s2465 + $0x151] sm:$0xff]
      %v2840 = vld [vmem:[%s2465 + $0x169] sm:$0xff]
      %v2841 = vld [vmem:[%s2465 + $0x171] sm:$0xff]
      %v2842 = vld [vmem:[%s2465 + $0x189] sm:$0xff]
      %v2843 = vld [vmem:[%s2465 + $0x191] sm:$0xff]
      %v2844 = vld [vmem:[%s2465 + $0x1a9] sm:$0xff]
      %v2845 = vld [vmem:[%s2465 + $0x1b1] sm:$0xff]
      %v2846 = vld [vmem:[%s2465 + $0x1c9] sm:$0xff]
      %v2847 = vld [vmem:[%s2465 + $0x1d1] sm:$0xff]
      %v2848 = vld [vmem:[%s2465 + $0x1e9] sm:$0xff]
      %v2849 = vld [vmem:[%s2465 + $0x1f1] sm:$0xff]
      %2850 = vst [vmem:[#allocation5 + $0x28] sm:$0xff] %v2818
      %2851 = vst [vmem:[#allocation5 + $0x70] sm:$0xff] %v2819
      %2852 = vst [vmem:[#allocation5 + $0xb8] sm:$0xff] %v2820
      %2853 = vst [vmem:[#allocation5 + $0x100] sm:$0xff] %v2821
      %2854 = vst [vmem:[#allocation5 + $0x148] sm:$0xff] %v2822
      %2855 = vst [vmem:[#allocation5 + $0x190] sm:$0xff] %v2823
      %2856 = vst [vmem:[#allocation5 + $0x1d8] sm:$0xff] %v2824
      %2857 = vst [vmem:[#allocation5 + $0x220] sm:$0xff] %v2825
      %2858 = vst [vmem:[#allocation5 + $0x268] sm:$0xff] %v2826
      %2859 = vst [vmem:[#allocation5 + $0x2b0] sm:$0xff] %v2827
      %2860 = vst [vmem:[#allocation5 + $0x2f8] sm:$0xff] %v2828
      %2861 = vst [vmem:[#allocation5 + $0x340] sm:$0xff] %v2829
      %2862 = vst [vmem:[#allocation5 + $0x388] sm:$0xff] %v2830
      %2863 = vst [vmem:[#allocation5 + $0x3d0] sm:$0xff] %v2831
      %2864 = vst [vmem:[#allocation5 + $0x418] sm:$0xff] %v2832
      %2865 = vst [vmem:[#allocation5 + $0x460] sm:$0xff] %v2833
      %2866 = vst [vmem:[#allocation5 + $0x4a8] sm:$0xff] %v2834
      %2867 = vst [vmem:[#allocation5 + $0x4f0] sm:$0xff] %v2835
      %2868 = vst [vmem:[#allocation5 + $0x538] sm:$0xff] %v2836
      %2869 = vst [vmem:[#allocation5 + $0x580] sm:$0xff] %v2837
      %2870 = vst [vmem:[#allocation5 + $0x5c8] sm:$0xff] %v2838
      %2871 = vst [vmem:[#allocation5 + $0x610] sm:$0xff] %v2839
      %2872 = vst [vmem:[#allocation5 + $0x658] sm:$0xff] %v2840
      %2873 = vst [vmem:[#allocation5 + $0x6a0] sm:$0xff] %v2841
      %2874 = vst [vmem:[#allocation5 + $0x6e8] sm:$0xff] %v2842
      %2875 = vst [vmem:[#allocation5 + $0x730] sm:$0xff] %v2843
      %2876 = vst [vmem:[#allocation5 + $0x778] sm:$0xff] %v2844
      %2877 = vst [vmem:[#allocation5 + $0x7c0] sm:$0xff] %v2845
      %2878 = vst [vmem:[#allocation5 + $0x808] sm:$0xff] %v2846
      %2879 = vst [vmem:[#allocation5 + $0x850] sm:$0xff] %v2847
      %2880 = vst [vmem:[#allocation5 + $0x898] sm:$0xff] %v2848
      %2881 = vst [vmem:[#allocation5 + $0x8e0] sm:$0xff] %v2849
      %s2882 = scalar_lea.vmem [#allocation3], 64
      %v2883 = vld [vmem:[%s2882 + $0x7] sm:$0xff]
      %v2884 = vld [vmem:[%s2882 + $0xf] sm:$0xff]
      %v2885 = vld [vmem:[%s2882 + $0x27] sm:$0xff]
      %v2886 = vld [vmem:[%s2882 + $0x2f] sm:$0xff]
      %v2887 = vld [vmem:[%s2882 + $0x47] sm:$0xff]
      %v2888 = vld [vmem:[%s2882 + $0x4f] sm:$0xff]
      %v2889 = vld [vmem:[%s2882 + $0x67] sm:$0xff]
      %v2890 = vld [vmem:[%s2882 + $0x6f] sm:$0xff]
      %v2891 = vld [vmem:[%s2882 + $0x87] sm:$0xff]
      %v2892 = vld [vmem:[%s2882 + $0x8f] sm:$0xff]
      %v2893 = vld [vmem:[%s2882 + $0xa7] sm:$0xff]
      %v2894 = vld [vmem:[%s2882 + $0xaf] sm:$0xff]
      %v2895 = vld [vmem:[%s2882 + $0xc7] sm:$0xff]
      %v2896 = vld [vmem:[%s2882 + $0xcf] sm:$0xff]
      %v2897 = vld [vmem:[%s2882 + $0xe7] sm:$0xff]
      %v2898 = vld [vmem:[%s2882 + $0xef] sm:$0xff]
      %v2899 = vld [vmem:[%s2882 + $0x107] sm:$0xff]
      %v2900 = vld [vmem:[%s2882 + $0x10f] sm:$0xff]
      %v2901 = vld [vmem:[%s2882 + $0x127] sm:$0xff]
      %v2902 = vld [vmem:[%s2882 + $0x12f] sm:$0xff]
      %v2903 = vld [vmem:[%s2882 + $0x147] sm:$0xff]
      %v2904 = vld [vmem:[%s2882 + $0x14f] sm:$0xff]
      %v2905 = vld [vmem:[%s2882 + $0x167] sm:$0xff]
      %v2906 = vld [vmem:[%s2882 + $0x16f] sm:$0xff]
      %v2907 = vld [vmem:[%s2882 + $0x187] sm:$0xff]
      %v2908 = vld [vmem:[%s2882 + $0x18f] sm:$0xff]
      %v2909 = vld [vmem:[%s2882 + $0x1a7] sm:$0xff]
      %v2910 = vld [vmem:[%s2882 + $0x1af] sm:$0xff]
      %v2911 = vld [vmem:[%s2882 + $0x1c7] sm:$0xff]
      %v2912 = vld [vmem:[%s2882 + $0x1cf] sm:$0xff]
      %v2913 = vld [vmem:[%s2882 + $0x1e7] sm:$0xff]
      %v2914 = vld [vmem:[%s2882 + $0x1ef] sm:$0xff]
      %2915 = vst [vmem:[#allocation5 + $0x30] sm:$0xff] %v2883
      %2916 = vst [vmem:[#allocation5 + $0x78] sm:$0xff] %v2884
      %2917 = vst [vmem:[#allocation5 + $0xc0] sm:$0xff] %v2885
      %2918 = vst [vmem:[#allocation5 + $0x108] sm:$0xff] %v2886
      %2919 = vst [vmem:[#allocation5 + $0x150] sm:$0xff] %v2887
      %2920 = vst [vmem:[#allocation5 + $0x198] sm:$0xff] %v2888
      %2921 = vst [vmem:[#allocation5 + $0x1e0] sm:$0xff] %v2889
      %2922 = vst [vmem:[#allocation5 + $0x228] sm:$0xff] %v2890
      %2923 = vst [vmem:[#allocation5 + $0x270] sm:$0xff] %v2891
      %2924 = vst [vmem:[#allocation5 + $0x2b8] sm:$0xff] %v2892
      %2925 = vst [vmem:[#allocation5 + $0x300] sm:$0xff] %v2893
      %2926 = vst [vmem:[#allocation5 + $0x348] sm:$0xff] %v2894
      %2927 = vst [vmem:[#allocation5 + $0x390] sm:$0xff] %v2895
      %2928 = vst [vmem:[#allocation5 + $0x3d8] sm:$0xff] %v2896
      %2929 = vst [vmem:[#allocation5 + $0x420] sm:$0xff] %v2897
      %2930 = vst [vmem:[#allocation5 + $0x468] sm:$0xff] %v2898
      %2931 = vst [vmem:[#allocation5 + $0x4b0] sm:$0xff] %v2899
      %2932 = vst [vmem:[#allocation5 + $0x4f8] sm:$0xff] %v2900
      %2933 = vst [vmem:[#allocation5 + $0x540] sm:$0xff] %v2901
      %2934 = vst [vmem:[#allocation5 + $0x588] sm:$0xff] %v2902
      %2935 = vst [vmem:[#allocation5 + $0x5d0] sm:$0xff] %v2903
      %2936 = vst [vmem:[#allocation5 + $0x618] sm:$0xff] %v2904
      %2937 = vst [vmem:[#allocation5 + $0x660] sm:$0xff] %v2905
      %2938 = vst [vmem:[#allocation5 + $0x6a8] sm:$0xff] %v2906
      %2939 = vst [vmem:[#allocation5 + $0x6f0] sm:$0xff] %v2907
      %2940 = vst [vmem:[#allocation5 + $0x738] sm:$0xff] %v2908
      %2941 = vst [vmem:[#allocation5 + $0x780] sm:$0xff] %v2909
      %2942 = vst [vmem:[#allocation5 + $0x7c8] sm:$0xff] %v2910
      %2943 = vst [vmem:[#allocation5 + $0x810] sm:$0xff] %v2911
      %2944 = vst [vmem:[#allocation5 + $0x858] sm:$0xff] %v2912
      %2945 = vst [vmem:[#allocation5 + $0x8a0] sm:$0xff] %v2913
      %2946 = vst [vmem:[#allocation5 + $0x8e8] sm:$0xff] %v2914
      %v2947 = vld [vmem:[%s2882 + $0x8] sm:$0xff]
      %v2948 = vld [vmem:[%s2882 + $0x10] sm:$0xff]
      %v2949 = vld [vmem:[%s2882 + $0x28] sm:$0xff]
      %v2950 = vld [vmem:[%s2882 + $0x30] sm:$0xff]
      %v2951 = vld [vmem:[%s2882 + $0x48] sm:$0xff]
      %v2952 = vld [vmem:[%s2882 + $0x50] sm:$0xff]
      %v2953 = vld [vmem:[%s2882 + $0x68] sm:$0xff]
      %v2954 = vld [vmem:[%s2882 + $0x70] sm:$0xff]
      %v2955 = vld [vmem:[%s2882 + $0x88] sm:$0xff]
      %v2956 = vld [vmem:[%s2882 + $0x90] sm:$0xff]
      %v2957 = vld [vmem:[%s2882 + $0xa8] sm:$0xff]
      %v2958 = vld [vmem:[%s2882 + $0xb0] sm:$0xff]
      %v2959 = vld [vmem:[%s2882 + $0xc8] sm:$0xff]
      %v2960 = vld [vmem:[%s2882 + $0xd0] sm:$0xff]
      %v2961 = vld [vmem:[%s2882 + $0xe8] sm:$0xff]
      %v2962 = vld [vmem:[%s2882 + $0xf0] sm:$0xff]
      %v2963 = vld [vmem:[%s2882 + $0x108] sm:$0xff]
      %v2964 = vld [vmem:[%s2882 + $0x110] sm:$0xff]
      %v2965 = vld [vmem:[%s2882 + $0x128] sm:$0xff]
      %v2966 = vld [vmem:[%s2882 + $0x130] sm:$0xff]
      %v2967 = vld [vmem:[%s2882 + $0x148] sm:$0xff]
      %v2968 = vld [vmem:[%s2882 + $0x150] sm:$0xff]
      %v2969 = vld [vmem:[%s2882 + $0x168] sm:$0xff]
      %v2970 = vld [vmem:[%s2882 + $0x170] sm:$0xff]
      %v2971 = vld [vmem:[%s2882 + $0x188] sm:$0xff]
      %v2972 = vld [vmem:[%s2882 + $0x190] sm:$0xff]
      %v2973 = vld [vmem:[%s2882 + $0x1a8] sm:$0xff]
      %v2974 = vld [vmem:[%s2882 + $0x1b0] sm:$0xff]
      %v2975 = vld [vmem:[%s2882 + $0x1c8] sm:$0xff]
      %v2976 = vld [vmem:[%s2882 + $0x1d0] sm:$0xff]
      %v2977 = vld [vmem:[%s2882 + $0x1e8] sm:$0xff]
      %v2978 = vld [vmem:[%s2882 + $0x1f0] sm:$0xff]
      %2979 = vst [vmem:[#allocation5 + $0x38] sm:$0xff] %v2947
      %2980 = vst [vmem:[#allocation5 + $0x80] sm:$0xff] %v2948
      %2981 = vst [vmem:[#allocation5 + $0xc8] sm:$0xff] %v2949
      %2982 = vst [vmem:[#allocation5 + $0x110] sm:$0xff] %v2950
      %2983 = vst [vmem:[#allocation5 + $0x158] sm:$0xff] %v2951
      %2984 = vst [vmem:[#allocation5 + $0x1a0] sm:$0xff] %v2952
      %2985 = vst [vmem:[#allocation5 + $0x1e8] sm:$0xff] %v2953
      %2986 = vst [vmem:[#allocation5 + $0x230] sm:$0xff] %v2954
      %2987 = vst [vmem:[#allocation5 + $0x278] sm:$0xff] %v2955
      %2988 = vst [vmem:[#allocation5 + $0x2c0] sm:$0xff] %v2956
      %2989 = vst [vmem:[#allocation5 + $0x308] sm:$0xff] %v2957
      %2990 = vst [vmem:[#allocation5 + $0x350] sm:$0xff] %v2958
      %2991 = vst [vmem:[#allocation5 + $0x398] sm:$0xff] %v2959
      %2992 = vst [vmem:[#allocation5 + $0x3e0] sm:$0xff] %v2960
      %2993 = vst [vmem:[#allocation5 + $0x428] sm:$0xff] %v2961
      %2994 = vst [vmem:[#allocation5 + $0x470] sm:$0xff] %v2962
      %2995 = vst [vmem:[#allocation5 + $0x4b8] sm:$0xff] %v2963
      %2996 = vst [vmem:[#allocation5 + $0x500] sm:$0xff] %v2964
      %2997 = vst [vmem:[#allocation5 + $0x548] sm:$0xff] %v2965
      %2998 = vst [vmem:[#allocation5 + $0x590] sm:$0xff] %v2966
      %2999 = vst [vmem:[#allocation5 + $0x5d8] sm:$0xff] %v2967
      %3000 = vst [vmem:[#allocation5 + $0x620] sm:$0xff] %v2968
      %3001 = vst [vmem:[#allocation5 + $0x668] sm:$0xff] %v2969
      %3002 = vst [vmem:[#allocation5 + $0x6b0] sm:$0xff] %v2970
      %3003 = vst [vmem:[#allocation5 + $0x6f8] sm:$0xff] %v2971
      %3004 = vst [vmem:[#allocation5 + $0x740] sm:$0xff] %v2972
      %3005 = vst [vmem:[#allocation5 + $0x788] sm:$0xff] %v2973
      %3006 = vst [vmem:[#allocation5 + $0x7d0] sm:$0xff] %v2974
      %3007 = vst [vmem:[#allocation5 + $0x818] sm:$0xff] %v2975
      %3008 = vst [vmem:[#allocation5 + $0x860] sm:$0xff] %v2976
      %3009 = vst [vmem:[#allocation5 + $0x8a8] sm:$0xff] %v2977
      %3010 = vst [vmem:[#allocation5 + $0x8f0] sm:$0xff] %v2978
      %v3011 = vld [vmem:[%s2882 + $0x9] sm:$0xff]
      %v3012 = vld [vmem:[%s2882 + $0x11] sm:$0xff]
      %v3013 = vld [vmem:[%s2882 + $0x29] sm:$0xff]
      %v3014 = vld [vmem:[%s2882 + $0x31] sm:$0xff]
      %v3015 = vld [vmem:[%s2882 + $0x49] sm:$0xff]
      %v3016 = vld [vmem:[%s2882 + $0x51] sm:$0xff]
      %v3017 = vld [vmem:[%s2882 + $0x69] sm:$0xff]
      %v3018 = vld [vmem:[%s2882 + $0x71] sm:$0xff]
      %v3019 = vld [vmem:[%s2882 + $0x89] sm:$0xff]
      %v3020 = vld [vmem:[%s2882 + $0x91] sm:$0xff]
      %v3021 = vld [vmem:[%s2882 + $0xa9] sm:$0xff]
      %v3022 = vld [vmem:[%s2882 + $0xb1] sm:$0xff]
      %v3023 = vld [vmem:[%s2882 + $0xc9] sm:$0xff]
      %v3024 = vld [vmem:[%s2882 + $0xd1] sm:$0xff]
      %v3025 = vld [vmem:[%s2882 + $0xe9] sm:$0xff]
      %v3026 = vld [vmem:[%s2882 + $0xf1] sm:$0xff]
      %v3027 = vld [vmem:[%s2882 + $0x109] sm:$0xff]
      %v3028 = vld [vmem:[%s2882 + $0x111] sm:$0xff]
      %v3029 = vld [vmem:[%s2882 + $0x129] sm:$0xff]
      %v3030 = vld [vmem:[%s2882 + $0x131] sm:$0xff]
      %v3031 = vld [vmem:[%s2882 + $0x149] sm:$0xff]
      %v3032 = vld [vmem:[%s2882 + $0x151] sm:$0xff]
      %v3033 = vld [vmem:[%s2882 + $0x169] sm:$0xff]
      %v3034 = vld [vmem:[%s2882 + $0x171] sm:$0xff]
      %v3035 = vld [vmem:[%s2882 + $0x189] sm:$0xff]
      %v3036 = vld [vmem:[%s2882 + $0x191] sm:$0xff]
      %v3037 = vld [vmem:[%s2882 + $0x1a9] sm:$0xff]
      %v3038 = vld [vmem:[%s2882 + $0x1b1] sm:$0xff]
      %v3039 = vld [vmem:[%s2882 + $0x1c9] sm:$0xff]
      %v3040 = vld [vmem:[%s2882 + $0x1d1] sm:$0xff]
      %v3041 = vld [vmem:[%s2882 + $0x1e9] sm:$0xff]
      %v3042 = vld [vmem:[%s2882 + $0x1f1] sm:$0xff]
      %3043 = vst [vmem:[#allocation5 + $0x40] sm:$0xff] %v3011
      %3044 = vst [vmem:[#allocation5 + $0x88] sm:$0xff] %v3012
      %3045 = vst [vmem:[#allocation5 + $0xd0] sm:$0xff] %v3013
      %3046 = vst [vmem:[#allocation5 + $0x118] sm:$0xff] %v3014
      %3047 = vst [vmem:[#allocation5 + $0x160] sm:$0xff] %v3015
      %3048 = vst [vmem:[#allocation5 + $0x1a8] sm:$0xff] %v3016
      %3049 = vst [vmem:[#allocation5 + $0x1f0] sm:$0xff] %v3017
      %3050 = vst [vmem:[#allocation5 + $0x238] sm:$0xff] %v3018
      %3051 = vst [vmem:[#allocation5 + $0x280] sm:$0xff] %v3019
      %3052 = vst [vmem:[#allocation5 + $0x2c8] sm:$0xff] %v3020
      %3053 = vst [vmem:[#allocation5 + $0x310] sm:$0xff] %v3021
      %3054 = vst [vmem:[#allocation5 + $0x358] sm:$0xff] %v3022
      %3055 = vst [vmem:[#allocation5 + $0x3a0] sm:$0xff] %v3023
      %3056 = vst [vmem:[#allocation5 + $0x3e8] sm:$0xff] %v3024
      %3057 = vst [vmem:[#allocation5 + $0x430] sm:$0xff] %v3025
      %3058 = vst [vmem:[#allocation5 + $0x478] sm:$0xff] %v3026
      %3059 = vst [vmem:[#allocation5 + $0x4c0] sm:$0xff] %v3027
      %3060 = vst [vmem:[#allocation5 + $0x508] sm:$0xff] %v3028
      %3061 = vst [vmem:[#allocation5 + $0x550] sm:$0xff] %v3029
      %3062 = vst [vmem:[#allocation5 + $0x598] sm:$0xff] %v3030
      %3063 = vst [vmem:[#allocation5 + $0x5e0] sm:$0xff] %v3031
      %3064 = vst [vmem:[#allocation5 + $0x628] sm:$0xff] %v3032
      %3065 = vst [vmem:[#allocation5 + $0x670] sm:$0xff] %v3033
      %3066 = vst [vmem:[#allocation5 + $0x6b8] sm:$0xff] %v3034
      %3067 = vst [vmem:[#allocation5 + $0x700] sm:$0xff] %v3035
      %3068 = vst [vmem:[#allocation5 + $0x748] sm:$0xff] %v3036
      %3069 = vst [vmem:[#allocation5 + $0x790] sm:$0xff] %v3037
      %3070 = vst [vmem:[#allocation5 + $0x7d8] sm:$0xff] %v3038
      %3071 = vst [vmem:[#allocation5 + $0x820] sm:$0xff] %v3039
      %3072 = vst [vmem:[#allocation5 + $0x868] sm:$0xff] %v3040
      %3073 = vst [vmem:[#allocation5 + $0x8b0] sm:$0xff] %v3041
      %3074 = vst [vmem:[#allocation5 + $0x8f8] sm:$0xff] %v3042
      %v3075 = vld [vmem:[#allocation5] sm:$0xff]
      %v3076 = vld [vmem:[#allocation5 + $0x8] sm:$0xff]
      %v3077 = vld [vmem:[#allocation5 + $0x10] sm:$0xff]
      %v3078 = vld [vmem:[#allocation5 + $0x18] sm:$0xff]
      %v3079 = vld [vmem:[#allocation5 + $0x20] sm:$0xff]
      %v3080 = vld [vmem:[#allocation5 + $0x28] sm:$0xff]
      %v3081 = vld [vmem:[#allocation5 + $0x30] sm:$0xff]
      %v3082 = vld [vmem:[#allocation5 + $0x38] sm:$0xff]
      %v3083 = vld [vmem:[#allocation5 + $0x40] sm:$0xff]
      %v3084 = vld [vmem:[#allocation5 + $0x48] sm:$0xff]
      %v3085 = vld [vmem:[#allocation5 + $0x50] sm:$0xff]
      %v3086 = vld [vmem:[#allocation5 + $0x58] sm:$0xff]
      %v3087 = vld [vmem:[#allocation5 + $0x60] sm:$0xff]
      %v3088 = vld [vmem:[#allocation5 + $0x68] sm:$0xff]
      %v3089 = vld [vmem:[#allocation5 + $0x70] sm:$0xff]
      %v3090 = vld [vmem:[#allocation5 + $0x78] sm:$0xff]
      %v3091 = vld [vmem:[#allocation5 + $0x80] sm:$0xff]
      %v3092 = vld [vmem:[#allocation5 + $0x88] sm:$0xff]
      %v3093 = vld [vmem:[#allocation5 + $0x90] sm:$0xff]
      %v3094 = vld [vmem:[#allocation5 + $0x98] sm:$0xff]
      %v3095 = vld [vmem:[#allocation5 + $0xa0] sm:$0xff]
      %v3096 = vld [vmem:[#allocation5 + $0xa8] sm:$0xff]
      %v3097 = vld [vmem:[#allocation5 + $0xb0] sm:$0xff]
      %v3098 = vld [vmem:[#allocation5 + $0xb8] sm:$0xff]
      %v3099 = vld [vmem:[#allocation5 + $0xc0] sm:$0xff]
      %v3100 = vld [vmem:[#allocation5 + $0xc8] sm:$0xff]
      %v3101 = vld [vmem:[#allocation5 + $0xd0] sm:$0xff]
      %v3102 = vld [vmem:[#allocation5 + $0xd8] sm:$0xff]
      %v3103 = vld [vmem:[#allocation5 + $0xe0] sm:$0xff]
      %v3104 = vld [vmem:[#allocation5 + $0xe8] sm:$0xff]
      %v3105 = vld [vmem:[#allocation5 + $0xf0] sm:$0xff]
      %v3106 = vld [vmem:[#allocation5 + $0xf8] sm:$0xff]
      %v3107 = vld [vmem:[#allocation5 + $0x100] sm:$0xff]
      %v3108 = vld [vmem:[#allocation5 + $0x108] sm:$0xff]
      %v3109 = vld [vmem:[#allocation5 + $0x110] sm:$0xff]
      %v3110 = vld [vmem:[#allocation5 + $0x118] sm:$0xff]
      %v3111 = vld [vmem:[#allocation5 + $0x120] sm:$0xff]
      %v3112 = vld [vmem:[#allocation5 + $0x128] sm:$0xff]
      %v3113 = vld [vmem:[#allocation5 + $0x130] sm:$0xff]
      %v3114 = vld [vmem:[#allocation5 + $0x138] sm:$0xff]
      %v3115 = vld [vmem:[#allocation5 + $0x140] sm:$0xff]
      %v3116 = vld [vmem:[#allocation5 + $0x148] sm:$0xff]
      %v3117 = vld [vmem:[#allocation5 + $0x150] sm:$0xff]
      %v3118 = vld [vmem:[#allocation5 + $0x158] sm:$0xff]
      %v3119 = vld [vmem:[#allocation5 + $0x160] sm:$0xff]
      %v3120 = vld [vmem:[#allocation5 + $0x168] sm:$0xff]
      %v3121 = vld [vmem:[#allocation5 + $0x170] sm:$0xff]
      %v3122 = vld [vmem:[#allocation5 + $0x178] sm:$0xff]
      %v3123 = vld [vmem:[#allocation5 + $0x180] sm:$0xff]
      %v3124 = vld [vmem:[#allocation5 + $0x188] sm:$0xff]
      %v3125 = vld [vmem:[#allocation5 + $0x190] sm:$0xff]
      %v3126 = vld [vmem:[#allocation5 + $0x198] sm:$0xff]
      %v3127 = vld [vmem:[#allocation5 + $0x1a0] sm:$0xff]
      %v3128 = vld [vmem:[#allocation5 + $0x1a8] sm:$0xff]
      %v3129 = vld [vmem:[#allocation5 + $0x1b0] sm:$0xff]
      %v3130 = vld [vmem:[#allocation5 + $0x1b8] sm:$0xff]
      %v3131 = vld [vmem:[#allocation5 + $0x1c0] sm:$0xff]
      %v3132 = vld [vmem:[#allocation5 + $0x1c8] sm:$0xff]
      %v3133 = vld [vmem:[#allocation5 + $0x1d0] sm:$0xff]
      %v3134 = vld [vmem:[#allocation5 + $0x1d8] sm:$0xff]
      %v3135 = vld [vmem:[#allocation5 + $0x1e0] sm:$0xff]
      %v3136 = vld [vmem:[#allocation5 + $0x1e8] sm:$0xff]
      %v3137 = vld [vmem:[#allocation5 + $0x1f0] sm:$0xff]
      %v3138 = vld [vmem:[#allocation5 + $0x1f8] sm:$0xff]
      %v3139 = vld [vmem:[#allocation5 + $0x200] sm:$0xff]
      %v3140 = vld [vmem:[#allocation5 + $0x208] sm:$0xff]
      %v3141 = vld [vmem:[#allocation5 + $0x210] sm:$0xff]
      %v3142 = vld [vmem:[#allocation5 + $0x218] sm:$0xff]
      %v3143 = vld [vmem:[#allocation5 + $0x220] sm:$0xff]
      %v3144 = vld [vmem:[#allocation5 + $0x228] sm:$0xff]
      %v3145 = vld [vmem:[#allocation5 + $0x230] sm:$0xff]
      %v3146 = vld [vmem:[#allocation5 + $0x238] sm:$0xff]
      %v3147 = vld [vmem:[#allocation5 + $0x240] sm:$0xff]
      %v3148 = vld [vmem:[#allocation5 + $0x248] sm:$0xff]
      %v3149 = vld [vmem:[#allocation5 + $0x250] sm:$0xff]
      %v3150 = vld [vmem:[#allocation5 + $0x258] sm:$0xff]
      %v3151 = vld [vmem:[#allocation5 + $0x260] sm:$0xff]
      %v3152 = vld [vmem:[#allocation5 + $0x268] sm:$0xff]
      %v3153 = vld [vmem:[#allocation5 + $0x270] sm:$0xff]
      %v3154 = vld [vmem:[#allocation5 + $0x278] sm:$0xff]
      %v3155 = vld [vmem:[#allocation5 + $0x280] sm:$0xff]
      %v3156 = vld [vmem:[#allocation5 + $0x288] sm:$0xff]
      %v3157 = vld [vmem:[#allocation5 + $0x290] sm:$0xff]
      %v3158 = vld [vmem:[#allocation5 + $0x298] sm:$0xff]
      %v3159 = vld [vmem:[#allocation5 + $0x2a0] sm:$0xff]
      %v3160 = vld [vmem:[#allocation5 + $0x2a8] sm:$0xff]
      %v3161 = vld [vmem:[#allocation5 + $0x2b0] sm:$0xff]
      %v3162 = vld [vmem:[#allocation5 + $0x2b8] sm:$0xff]
      %v3163 = vld [vmem:[#allocation5 + $0x2c0] sm:$0xff]
      %v3164 = vld [vmem:[#allocation5 + $0x2c8] sm:$0xff]
      %v3165 = vld [vmem:[#allocation5 + $0x2d0] sm:$0xff]
      %v3166 = vld [vmem:[#allocation5 + $0x2d8] sm:$0xff]
      %v3167 = vld [vmem:[#allocation5 + $0x2e0] sm:$0xff]
      %v3168 = vld [vmem:[#allocation5 + $0x2e8] sm:$0xff]
      %v3169 = vld [vmem:[#allocation5 + $0x2f0] sm:$0xff]
      %v3170 = vld [vmem:[#allocation5 + $0x2f8] sm:$0xff]
      %v3171 = vld [vmem:[#allocation5 + $0x300] sm:$0xff]
      %v3172 = vld [vmem:[#allocation5 + $0x308] sm:$0xff]
      %v3173 = vld [vmem:[#allocation5 + $0x310] sm:$0xff]
      %v3174 = vld [vmem:[#allocation5 + $0x318] sm:$0xff]
      %v3175 = vld [vmem:[#allocation5 + $0x320] sm:$0xff]
      %v3176 = vld [vmem:[#allocation5 + $0x328] sm:$0xff]
      %v3177 = vld [vmem:[#allocation5 + $0x330] sm:$0xff]
      %v3178 = vld [vmem:[#allocation5 + $0x338] sm:$0xff]
      %v3179 = vld [vmem:[#allocation5 + $0x340] sm:$0xff]
      %v3180 = vld [vmem:[#allocation5 + $0x348] sm:$0xff]
      %v3181 = vld [vmem:[#allocation5 + $0x350] sm:$0xff]
      %v3182 = vld [vmem:[#allocation5 + $0x358] sm:$0xff]
      %v3183 = vld [vmem:[#allocation5 + $0x360] sm:$0xff]
      %v3184 = vld [vmem:[#allocation5 + $0x368] sm:$0xff]
      %v3185 = vld [vmem:[#allocation5 + $0x370] sm:$0xff]
      %v3186 = vld [vmem:[#allocation5 + $0x378] sm:$0xff]
      %v3187 = vld [vmem:[#allocation5 + $0x380] sm:$0xff]
      %v3188 = vld [vmem:[#allocation5 + $0x388] sm:$0xff]
      %v3189 = vld [vmem:[#allocation5 + $0x390] sm:$0xff]
      %v3190 = vld [vmem:[#allocation5 + $0x398] sm:$0xff]
      %v3191 = vld [vmem:[#allocation5 + $0x3a0] sm:$0xff]
      %v3192 = vld [vmem:[#allocation5 + $0x3a8] sm:$0xff]
      %v3193 = vld [vmem:[#allocation5 + $0x3b0] sm:$0xff]
      %v3194 = vld [vmem:[#allocation5 + $0x3b8] sm:$0xff]
      %v3195 = vld [vmem:[#allocation5 + $0x3c0] sm:$0xff]
      %v3196 = vld [vmem:[#allocation5 + $0x3c8] sm:$0xff]
      %v3197 = vld [vmem:[#allocation5 + $0x3d0] sm:$0xff]
      %v3198 = vld [vmem:[#allocation5 + $0x3d8] sm:$0xff]
      %v3199 = vld [vmem:[#allocation5 + $0x3e0] sm:$0xff]
      %v3200 = vld [vmem:[#allocation5 + $0x3e8] sm:$0xff]
      %v3201 = vld [vmem:[#allocation5 + $0x3f0] sm:$0xff]
      %v3202 = vld [vmem:[#allocation5 + $0x3f8] sm:$0xff]
      %v3203 = vld [vmem:[#allocation5 + $0x400] sm:$0xff]
      %v3204 = vld [vmem:[#allocation5 + $0x408] sm:$0xff]
      %v3205 = vld [vmem:[#allocation5 + $0x410] sm:$0xff]
      %v3206 = vld [vmem:[#allocation5 + $0x418] sm:$0xff]
      %v3207 = vld [vmem:[#allocation5 + $0x420] sm:$0xff]
      %v3208 = vld [vmem:[#allocation5 + $0x428] sm:$0xff]
      %v3209 = vld [vmem:[#allocation5 + $0x430] sm:$0xff]
      %v3210 = vld [vmem:[#allocation5 + $0x438] sm:$0xff]
      %v3211 = vld [vmem:[#allocation5 + $0x440] sm:$0xff]
      %v3212 = vld [vmem:[#allocation5 + $0x448] sm:$0xff]
      %v3213 = vld [vmem:[#allocation5 + $0x450] sm:$0xff]
      %v3214 = vld [vmem:[#allocation5 + $0x458] sm:$0xff]
      %v3215 = vld [vmem:[#allocation5 + $0x460] sm:$0xff]
      %v3216 = vld [vmem:[#allocation5 + $0x468] sm:$0xff]
      %v3217 = vld [vmem:[#allocation5 + $0x470] sm:$0xff]
      %v3218 = vld [vmem:[#allocation5 + $0x478] sm:$0xff]
      %v3219 = vld [vmem:[#allocation5 + $0x480] sm:$0xff]
      %v3220 = vld [vmem:[#allocation5 + $0x488] sm:$0xff]
      %v3221 = vld [vmem:[#allocation5 + $0x490] sm:$0xff]
      %v3222 = vld [vmem:[#allocation5 + $0x498] sm:$0xff]
      %v3223 = vld [vmem:[#allocation5 + $0x4a0] sm:$0xff]
      %v3224 = vld [vmem:[#allocation5 + $0x4a8] sm:$0xff]
      %v3225 = vld [vmem:[#allocation5 + $0x4b0] sm:$0xff]
      %v3226 = vld [vmem:[#allocation5 + $0x4b8] sm:$0xff]
      %v3227 = vld [vmem:[#allocation5 + $0x4c0] sm:$0xff]
      %v3228 = vld [vmem:[#allocation5 + $0x4c8] sm:$0xff]
      %v3229 = vld [vmem:[#allocation5 + $0x4d0] sm:$0xff]
      %v3230 = vld [vmem:[#allocation5 + $0x4d8] sm:$0xff]
      %v3231 = vld [vmem:[#allocation5 + $0x4e0] sm:$0xff]
      %v3232 = vld [vmem:[#allocation5 + $0x4e8] sm:$0xff]
      %v3233 = vld [vmem:[#allocation5 + $0x4f0] sm:$0xff]
      %v3234 = vld [vmem:[#allocation5 + $0x4f8] sm:$0xff]
      %v3235 = vld [vmem:[#allocation5 + $0x500] sm:$0xff]
      %v3236 = vld [vmem:[#allocation5 + $0x508] sm:$0xff]
      %v3237 = vld [vmem:[#allocation5 + $0x510] sm:$0xff]
      %v3238 = vld [vmem:[#allocation5 + $0x518] sm:$0xff]
      %v3239 = vld [vmem:[#allocation5 + $0x520] sm:$0xff]
      %v3240 = vld [vmem:[#allocation5 + $0x528] sm:$0xff]
      %v3241 = vld [vmem:[#allocation5 + $0x530] sm:$0xff]
      %v3242 = vld [vmem:[#allocation5 + $0x538] sm:$0xff]
      %v3243 = vld [vmem:[#allocation5 + $0x540] sm:$0xff]
      %v3244 = vld [vmem:[#allocation5 + $0x548] sm:$0xff]
      %v3245 = vld [vmem:[#allocation5 + $0x550] sm:$0xff]
      %v3246 = vld [vmem:[#allocation5 + $0x558] sm:$0xff]
      %v3247 = vld [vmem:[#allocation5 + $0x560] sm:$0xff]
      %v3248 = vld [vmem:[#allocation5 + $0x568] sm:$0xff]
      %v3249 = vld [vmem:[#allocation5 + $0x570] sm:$0xff]
      %v3250 = vld [vmem:[#allocation5 + $0x578] sm:$0xff]
      %v3251 = vld [vmem:[#allocation5 + $0x580] sm:$0xff]
      %v3252 = vld [vmem:[#allocation5 + $0x588] sm:$0xff]
      %v3253 = vld [vmem:[#allocation5 + $0x590] sm:$0xff]
      %v3254 = vld [vmem:[#allocation5 + $0x598] sm:$0xff]
      %v3255 = vld [vmem:[#allocation5 + $0x5a0] sm:$0xff]
      %v3256 = vld [vmem:[#allocation5 + $0x5a8] sm:$0xff]
      %v3257 = vld [vmem:[#allocation5 + $0x5b0] sm:$0xff]
      %v3258 = vld [vmem:[#allocation5 + $0x5b8] sm:$0xff]
      %v3259 = vld [vmem:[#allocation5 + $0x5c0] sm:$0xff]
      %v3260 = vld [vmem:[#allocation5 + $0x5c8] sm:$0xff]
      %v3261 = vld [vmem:[#allocation5 + $0x5d0] sm:$0xff]
      %v3262 = vld [vmem:[#allocation5 + $0x5d8] sm:$0xff]
      %v3263 = vld [vmem:[#allocation5 + $0x5e0] sm:$0xff]
      %v3264 = vld [vmem:[#allocation5 + $0x5e8] sm:$0xff]
      %v3265 = vld [vmem:[#allocation5 + $0x5f0] sm:$0xff]
      %v3266 = vld [vmem:[#allocation5 + $0x5f8] sm:$0xff]
      %v3267 = vld [vmem:[#allocation5 + $0x600] sm:$0xff]
      %v3268 = vld [vmem:[#allocation5 + $0x608] sm:$0xff]
      %v3269 = vld [vmem:[#allocation5 + $0x610] sm:$0xff]
      %v3270 = vld [vmem:[#allocation5 + $0x618] sm:$0xff]
      %v3271 = vld [vmem:[#allocation5 + $0x620] sm:$0xff]
      %v3272 = vld [vmem:[#allocation5 + $0x628] sm:$0xff]
      %v3273 = vld [vmem:[#allocation5 + $0x630] sm:$0xff]
      %v3274 = vld [vmem:[#allocation5 + $0x638] sm:$0xff]
      %v3275 = vld [vmem:[#allocation5 + $0x640] sm:$0xff]
      %v3276 = vld [vmem:[#allocation5 + $0x648] sm:$0xff]
      %v3277 = vld [vmem:[#allocation5 + $0x650] sm:$0xff]
      %v3278 = vld [vmem:[#allocation5 + $0x658] sm:$0xff]
      %v3279 = vld [vmem:[#allocation5 + $0x660] sm:$0xff]
      %v3280 = vld [vmem:[#allocation5 + $0x668] sm:$0xff]
      %v3281 = vld [vmem:[#allocation5 + $0x670] sm:$0xff]
      %v3282 = vld [vmem:[#allocation5 + $0x678] sm:$0xff]
      %v3283 = vld [vmem:[#allocation5 + $0x680] sm:$0xff]
      %v3284 = vld [vmem:[#allocation5 + $0x688] sm:$0xff]
      %v3285 = vld [vmem:[#allocation5 + $0x690] sm:$0xff]
      %v3286 = vld [vmem:[#allocation5 + $0x698] sm:$0xff]
      %v3287 = vld [vmem:[#allocation5 + $0x6a0] sm:$0xff]
      %v3288 = vld [vmem:[#allocation5 + $0x6a8] sm:$0xff]
      %v3289 = vld [vmem:[#allocation5 + $0x6b0] sm:$0xff]
      %v3290 = vld [vmem:[#allocation5 + $0x6b8] sm:$0xff]
      %v3291 = vld [vmem:[#allocation5 + $0x6c0] sm:$0xff]
      %v3292 = vld [vmem:[#allocation5 + $0x6c8] sm:$0xff]
      %v3293 = vld [vmem:[#allocation5 + $0x6d0] sm:$0xff]
      %v3294 = vld [vmem:[#allocation5 + $0x6d8] sm:$0xff]
      %v3295 = vld [vmem:[#allocation5 + $0x6e0] sm:$0xff]
      %v3296 = vld [vmem:[#allocation5 + $0x6e8] sm:$0xff]
      %v3297 = vld [vmem:[#allocation5 + $0x6f0] sm:$0xff]
      %v3298 = vld [vmem:[#allocation5 + $0x6f8] sm:$0xff]
      %v3299 = vld [vmem:[#allocation5 + $0x700] sm:$0xff]
      %v3300 = vld [vmem:[#allocation5 + $0x708] sm:$0xff]
      %v3301 = vld [vmem:[#allocation5 + $0x710] sm:$0xff]
      %v3302 = vld [vmem:[#allocation5 + $0x718] sm:$0xff]
      %v3303 = vld [vmem:[#allocation5 + $0x720] sm:$0xff]
      %v3304 = vld [vmem:[#allocation5 + $0x728] sm:$0xff]
      %v3305 = vld [vmem:[#allocation5 + $0x730] sm:$0xff]
      %v3306 = vld [vmem:[#allocation5 + $0x738] sm:$0xff]
      %v3307 = vld [vmem:[#allocation5 + $0x740] sm:$0xff]
      %v3308 = vld [vmem:[#allocation5 + $0x748] sm:$0xff]
      %v3309 = vld [vmem:[#allocation5 + $0x750] sm:$0xff]
      %v3310 = vld [vmem:[#allocation5 + $0x758] sm:$0xff]
      %v3311 = vld [vmem:[#allocation5 + $0x760] sm:$0xff]
      %v3312 = vld [vmem:[#allocation5 + $0x768] sm:$0xff]
      %v3313 = vld [vmem:[#allocation5 + $0x770] sm:$0xff]
      %v3314 = vld [vmem:[#allocation5 + $0x778] sm:$0xff]
      %v3315 = vld [vmem:[#allocation5 + $0x780] sm:$0xff]
      %v3316 = vld [vmem:[#allocation5 + $0x788] sm:$0xff]
      %v3317 = vld [vmem:[#allocation5 + $0x790] sm:$0xff]
      %v3318 = vld [vmem:[#allocation5 + $0x798] sm:$0xff]
      %v3319 = vld [vmem:[#allocation5 + $0x7a0] sm:$0xff]
      %v3320 = vld [vmem:[#allocation5 + $0x7a8] sm:$0xff]
      %v3321 = vld [vmem:[#allocation5 + $0x7b0] sm:$0xff]
      %v3322 = vld [vmem:[#allocation5 + $0x7b8] sm:$0xff]
      %v3323 = vld [vmem:[#allocation5 + $0x7c0] sm:$0xff]
      %v3324 = vld [vmem:[#allocation5 + $0x7c8] sm:$0xff]
      %v3325 = vld [vmem:[#allocation5 + $0x7d0] sm:$0xff]
      %v3326 = vld [vmem:[#allocation5 + $0x7d8] sm:$0xff]
      %v3327 = vld [vmem:[#allocation5 + $0x7e0] sm:$0xff]
      %v3328 = vld [vmem:[#allocation5 + $0x7e8] sm:$0xff]
      %v3329 = vld [vmem:[#allocation5 + $0x7f0] sm:$0xff]
      %v3330 = vld [vmem:[#allocation5 + $0x7f8] sm:$0xff]
      %v3331 = vld [vmem:[#allocation5 + $0x800] sm:$0xff]
      %v3332 = vld [vmem:[#allocation5 + $0x808] sm:$0xff]
      %v3333 = vld [vmem:[#allocation5 + $0x810] sm:$0xff]
      %v3334 = vld [vmem:[#allocation5 + $0x818] sm:$0xff]
      %v3335 = vld [vmem:[#allocation5 + $0x820] sm:$0xff]
      %v3336 = vld [vmem:[#allocation5 + $0x828] sm:$0xff]
      %v3337 = vld [vmem:[#allocation5 + $0x830] sm:$0xff]
      %v3338 = vld [vmem:[#allocation5 + $0x838] sm:$0xff]
      %v3339 = vld [vmem:[#allocation5 + $0x840] sm:$0xff]
      %v3340 = vld [vmem:[#allocation5 + $0x848] sm:$0xff]
      %v3341 = vld [vmem:[#allocation5 + $0x850] sm:$0xff]
      %v3342 = vld [vmem:[#allocation5 + $0x858] sm:$0xff]
      %v3343 = vld [vmem:[#allocation5 + $0x860] sm:$0xff]
      %v3344 = vld [vmem:[#allocation5 + $0x868] sm:$0xff]
      %v3345 = vld [vmem:[#allocation5 + $0x870] sm:$0xff]
      %v3346 = vld [vmem:[#allocation5 + $0x878] sm:$0xff]
      %v3347 = vld [vmem:[#allocation5 + $0x880] sm:$0xff]
      %v3348 = vld [vmem:[#allocation5 + $0x888] sm:$0xff]
      %v3349 = vld [vmem:[#allocation5 + $0x890] sm:$0xff]
      %v3350 = vld [vmem:[#allocation5 + $0x898] sm:$0xff]
      %v3351 = vld [vmem:[#allocation5 + $0x8a0] sm:$0xff]
      %v3352 = vld [vmem:[#allocation5 + $0x8a8] sm:$0xff]
      %v3353 = vld [vmem:[#allocation5 + $0x8b0] sm:$0xff]
      %v3354 = vld [vmem:[#allocation5 + $0x8b8] sm:$0xff]
      %v3355 = vld [vmem:[#allocation5 + $0x8c0] sm:$0xff]
      %v3356 = vld [vmem:[#allocation5 + $0x8c8] sm:$0xff]
      %v3357 = vld [vmem:[#allocation5 + $0x8d0] sm:$0xff]
      %v3358 = vld [vmem:[#allocation5 + $0x8d8] sm:$0xff]
      %v3359 = vld [vmem:[#allocation5 + $0x8e0] sm:$0xff]
      %v3360 = vld [vmem:[#allocation5 + $0x8e8] sm:$0xff]
      %v3361 = vld [vmem:[#allocation5 + $0x8f0] sm:$0xff]
      %v3362 = vld [vmem:[#allocation5 + $0x8f8] sm:$0xff]
      %v3363 = vld [vmem:[%s2] sm:$0xff]
      %v3364 = vld [vmem:[%s2 + $0x8] sm:$0xff]
      %v3365 = vld [vmem:[%s2 + $0x10] sm:$0xff]
      %v3366 = vld [vmem:[%s2 + $0x18] sm:$0xff]
      %v3367 = vld [vmem:[%s2 + $0x20] sm:$0xff]
      %v3368 = vld [vmem:[%s2 + $0x28] sm:$0xff]
      %v3369 = vld [vmem:[%s2 + $0x30] sm:$0xff]
      %v3370 = vld [vmem:[%s2 + $0x38] sm:$0xff]
      %v3371 = vld [vmem:[%s2 + $0x40] sm:$0xff]
      %v3372 = vld [vmem:[%s2 + $0x48] sm:$0xff]
      %v3373 = vld [vmem:[%s2 + $0x50] sm:$0xff]
      %v3374 = vld [vmem:[%s2 + $0x58] sm:$0xff]
      %v3375 = vld [vmem:[%s2 + $0x60] sm:$0xff]
      %v3376 = vld [vmem:[%s2 + $0x68] sm:$0xff]
      %v3377 = vld [vmem:[%s2 + $0x70] sm:$0xff]
      %v3378 = vld [vmem:[%s2 + $0x78] sm:$0xff]
      %v3379 = vld [vmem:[%s2 + $0x80] sm:$0xff]
      %v3380 = vld [vmem:[%s2 + $0x88] sm:$0xff]
      %v3381 = vld [vmem:[%s2 + $0x90] sm:$0xff]
      %v3382 = vld [vmem:[%s2 + $0x98] sm:$0xff]
      %v3383 = vld [vmem:[%s2 + $0xa0] sm:$0xff]
      %v3384 = vld [vmem:[%s2 + $0xa8] sm:$0xff]
      %v3385 = vld [vmem:[%s2 + $0xb0] sm:$0xff]
      %v3386 = vld [vmem:[%s2 + $0xb8] sm:$0xff]
      %v3387 = vld [vmem:[%s2 + $0xc0] sm:$0xff]
      %v3388 = vld [vmem:[%s2 + $0xc8] sm:$0xff]
      %v3389 = vld [vmem:[%s2 + $0xd0] sm:$0xff]
      %v3390 = vld [vmem:[%s2 + $0xd8] sm:$0xff]
      %v3391 = vld [vmem:[%s2 + $0xe0] sm:$0xff]
      %v3392 = vld [vmem:[%s2 + $0xe8] sm:$0xff]
      %v3393 = vld [vmem:[%s2 + $0xf0] sm:$0xff]
      %v3394 = vld [vmem:[%s2 + $0xf8] sm:$0xff]
      %v3395 = vld [vmem:[%s2 + $0x100] sm:$0xff]
      %v3396 = vld [vmem:[%s2 + $0x108] sm:$0xff]
      %v3397 = vld [vmem:[%s2 + $0x110] sm:$0xff]
      %v3398 = vld [vmem:[%s2 + $0x118] sm:$0xff]
      %v3399 = vld [vmem:[%s2 + $0x120] sm:$0xff]
      %v3400 = vld [vmem:[%s2 + $0x128] sm:$0xff]
      %v3401 = vld [vmem:[%s2 + $0x130] sm:$0xff]
      %v3402 = vld [vmem:[%s2 + $0x138] sm:$0xff]
      %v3403 = vld [vmem:[%s2 + $0x140] sm:$0xff]
      %v3404 = vld [vmem:[%s2 + $0x148] sm:$0xff]
      %v3405 = vld [vmem:[%s2 + $0x150] sm:$0xff]
      %v3406 = vld [vmem:[%s2 + $0x158] sm:$0xff]
      %v3407 = vld [vmem:[%s2 + $0x160] sm:$0xff]
      %v3408 = vld [vmem:[%s2 + $0x168] sm:$0xff]
      %v3409 = vld [vmem:[%s2 + $0x170] sm:$0xff]
      %v3410 = vld [vmem:[%s2 + $0x178] sm:$0xff]
      %v3411 = vld [vmem:[%s2 + $0x180] sm:$0xff]
      %v3412 = vld [vmem:[%s2 + $0x188] sm:$0xff]
      %v3413 = vld [vmem:[%s2 + $0x190] sm:$0xff]
      %v3414 = vld [vmem:[%s2 + $0x198] sm:$0xff]
      %v3415 = vld [vmem:[%s2 + $0x1a0] sm:$0xff]
      %v3416 = vld [vmem:[%s2 + $0x1a8] sm:$0xff]
      %v3417 = vld [vmem:[%s2 + $0x1b0] sm:$0xff]
      %v3418 = vld [vmem:[%s2 + $0x1b8] sm:$0xff]
      %v3419 = vld [vmem:[%s2 + $0x1c0] sm:$0xff]
      %v3420 = vld [vmem:[%s2 + $0x1c8] sm:$0xff]
      %v3421 = vld [vmem:[%s2 + $0x1d0] sm:$0xff]
      %v3422 = vld [vmem:[%s2 + $0x1d8] sm:$0xff]
      %v3423 = vld [vmem:[%s2 + $0x1e0] sm:$0xff]
      %v3424 = vld [vmem:[%s2 + $0x1e8] sm:$0xff]
      %v3425 = vld [vmem:[%s2 + $0x1f0] sm:$0xff]
      %v3426 = vld [vmem:[%s2 + $0x1f8] sm:$0xff]
      %v3427 = vld [vmem:[%s2 + $0x200] sm:$0xff]
      %v3428 = vld [vmem:[%s2 + $0x208] sm:$0xff]
      %v3429 = vld [vmem:[%s2 + $0x210] sm:$0xff]
      %v3430 = vld [vmem:[%s2 + $0x218] sm:$0xff]
      %v3431 = vld [vmem:[%s2 + $0x220] sm:$0xff]
      %v3432 = vld [vmem:[%s2 + $0x228] sm:$0xff]
      %v3433 = vld [vmem:[%s2 + $0x230] sm:$0xff]
      %v3434 = vld [vmem:[%s2 + $0x238] sm:$0xff]
      %v3435 = vld [vmem:[%s2 + $0x240] sm:$0xff]
      %v3436 = vld [vmem:[%s2 + $0x248] sm:$0xff]
      %v3437 = vld [vmem:[%s2 + $0x250] sm:$0xff]
      %v3438 = vld [vmem:[%s2 + $0x258] sm:$0xff]
      %v3439 = vld [vmem:[%s2 + $0x260] sm:$0xff]
      %v3440 = vld [vmem:[%s2 + $0x268] sm:$0xff]
      %v3441 = vld [vmem:[%s2 + $0x270] sm:$0xff]
      %v3442 = vld [vmem:[%s2 + $0x278] sm:$0xff]
      %v3443 = vld [vmem:[%s2 + $0x280] sm:$0xff]
      %v3444 = vld [vmem:[%s2 + $0x288] sm:$0xff]
      %v3445 = vld [vmem:[%s2 + $0x290] sm:$0xff]
      %v3446 = vld [vmem:[%s2 + $0x298] sm:$0xff]
      %v3447 = vld [vmem:[%s2 + $0x2a0] sm:$0xff]
      %v3448 = vld [vmem:[%s2 + $0x2a8] sm:$0xff]
      %v3449 = vld [vmem:[%s2 + $0x2b0] sm:$0xff]
      %v3450 = vld [vmem:[%s2 + $0x2b8] sm:$0xff]
      %v3451 = vld [vmem:[%s2 + $0x2c0] sm:$0xff]
      %v3452 = vld [vmem:[%s2 + $0x2c8] sm:$0xff]
      %v3453 = vld [vmem:[%s2 + $0x2d0] sm:$0xff]
      %v3454 = vld [vmem:[%s2 + $0x2d8] sm:$0xff]
      %v3455 = vld [vmem:[%s2 + $0x2e0] sm:$0xff]
      %v3456 = vld [vmem:[%s2 + $0x2e8] sm:$0xff]
      %v3457 = vld [vmem:[%s2 + $0x2f0] sm:$0xff]
      %v3458 = vld [vmem:[%s2 + $0x2f8] sm:$0xff]
      %v3459 = vld [vmem:[%s2 + $0x300] sm:$0xff]
      %v3460 = vld [vmem:[%s2 + $0x308] sm:$0xff]
      %v3461 = vld [vmem:[%s2 + $0x310] sm:$0xff]
      %v3462 = vld [vmem:[%s2 + $0x318] sm:$0xff]
      %v3463 = vld [vmem:[%s2 + $0x320] sm:$0xff]
      %v3464 = vld [vmem:[%s2 + $0x328] sm:$0xff]
      %v3465 = vld [vmem:[%s2 + $0x330] sm:$0xff]
      %v3466 = vld [vmem:[%s2 + $0x338] sm:$0xff]
      %v3467 = vld [vmem:[%s2 + $0x340] sm:$0xff]
      %v3468 = vld [vmem:[%s2 + $0x348] sm:$0xff]
      %v3469 = vld [vmem:[%s2 + $0x350] sm:$0xff]
      %v3470 = vld [vmem:[%s2 + $0x358] sm:$0xff]
      %v3471 = vld [vmem:[%s2 + $0x360] sm:$0xff]
      %v3472 = vld [vmem:[%s2 + $0x368] sm:$0xff]
      %v3473 = vld [vmem:[%s2 + $0x370] sm:$0xff]
      %v3474 = vld [vmem:[%s2 + $0x378] sm:$0xff]
      %v3475 = vld [vmem:[%s2 + $0x380] sm:$0xff]
      %v3476 = vld [vmem:[%s2 + $0x388] sm:$0xff]
      %v3477 = vld [vmem:[%s2 + $0x390] sm:$0xff]
      %v3478 = vld [vmem:[%s2 + $0x398] sm:$0xff]
      %v3479 = vld [vmem:[%s2 + $0x3a0] sm:$0xff]
      %v3480 = vld [vmem:[%s2 + $0x3a8] sm:$0xff]
      %v3481 = vld [vmem:[%s2 + $0x3b0] sm:$0xff]
      %v3482 = vld [vmem:[%s2 + $0x3b8] sm:$0xff]
      %v3483 = vld [vmem:[%s2 + $0x3c0] sm:$0xff]
      %v3484 = vld [vmem:[%s2 + $0x3c8] sm:$0xff]
      %v3485 = vld [vmem:[%s2 + $0x3d0] sm:$0xff]
      %v3486 = vld [vmem:[%s2 + $0x3d8] sm:$0xff]
      %v3487 = vld [vmem:[%s2 + $0x3e0] sm:$0xff]
      %v3488 = vld [vmem:[%s2 + $0x3e8] sm:$0xff]
      %v3489 = vld [vmem:[%s2 + $0x3f0] sm:$0xff]
      %v3490 = vld [vmem:[%s2 + $0x3f8] sm:$0xff]
      %v3491 = vld [vmem:[%s2 + $0x400] sm:$0xff]
      %v3492 = vld [vmem:[%s2 + $0x408] sm:$0xff]
      %v3493 = vld [vmem:[%s2 + $0x410] sm:$0xff]
      %v3494 = vld [vmem:[%s2 + $0x418] sm:$0xff]
      %v3495 = vld [vmem:[%s2 + $0x420] sm:$0xff]
      %v3496 = vld [vmem:[%s2 + $0x428] sm:$0xff]
      %v3497 = vld [vmem:[%s2 + $0x430] sm:$0xff]
      %v3498 = vld [vmem:[%s2 + $0x438] sm:$0xff]
      %v3499 = vld [vmem:[%s2 + $0x440] sm:$0xff]
      %v3500 = vld [vmem:[%s2 + $0x448] sm:$0xff]
      %v3501 = vld [vmem:[%s2 + $0x450] sm:$0xff]
      %v3502 = vld [vmem:[%s2 + $0x458] sm:$0xff]
      %v3503 = vld [vmem:[%s2 + $0x460] sm:$0xff]
      %v3504 = vld [vmem:[%s2 + $0x468] sm:$0xff]
      %v3505 = vld [vmem:[%s2 + $0x470] sm:$0xff]
      %v3506 = vld [vmem:[%s2 + $0x478] sm:$0xff]
      %v3507 = vld [vmem:[%s302 + $0x8] sm:$0xff]
      %v3508 = vld [vmem:[%s302 + $0x10] sm:$0xff]
      %v3509 = vld [vmem:[%s302 + $0x28] sm:$0xff]
      %v3510 = vld [vmem:[%s302 + $0x30] sm:$0xff]
      %v3511 = vld [vmem:[%s302 + $0x48] sm:$0xff]
      %v3512 = vld [vmem:[%s302 + $0x50] sm:$0xff]
      %v3513 = vld [vmem:[%s302 + $0x68] sm:$0xff]
      %v3514 = vld [vmem:[%s302 + $0x70] sm:$0xff]
      %v3515 = vld [vmem:[%s302 + $0x88] sm:$0xff]
      %v3516 = vld [vmem:[%s302 + $0x90] sm:$0xff]
      %v3517 = vld [vmem:[%s302 + $0xa8] sm:$0xff]
      %v3518 = vld [vmem:[%s302 + $0xb0] sm:$0xff]
      %v3519 = vld [vmem:[%s302 + $0xc8] sm:$0xff]
      %v3520 = vld [vmem:[%s302 + $0xd0] sm:$0xff]
      %v3521 = vld [vmem:[%s302 + $0xe8] sm:$0xff]
      %v3522 = vld [vmem:[%s302 + $0xf0] sm:$0xff]
      %v3523 = vld [vmem:[%s302 + $0x108] sm:$0xff]
      %v3524 = vld [vmem:[%s302 + $0x110] sm:$0xff]
      %v3525 = vld [vmem:[%s302 + $0x128] sm:$0xff]
      %v3526 = vld [vmem:[%s302 + $0x130] sm:$0xff]
      %v3527 = vld [vmem:[%s302 + $0x148] sm:$0xff]
      %v3528 = vld [vmem:[%s302 + $0x150] sm:$0xff]
      %v3529 = vld [vmem:[%s302 + $0x168] sm:$0xff]
      %v3530 = vld [vmem:[%s302 + $0x170] sm:$0xff]
      %v3531 = vld [vmem:[%s302 + $0x188] sm:$0xff]
      %v3532 = vld [vmem:[%s302 + $0x190] sm:$0xff]
      %v3533 = vld [vmem:[%s302 + $0x1a8] sm:$0xff]
      %v3534 = vld [vmem:[%s302 + $0x1b0] sm:$0xff]
      %v3535 = vld [vmem:[%s302 + $0x1c8] sm:$0xff]
      %v3536 = vld [vmem:[%s302 + $0x1d0] sm:$0xff]
      %v3537 = vld [vmem:[%s302 + $0x1e8] sm:$0xff]
      %v3538 = vld [vmem:[%s302 + $0x1f0] sm:$0xff]
      %v3539 = vld [vmem:[%s3] sm:$0xff]
      %v3540 = vld [vmem:[%s3 + $0x8] sm:$0xff]
      %v3541 = vld [vmem:[%s3 + $0x10] sm:$0xff]
      %v3542 = vld [vmem:[%s3 + $0x18] sm:$0xff]
      %v3543 = vld [vmem:[%s3 + $0x20] sm:$0xff]
      %v3544 = vld [vmem:[%s3 + $0x28] sm:$0xff]
      %v3545 = vld [vmem:[%s3 + $0x30] sm:$0xff]
      %v3546 = vld [vmem:[%s3 + $0x38] sm:$0xff]
      %v3547 = vld [vmem:[%s3 + $0x40] sm:$0xff]
      %v3548 = vld [vmem:[%s3 + $0x48] sm:$0xff]
      %v3549 = vld [vmem:[%s3 + $0x50] sm:$0xff]
      %v3550 = vld [vmem:[%s3 + $0x58] sm:$0xff]
      %v3551 = vld [vmem:[%s3 + $0x60] sm:$0xff]
      %v3552 = vld [vmem:[%s3 + $0x68] sm:$0xff]
      %v3553 = vld [vmem:[%s3 + $0x70] sm:$0xff]
      %v3554 = vld [vmem:[%s3 + $0x78] sm:$0xff]
      %3555 = vmatpush.msra.mxu0 %v3554
      %3556 = vmatpush.msra.mxu0 %v3553
      %3557 = vmatpush.msra.mxu0 %v3552
      %3558 = vmatpush.msra.mxu0 %v3551
      %3559 = vmatpush.msra.mxu0 %v3550
      %3560 = vmatpush.msra.mxu0 %v3549
      %3561 = vmatpush.msra.mxu0 %v3548
      %3562 = vmatpush.msra.mxu0 %v3547
      %3563 = vmatpush.msra.mxu0 %v3546
      %3564 = vmatpush.msra.mxu0 %v3545
      %3565 = vmatpush.msra.mxu0 %v3544
      %3566 = vmatpush.msra.mxu0 %v3543
      %3567 = vmatpush.msra.mxu0 %v3542
      %3568 = vmatpush.msra.mxu0 %v3541
      %3569 = vmatpush.msra.mxu0 %v3540
      %3570 = vmatpush.msra.mxu0 %v3539
      %3571 = vmatmul.f32.gmra.mxu0 %v3507
      %v3572 = vpop.f32.mrf.mxu0
      %v3573 = vadd.f32 0.0, %v3572
      %3574 = vmatmul.f32.gmra.mxu0 %v3508
      %v3575 = vpop.f32.mrf.mxu0
      %v3576 = vadd.f32 0.0, %v3575
      %3577 = vmatmul.f32.gmra.mxu0 %v3509
      %v3578 = vpop.f32.mrf.mxu0
      %v3579 = vadd.f32 0.0, %v3578
      %3580 = vmatmul.f32.gmra.mxu0 %v3510
      %v3581 = vpop.f32.mrf.mxu0
      %v3582 = vadd.f32 0.0, %v3581
      %3583 = vmatmul.f32.gmra.mxu0 %v3511
      %v3584 = vpop.f32.mrf.mxu0
      %v3585 = vadd.f32 0.0, %v3584
      %3586 = vmatmul.f32.gmra.mxu0 %v3512
      %v3587 = vpop.f32.mrf.mxu0
      %v3588 = vadd.f32 0.0, %v3587
      %3589 = vmatmul.f32.gmra.mxu0 %v3513
      %v3590 = vpop.f32.mrf.mxu0
      %v3591 = vadd.f32 0.0, %v3590
      %3592 = vmatmul.f32.gmra.mxu0 %v3514
      %v3593 = vpop.f32.mrf.mxu0
      %v3594 = vadd.f32 0.0, %v3593
      %3595 = vmatmul.f32.gmra.mxu0 %v3515
      %v3596 = vpop.f32.mrf.mxu0
      %v3597 = vadd.f32 0.0, %v3596
      %3598 = vmatmul.f32.gmra.mxu0 %v3516
      %v3599 = vpop.f32.mrf.mxu0
      %v3600 = vadd.f32 0.0, %v3599
      %3601 = vmatmul.f32.gmra.mxu0 %v3517
      %v3602 = vpop.f32.mrf.mxu0
      %v3603 = vadd.f32 0.0, %v3602
      %3604 = vmatmul.f32.gmra.mxu0 %v3518
      %v3605 = vpop.f32.mrf.mxu0
      %v3606 = vadd.f32 0.0, %v3605
      %3607 = vmatmul.f32.gmra.mxu0 %v3519
      %v3608 = vpop.f32.mrf.mxu0
      %v3609 = vadd.f32 0.0, %v3608
      %3610 = vmatmul.f32.gmra.mxu0 %v3520
      %v3611 = vpop.f32.mrf.mxu0
      %v3612 = vadd.f32 0.0, %v3611
      %3613 = vmatmul.f32.gmra.mxu0 %v3521
      %v3614 = vpop.f32.mrf.mxu0
      %v3615 = vadd.f32 0.0, %v3614
      %3616 = vmatmul.f32.gmra.mxu0 %v3522
      %v3617 = vpop.f32.mrf.mxu0
      %v3618 = vadd.f32 0.0, %v3617
      %3619 = vmatmul.f32.gmra.mxu0 %v3523
      %v3620 = vpop.f32.mrf.mxu0
      %v3621 = vadd.f32 0.0, %v3620
      %3622 = vmatmul.f32.gmra.mxu0 %v3524
      %v3623 = vpop.f32.mrf.mxu0
      %v3624 = vadd.f32 0.0, %v3623
      %3625 = vmatmul.f32.gmra.mxu0 %v3525
      %v3626 = vpop.f32.mrf.mxu0
      %v3627 = vadd.f32 0.0, %v3626
      %3628 = vmatmul.f32.gmra.mxu0 %v3526
      %v3629 = vpop.f32.mrf.mxu0
      %v3630 = vadd.f32 0.0, %v3629
      %3631 = vmatmul.f32.gmra.mxu0 %v3527
      %v3632 = vpop.f32.mrf.mxu0
      %v3633 = vadd.f32 0.0, %v3632
      %3634 = vmatmul.f32.gmra.mxu0 %v3528
      %v3635 = vpop.f32.mrf.mxu0
      %v3636 = vadd.f32 0.0, %v3635
      %3637 = vmatmul.f32.gmra.mxu0 %v3529
      %v3638 = vpop.f32.mrf.mxu0
      %v3639 = vadd.f32 0.0, %v3638
      %3640 = vmatmul.f32.gmra.mxu0 %v3530
      %v3641 = vpop.f32.mrf.mxu0
      %v3642 = vadd.f32 0.0, %v3641
      %3643 = vmatmul.f32.gmra.mxu0 %v3531
      %v3644 = vpop.f32.mrf.mxu0
      %v3645 = vadd.f32 0.0, %v3644
      %3646 = vmatmul.f32.gmra.mxu0 %v3532
      %v3647 = vpop.f32.mrf.mxu0
      %v3648 = vadd.f32 0.0, %v3647
      %3649 = vmatmul.f32.gmra.mxu0 %v3533
      %v3650 = vpop.f32.mrf.mxu0
      %v3651 = vadd.f32 0.0, %v3650
      %3652 = vmatmul.f32.gmra.mxu0 %v3534
      %v3653 = vpop.f32.mrf.mxu0
      %v3654 = vadd.f32 0.0, %v3653
      %3655 = vmatmul.f32.gmra.mxu0 %v3535
      %v3656 = vpop.f32.mrf.mxu0
      %v3657 = vadd.f32 0.0, %v3656
      %3658 = vmatmul.f32.gmra.mxu0 %v3536
      %v3659 = vpop.f32.mrf.mxu0
      %v3660 = vadd.f32 0.0, %v3659
      %3661 = vmatmul.f32.gmra.mxu0 %v3537
      %v3662 = vpop.f32.mrf.mxu0
      %v3663 = vadd.f32 0.0, %v3662
      %3664 = vmatmul.f32.gmra.mxu0 %v3538
      %v3665 = vpop.f32.mrf.mxu0
      %v3666 = vadd.f32 0.0, %v3665
      %3667 = vdwg.mxu0
      %3668 = vmatpush.msra.mxu0 %v3378
      %3669 = vmatpush.msra.mxu0 %v3377
      %3670 = vmatpush.msra.mxu0 %v3376
      %3671 = vmatpush.msra.mxu0 %v3375
      %3672 = vmatpush.msra.mxu0 %v3374
      %3673 = vmatpush.msra.mxu0 %v3373
      %3674 = vmatpush.msra.mxu0 %v3372
      %3675 = vmatpush.msra.mxu0 %v3371
      %3676 = vmatpush.msra.mxu0 %v3370
      %3677 = vmatpush.msra.mxu0 %v3369
      %3678 = vmatpush.msra.mxu0 %v3368
      %3679 = vmatpush.msra.mxu0 %v3367
      %3680 = vmatpush.msra.mxu0 %v3366
      %3681 = vmatpush.msra.mxu0 %v3365
      %3682 = vmatpush.msra.mxu0 %v3364
      %3683 = vmatpush.msra.mxu0 %v3363
      %3684 = vmatmul.f32.gmra.mxu0 %v3075
      %v3685 = vpop.f32.mrf.mxu0
      %v3686 = vadd.f32 %v3573, %v3685
      %3687 = vmatmul.f32.gmra.mxu0 %v3084
      %v3688 = vpop.f32.mrf.mxu0
      %v3689 = vadd.f32 %v3576, %v3688
      %3690 = vmatmul.f32.gmra.mxu0 %v3093
      %v3691 = vpop.f32.mrf.mxu0
      %v3692 = vadd.f32 %v3579, %v3691
      %3693 = vmatmul.f32.gmra.mxu0 %v3102
      %v3694 = vpop.f32.mrf.mxu0
      %v3695 = vadd.f32 %v3582, %v3694
      %3696 = vmatmul.f32.gmra.mxu0 %v3111
      %v3697 = vpop.f32.mrf.mxu0
      %v3698 = vadd.f32 %v3585, %v3697
      %3699 = vmatmul.f32.gmra.mxu0 %v3120
      %v3700 = vpop.f32.mrf.mxu0
      %v3701 = vadd.f32 %v3588, %v3700
      %3702 = vmatmul.f32.gmra.mxu0 %v3129
      %v3703 = vpop.f32.mrf.mxu0
      %v3704 = vadd.f32 %v3591, %v3703
      %3705 = vmatmul.f32.gmra.mxu0 %v3138
      %v3706 = vpop.f32.mrf.mxu0
      %v3707 = vadd.f32 %v3594, %v3706
      %3708 = vmatmul.f32.gmra.mxu0 %v3147
      %v3709 = vpop.f32.mrf.mxu0
      %v3710 = vadd.f32 %v3597, %v3709
      %3711 = vmatmul.f32.gmra.mxu0 %v3156
      %v3712 = vpop.f32.mrf.mxu0
      %v3713 = vadd.f32 %v3600, %v3712
      %3714 = vmatmul.f32.gmra.mxu0 %v3165
      %v3715 = vpop.f32.mrf.mxu0
      %v3716 = vadd.f32 %v3603, %v3715
      %3717 = vmatmul.f32.gmra.mxu0 %v3174
      %v3718 = vpop.f32.mrf.mxu0
      %v3719 = vadd.f32 %v3606, %v3718
      %3720 = vmatmul.f32.gmra.mxu0 %v3183
      %v3721 = vpop.f32.mrf.mxu0
      %v3722 = vadd.f32 %v3609, %v3721
      %3723 = vmatmul.f32.gmra.mxu0 %v3192
      %v3724 = vpop.f32.mrf.mxu0
      %v3725 = vadd.f32 %v3612, %v3724
      %3726 = vmatmul.f32.gmra.mxu0 %v3201
      %v3727 = vpop.f32.mrf.mxu0
      %v3728 = vadd.f32 %v3615, %v3727
      %3729 = vmatmul.f32.gmra.mxu0 %v3210
      %v3730 = vpop.f32.mrf.mxu0
      %v3731 = vadd.f32 %v3618, %v3730
      %3732 = vmatmul.f32.gmra.mxu0 %v3219
      %v3733 = vpop.f32.mrf.mxu0
      %v3734 = vadd.f32 %v3621, %v3733
      %3735 = vmatmul.f32.gmra.mxu0 %v3228
      %v3736 = vpop.f32.mrf.mxu0
      %v3737 = vadd.f32 %v3624, %v3736
      %3738 = vmatmul.f32.gmra.mxu0 %v3237
      %v3739 = vpop.f32.mrf.mxu0
      %v3740 = vadd.f32 %v3627, %v3739
      %3741 = vmatmul.f32.gmra.mxu0 %v3246
      %v3742 = vpop.f32.mrf.mxu0
      %v3743 = vadd.f32 %v3630, %v3742
      %3744 = vmatmul.f32.gmra.mxu0 %v3255
      %v3745 = vpop.f32.mrf.mxu0
      %v3746 = vadd.f32 %v3633, %v3745
      %3747 = vmatmul.f32.gmra.mxu0 %v3264
      %v3748 = vpop.f32.mrf.mxu0
      %v3749 = vadd.f32 %v3636, %v3748
      %3750 = vmatmul.f32.gmra.mxu0 %v3273
      %v3751 = vpop.f32.mrf.mxu0
      %v3752 = vadd.f32 %v3639, %v3751
      %3753 = vmatmul.f32.gmra.mxu0 %v3282
      %v3754 = vpop.f32.mrf.mxu0
      %v3755 = vadd.f32 %v3642, %v3754
      %3756 = vmatmul.f32.gmra.mxu0 %v3291
      %v3757 = vpop.f32.mrf.mxu0
      %v3758 = vadd.f32 %v3645, %v3757
      %3759 = vmatmul.f32.gmra.mxu0 %v3300
      %v3760 = vpop.f32.mrf.mxu0
      %v3761 = vadd.f32 %v3648, %v3760
      %3762 = vmatmul.f32.gmra.mxu0 %v3309
      %v3763 = vpop.f32.mrf.mxu0
      %v3764 = vadd.f32 %v3651, %v3763
      %3765 = vmatmul.f32.gmra.mxu0 %v3318
      %v3766 = vpop.f32.mrf.mxu0
      %v3767 = vadd.f32 %v3654, %v3766
      %3768 = vmatmul.f32.gmra.mxu0 %v3327
      %v3769 = vpop.f32.mrf.mxu0
      %v3770 = vadd.f32 %v3657, %v3769
      %3771 = vmatmul.f32.gmra.mxu0 %v3336
      %v3772 = vpop.f32.mrf.mxu0
      %v3773 = vadd.f32 %v3660, %v3772
      %3774 = vmatmul.f32.gmra.mxu0 %v3345
      %v3775 = vpop.f32.mrf.mxu0
      %v3776 = vadd.f32 %v3663, %v3775
      %3777 = vmatmul.f32.gmra.mxu0 %v3354
      %v3778 = vpop.f32.mrf.mxu0
      %v3779 = vadd.f32 %v3666, %v3778
      %3780 = vdwg.mxu0
      %3781 = vmatpush.msra.mxu0 %v3394
      %3782 = vmatpush.msra.mxu0 %v3393
      %3783 = vmatpush.msra.mxu0 %v3392
      %3784 = vmatpush.msra.mxu0 %v3391
      %3785 = vmatpush.msra.mxu0 %v3390
      %3786 = vmatpush.msra.mxu0 %v3389
      %3787 = vmatpush.msra.mxu0 %v3388
      %3788 = vmatpush.msra.mxu0 %v3387
      %3789 = vmatpush.msra.mxu0 %v3386
      %3790 = vmatpush.msra.mxu0 %v3385
      %3791 = vmatpush.msra.mxu0 %v3384
      %3792 = vmatpush.msra.mxu0 %v3383
      %3793 = vmatpush.msra.mxu0 %v3382
      %3794 = vmatpush.msra.mxu0 %v3381
      %3795 = vmatpush.msra.mxu0 %v3380
      %3796 = vmatpush.msra.mxu0 %v3379
      %3797 = vmatmul.f32.gmra.mxu0 %v3076
      %v3798 = vpop.f32.mrf.mxu0
      %v3799 = vadd.f32 %v3686, %v3798
      %3800 = vmatmul.f32.gmra.mxu0 %v3085
      %v3801 = vpop.f32.mrf.mxu0
      %v3802 = vadd.f32 %v3689, %v3801
      %3803 = vmatmul.f32.gmra.mxu0 %v3094
      %v3804 = vpop.f32.mrf.mxu0
      %v3805 = vadd.f32 %v3692, %v3804
      %3806 = vmatmul.f32.gmra.mxu0 %v3103
      %v3807 = vpop.f32.mrf.mxu0
      %v3808 = vadd.f32 %v3695, %v3807
      %3809 = vmatmul.f32.gmra.mxu0 %v3112
      %v3810 = vpop.f32.mrf.mxu0
      %v3811 = vadd.f32 %v3698, %v3810
      %3812 = vmatmul.f32.gmra.mxu0 %v3121
      %v3813 = vpop.f32.mrf.mxu0
      %v3814 = vadd.f32 %v3701, %v3813
      %3815 = vmatmul.f32.gmra.mxu0 %v3130
      %v3816 = vpop.f32.mrf.mxu0
      %v3817 = vadd.f32 %v3704, %v3816
      %3818 = vmatmul.f32.gmra.mxu0 %v3139
      %v3819 = vpop.f32.mrf.mxu0
      %v3820 = vadd.f32 %v3707, %v3819
      %3821 = vmatmul.f32.gmra.mxu0 %v3148
      %v3822 = vpop.f32.mrf.mxu0
      %v3823 = vadd.f32 %v3710, %v3822
      %3824 = vmatmul.f32.gmra.mxu0 %v3157
      %v3825 = vpop.f32.mrf.mxu0
      %v3826 = vadd.f32 %v3713, %v3825
      %3827 = vmatmul.f32.gmra.mxu0 %v3166
      %v3828 = vpop.f32.mrf.mxu0
      %v3829 = vadd.f32 %v3716, %v3828
      %3830 = vmatmul.f32.gmra.mxu0 %v3175
      %v3831 = vpop.f32.mrf.mxu0
      %v3832 = vadd.f32 %v3719, %v3831
      %3833 = vmatmul.f32.gmra.mxu0 %v3184
      %v3834 = vpop.f32.mrf.mxu0
      %v3835 = vadd.f32 %v3722, %v3834
      %3836 = vmatmul.f32.gmra.mxu0 %v3193
      %v3837 = vpop.f32.mrf.mxu0
      %v3838 = vadd.f32 %v3725, %v3837
      %3839 = vmatmul.f32.gmra.mxu0 %v3202
      %v3840 = vpop.f32.mrf.mxu0
      %v3841 = vadd.f32 %v3728, %v3840
      %3842 = vmatmul.f32.gmra.mxu0 %v3211
      %v3843 = vpop.f32.mrf.mxu0
      %v3844 = vadd.f32 %v3731, %v3843
      %3845 = vmatmul.f32.gmra.mxu0 %v3220
      %v3846 = vpop.f32.mrf.mxu0
      %v3847 = vadd.f32 %v3734, %v3846
      %3848 = vmatmul.f32.gmra.mxu0 %v3229
      %v3849 = vpop.f32.mrf.mxu0
      %v3850 = vadd.f32 %v3737, %v3849
      %3851 = vmatmul.f32.gmra.mxu0 %v3238
      %v3852 = vpop.f32.mrf.mxu0
      %v3853 = vadd.f32 %v3740, %v3852
      %3854 = vmatmul.f32.gmra.mxu0 %v3247
      %v3855 = vpop.f32.mrf.mxu0
      %v3856 = vadd.f32 %v3743, %v3855
      %3857 = vmatmul.f32.gmra.mxu0 %v3256
      %v3858 = vpop.f32.mrf.mxu0
      %v3859 = vadd.f32 %v3746, %v3858
      %3860 = vmatmul.f32.gmra.mxu0 %v3265
      %v3861 = vpop.f32.mrf.mxu0
      %v3862 = vadd.f32 %v3749, %v3861
      %3863 = vmatmul.f32.gmra.mxu0 %v3274
      %v3864 = vpop.f32.mrf.mxu0
      %v3865 = vadd.f32 %v3752, %v3864
      %3866 = vmatmul.f32.gmra.mxu0 %v3283
      %v3867 = vpop.f32.mrf.mxu0
      %v3868 = vadd.f32 %v3755, %v3867
      %3869 = vmatmul.f32.gmra.mxu0 %v3292
      %v3870 = vpop.f32.mrf.mxu0
      %v3871 = vadd.f32 %v3758, %v3870
      %3872 = vmatmul.f32.gmra.mxu0 %v3301
      %v3873 = vpop.f32.mrf.mxu0
      %v3874 = vadd.f32 %v3761, %v3873
      %3875 = vmatmul.f32.gmra.mxu0 %v3310
      %v3876 = vpop.f32.mrf.mxu0
      %v3877 = vadd.f32 %v3764, %v3876
      %3878 = vmatmul.f32.gmra.mxu0 %v3319
      %v3879 = vpop.f32.mrf.mxu0
      %v3880 = vadd.f32 %v3767, %v3879
      %3881 = vmatmul.f32.gmra.mxu0 %v3328
      %v3882 = vpop.f32.mrf.mxu0
      %v3883 = vadd.f32 %v3770, %v3882
      %3884 = vmatmul.f32.gmra.mxu0 %v3337
      %v3885 = vpop.f32.mrf.mxu0
      %v3886 = vadd.f32 %v3773, %v3885
      %3887 = vmatmul.f32.gmra.mxu0 %v3346
      %v3888 = vpop.f32.mrf.mxu0
      %v3889 = vadd.f32 %v3776, %v3888
      %3890 = vmatmul.f32.gmra.mxu0 %v3355
      %v3891 = vpop.f32.mrf.mxu0
      %v3892 = vadd.f32 %v3779, %v3891
      %3893 = vdwg.mxu0
      %3894 = vmatpush.msra.mxu0 %v3410
      %3895 = vmatpush.msra.mxu0 %v3409
      %3896 = vmatpush.msra.mxu0 %v3408
      %3897 = vmatpush.msra.mxu0 %v3407
      %3898 = vmatpush.msra.mxu0 %v3406
      %3899 = vmatpush.msra.mxu0 %v3405
      %3900 = vmatpush.msra.mxu0 %v3404
      %3901 = vmatpush.msra.mxu0 %v3403
      %3902 = vmatpush.msra.mxu0 %v3402
      %3903 = vmatpush.msra.mxu0 %v3401
      %3904 = vmatpush.msra.mxu0 %v3400
      %3905 = vmatpush.msra.mxu0 %v3399
      %3906 = vmatpush.msra.mxu0 %v3398
      %3907 = vmatpush.msra.mxu0 %v3397
      %3908 = vmatpush.msra.mxu0 %v3396
      %3909 = vmatpush.msra.mxu0 %v3395
      %3910 = vmatmul.f32.gmra.mxu0 %v3077
      %v3911 = vpop.f32.mrf.mxu0
      %v3912 = vadd.f32 %v3799, %v3911
      %3913 = vmatmul.f32.gmra.mxu0 %v3086
      %v3914 = vpop.f32.mrf.mxu0
      %v3915 = vadd.f32 %v3802, %v3914
      %3916 = vmatmul.f32.gmra.mxu0 %v3095
      %v3917 = vpop.f32.mrf.mxu0
      %v3918 = vadd.f32 %v3805, %v3917
      %3919 = vmatmul.f32.gmra.mxu0 %v3104
      %v3920 = vpop.f32.mrf.mxu0
      %v3921 = vadd.f32 %v3808, %v3920
      %3922 = vmatmul.f32.gmra.mxu0 %v3113
      %v3923 = vpop.f32.mrf.mxu0
      %v3924 = vadd.f32 %v3811, %v3923
      %3925 = vmatmul.f32.gmra.mxu0 %v3122
      %v3926 = vpop.f32.mrf.mxu0
      %v3927 = vadd.f32 %v3814, %v3926
      %3928 = vmatmul.f32.gmra.mxu0 %v3131
      %v3929 = vpop.f32.mrf.mxu0
      %v3930 = vadd.f32 %v3817, %v3929
      %3931 = vmatmul.f32.gmra.mxu0 %v3140
      %v3932 = vpop.f32.mrf.mxu0
      %v3933 = vadd.f32 %v3820, %v3932
      %3934 = vmatmul.f32.gmra.mxu0 %v3149
      %v3935 = vpop.f32.mrf.mxu0
      %v3936 = vadd.f32 %v3823, %v3935
      %3937 = vmatmul.f32.gmra.mxu0 %v3158
      %v3938 = vpop.f32.mrf.mxu0
      %v3939 = vadd.f32 %v3826, %v3938
      %3940 = vmatmul.f32.gmra.mxu0 %v3167
      %v3941 = vpop.f32.mrf.mxu0
      %v3942 = vadd.f32 %v3829, %v3941
      %3943 = vmatmul.f32.gmra.mxu0 %v3176
      %v3944 = vpop.f32.mrf.mxu0
      %v3945 = vadd.f32 %v3832, %v3944
      %3946 = vmatmul.f32.gmra.mxu0 %v3185
      %v3947 = vpop.f32.mrf.mxu0
      %v3948 = vadd.f32 %v3835, %v3947
      %3949 = vmatmul.f32.gmra.mxu0 %v3194
      %v3950 = vpop.f32.mrf.mxu0
      %v3951 = vadd.f32 %v3838, %v3950
      %3952 = vmatmul.f32.gmra.mxu0 %v3203
      %v3953 = vpop.f32.mrf.mxu0
      %v3954 = vadd.f32 %v3841, %v3953
      %3955 = vmatmul.f32.gmra.mxu0 %v3212
      %v3956 = vpop.f32.mrf.mxu0
      %v3957 = vadd.f32 %v3844, %v3956
      %3958 = vmatmul.f32.gmra.mxu0 %v3221
      %v3959 = vpop.f32.mrf.mxu0
      %v3960 = vadd.f32 %v3847, %v3959
      %3961 = vmatmul.f32.gmra.mxu0 %v3230
      %v3962 = vpop.f32.mrf.mxu0
      %v3963 = vadd.f32 %v3850, %v3962
      %3964 = vmatmul.f32.gmra.mxu0 %v3239
      %v3965 = vpop.f32.mrf.mxu0
      %v3966 = vadd.f32 %v3853, %v3965
      %3967 = vmatmul.f32.gmra.mxu0 %v3248
      %v3968 = vpop.f32.mrf.mxu0
      %v3969 = vadd.f32 %v3856, %v3968
      %3970 = vmatmul.f32.gmra.mxu0 %v3257
      %v3971 = vpop.f32.mrf.mxu0
      %v3972 = vadd.f32 %v3859, %v3971
      %3973 = vmatmul.f32.gmra.mxu0 %v3266
      %v3974 = vpop.f32.mrf.mxu0
      %v3975 = vadd.f32 %v3862, %v3974
      %3976 = vmatmul.f32.gmra.mxu0 %v3275
      %v3977 = vpop.f32.mrf.mxu0
      %v3978 = vadd.f32 %v3865, %v3977
      %3979 = vmatmul.f32.gmra.mxu0 %v3284
      %v3980 = vpop.f32.mrf.mxu0
      %v3981 = vadd.f32 %v3868, %v3980
      %3982 = vmatmul.f32.gmra.mxu0 %v3293
      %v3983 = vpop.f32.mrf.mxu0
      %v3984 = vadd.f32 %v3871, %v3983
      %3985 = vmatmul.f32.gmra.mxu0 %v3302
      %v3986 = vpop.f32.mrf.mxu0
      %v3987 = vadd.f32 %v3874, %v3986
      %3988 = vmatmul.f32.gmra.mxu0 %v3311
      %v3989 = vpop.f32.mrf.mxu0
      %v3990 = vadd.f32 %v3877, %v3989
      %3991 = vmatmul.f32.gmra.mxu0 %v3320
      %v3992 = vpop.f32.mrf.mxu0
      %v3993 = vadd.f32 %v3880, %v3992
      %3994 = vmatmul.f32.gmra.mxu0 %v3329
      %v3995 = vpop.f32.mrf.mxu0
      %v3996 = vadd.f32 %v3883, %v3995
      %3997 = vmatmul.f32.gmra.mxu0 %v3338
      %v3998 = vpop.f32.mrf.mxu0
      %v3999 = vadd.f32 %v3886, %v3998
      %4000 = vmatmul.f32.gmra.mxu0 %v3347
      %v4001 = vpop.f32.mrf.mxu0
      %v4002 = vadd.f32 %v3889, %v4001
      %4003 = vmatmul.f32.gmra.mxu0 %v3356
      %v4004 = vpop.f32.mrf.mxu0
      %v4005 = vadd.f32 %v3892, %v4004
      %4006 = vdwg.mxu0
      %4007 = vmatpush.msra.mxu0 %v3426
      %4008 = vmatpush.msra.mxu0 %v3425
      %4009 = vmatpush.msra.mxu0 %v3424
      %4010 = vmatpush.msra.mxu0 %v3423
      %4011 = vmatpush.msra.mxu0 %v3422
      %4012 = vmatpush.msra.mxu0 %v3421
      %4013 = vmatpush.msra.mxu0 %v3420
      %4014 = vmatpush.msra.mxu0 %v3419
      %4015 = vmatpush.msra.mxu0 %v3418
      %4016 = vmatpush.msra.mxu0 %v3417
      %4017 = vmatpush.msra.mxu0 %v3416
      %4018 = vmatpush.msra.mxu0 %v3415
      %4019 = vmatpush.msra.mxu0 %v3414
      %4020 = vmatpush.msra.mxu0 %v3413
      %4021 = vmatpush.msra.mxu0 %v3412
      %4022 = vmatpush.msra.mxu0 %v3411
      %4023 = vmatmul.f32.gmra.mxu0 %v3078
      %v4024 = vpop.f32.mrf.mxu0
      %v4025 = vadd.f32 %v3912, %v4024
      %4026 = vmatmul.f32.gmra.mxu0 %v3087
      %v4027 = vpop.f32.mrf.mxu0
      %v4028 = vadd.f32 %v3915, %v4027
      %4029 = vmatmul.f32.gmra.mxu0 %v3096
      %v4030 = vpop.f32.mrf.mxu0
      %v4031 = vadd.f32 %v3918, %v4030
      %4032 = vmatmul.f32.gmra.mxu0 %v3105
      %v4033 = vpop.f32.mrf.mxu0
      %v4034 = vadd.f32 %v3921, %v4033
      %4035 = vmatmul.f32.gmra.mxu0 %v3114
      %v4036 = vpop.f32.mrf.mxu0
      %v4037 = vadd.f32 %v3924, %v4036
      %4038 = vmatmul.f32.gmra.mxu0 %v3123
      %v4039 = vpop.f32.mrf.mxu0
      %v4040 = vadd.f32 %v3927, %v4039
      %4041 = vmatmul.f32.gmra.mxu0 %v3132
      %v4042 = vpop.f32.mrf.mxu0
      %v4043 = vadd.f32 %v3930, %v4042
      %4044 = vmatmul.f32.gmra.mxu0 %v3141
      %v4045 = vpop.f32.mrf.mxu0
      %v4046 = vadd.f32 %v3933, %v4045
      %4047 = vmatmul.f32.gmra.mxu0 %v3150
      %v4048 = vpop.f32.mrf.mxu0
      %v4049 = vadd.f32 %v3936, %v4048
      %4050 = vmatmul.f32.gmra.mxu0 %v3159
      %v4051 = vpop.f32.mrf.mxu0
      %v4052 = vadd.f32 %v3939, %v4051
      %4053 = vmatmul.f32.gmra.mxu0 %v3168
      %v4054 = vpop.f32.mrf.mxu0
      %v4055 = vadd.f32 %v3942, %v4054
      %4056 = vmatmul.f32.gmra.mxu0 %v3177
      %v4057 = vpop.f32.mrf.mxu0
      %v4058 = vadd.f32 %v3945, %v4057
      %4059 = vmatmul.f32.gmra.mxu0 %v3186
      %v4060 = vpop.f32.mrf.mxu0
      %v4061 = vadd.f32 %v3948, %v4060
      %4062 = vmatmul.f32.gmra.mxu0 %v3195
      %v4063 = vpop.f32.mrf.mxu0
      %v4064 = vadd.f32 %v3951, %v4063
      %4065 = vmatmul.f32.gmra.mxu0 %v3204
      %v4066 = vpop.f32.mrf.mxu0
      %v4067 = vadd.f32 %v3954, %v4066
      %4068 = vmatmul.f32.gmra.mxu0 %v3213
      %v4069 = vpop.f32.mrf.mxu0
      %v4070 = vadd.f32 %v3957, %v4069
      %4071 = vmatmul.f32.gmra.mxu0 %v3222
      %v4072 = vpop.f32.mrf.mxu0
      %v4073 = vadd.f32 %v3960, %v4072
      %4074 = vmatmul.f32.gmra.mxu0 %v3231
      %v4075 = vpop.f32.mrf.mxu0
      %v4076 = vadd.f32 %v3963, %v4075
      %4077 = vmatmul.f32.gmra.mxu0 %v3240
      %v4078 = vpop.f32.mrf.mxu0
      %v4079 = vadd.f32 %v3966, %v4078
      %4080 = vmatmul.f32.gmra.mxu0 %v3249
      %v4081 = vpop.f32.mrf.mxu0
      %v4082 = vadd.f32 %v3969, %v4081
      %4083 = vmatmul.f32.gmra.mxu0 %v3258
      %v4084 = vpop.f32.mrf.mxu0
      %v4085 = vadd.f32 %v3972, %v4084
      %4086 = vmatmul.f32.gmra.mxu0 %v3267
      %v4087 = vpop.f32.mrf.mxu0
      %v4088 = vadd.f32 %v3975, %v4087
      %4089 = vmatmul.f32.gmra.mxu0 %v3276
      %v4090 = vpop.f32.mrf.mxu0
      %v4091 = vadd.f32 %v3978, %v4090
      %4092 = vmatmul.f32.gmra.mxu0 %v3285
      %v4093 = vpop.f32.mrf.mxu0
      %v4094 = vadd.f32 %v3981, %v4093
      %4095 = vmatmul.f32.gmra.mxu0 %v3294
      %v4096 = vpop.f32.mrf.mxu0
      %v4097 = vadd.f32 %v3984, %v4096
      %4098 = vmatmul.f32.gmra.mxu0 %v3303
      %v4099 = vpop.f32.mrf.mxu0
      %v4100 = vadd.f32 %v3987, %v4099
      %4101 = vmatmul.f32.gmra.mxu0 %v3312
      %v4102 = vpop.f32.mrf.mxu0
      %v4103 = vadd.f32 %v3990, %v4102
      %4104 = vmatmul.f32.gmra.mxu0 %v3321
      %v4105 = vpop.f32.mrf.mxu0
      %v4106 = vadd.f32 %v3993, %v4105
      %4107 = vmatmul.f32.gmra.mxu0 %v3330
      %v4108 = vpop.f32.mrf.mxu0
      %v4109 = vadd.f32 %v3996, %v4108
      %4110 = vmatmul.f32.gmra.mxu0 %v3339
      %v4111 = vpop.f32.mrf.mxu0
      %v4112 = vadd.f32 %v3999, %v4111
      %4113 = vmatmul.f32.gmra.mxu0 %v3348
      %v4114 = vpop.f32.mrf.mxu0
      %v4115 = vadd.f32 %v4002, %v4114
      %4116 = vmatmul.f32.gmra.mxu0 %v3357
      %v4117 = vpop.f32.mrf.mxu0
      %v4118 = vadd.f32 %v4005, %v4117
      %4119 = vdwg.mxu0
      %4120 = vmatpush.msra.mxu0 %v3442
      %4121 = vmatpush.msra.mxu0 %v3441
      %4122 = vmatpush.msra.mxu0 %v3440
      %4123 = vmatpush.msra.mxu0 %v3439
      %4124 = vmatpush.msra.mxu0 %v3438
      %4125 = vmatpush.msra.mxu0 %v3437
      %4126 = vmatpush.msra.mxu0 %v3436
      %4127 = vmatpush.msra.mxu0 %v3435
      %4128 = vmatpush.msra.mxu0 %v3434
      %4129 = vmatpush.msra.mxu0 %v3433
      %4130 = vmatpush.msra.mxu0 %v3432
      %4131 = vmatpush.msra.mxu0 %v3431
      %4132 = vmatpush.msra.mxu0 %v3430
      %4133 = vmatpush.msra.mxu0 %v3429
      %4134 = vmatpush.msra.mxu0 %v3428
      %4135 = vmatpush.msra.mxu0 %v3427
      %4136 = vmatmul.f32.gmra.mxu0 %v3079
      %v4137 = vpop.f32.mrf.mxu0
      %v4138 = vadd.f32 %v4025, %v4137
      %4139 = vmatmul.f32.gmra.mxu0 %v3088
      %v4140 = vpop.f32.mrf.mxu0
      %v4141 = vadd.f32 %v4028, %v4140
      %4142 = vmatmul.f32.gmra.mxu0 %v3097
      %v4143 = vpop.f32.mrf.mxu0
      %v4144 = vadd.f32 %v4031, %v4143
      %4145 = vmatmul.f32.gmra.mxu0 %v3106
      %v4146 = vpop.f32.mrf.mxu0
      %v4147 = vadd.f32 %v4034, %v4146
      %4148 = vmatmul.f32.gmra.mxu0 %v3115
      %v4149 = vpop.f32.mrf.mxu0
      %v4150 = vadd.f32 %v4037, %v4149
      %4151 = vmatmul.f32.gmra.mxu0 %v3124
      %v4152 = vpop.f32.mrf.mxu0
      %v4153 = vadd.f32 %v4040, %v4152
      %4154 = vmatmul.f32.gmra.mxu0 %v3133
      %v4155 = vpop.f32.mrf.mxu0
      %v4156 = vadd.f32 %v4043, %v4155
      %4157 = vmatmul.f32.gmra.mxu0 %v3142
      %v4158 = vpop.f32.mrf.mxu0
      %v4159 = vadd.f32 %v4046, %v4158
      %4160 = vmatmul.f32.gmra.mxu0 %v3151
      %v4161 = vpop.f32.mrf.mxu0
      %v4162 = vadd.f32 %v4049, %v4161
      %4163 = vmatmul.f32.gmra.mxu0 %v3160
      %v4164 = vpop.f32.mrf.mxu0
      %v4165 = vadd.f32 %v4052, %v4164
      %4166 = vmatmul.f32.gmra.mxu0 %v3169
      %v4167 = vpop.f32.mrf.mxu0
      %v4168 = vadd.f32 %v4055, %v4167
      %4169 = vmatmul.f32.gmra.mxu0 %v3178
      %v4170 = vpop.f32.mrf.mxu0
      %v4171 = vadd.f32 %v4058, %v4170
      %4172 = vmatmul.f32.gmra.mxu0 %v3187
      %v4173 = vpop.f32.mrf.mxu0
      %v4174 = vadd.f32 %v4061, %v4173
      %4175 = vmatmul.f32.gmra.mxu0 %v3196
      %v4176 = vpop.f32.mrf.mxu0
      %v4177 = vadd.f32 %v4064, %v4176
      %4178 = vmatmul.f32.gmra.mxu0 %v3205
      %v4179 = vpop.f32.mrf.mxu0
      %v4180 = vadd.f32 %v4067, %v4179
      %4181 = vmatmul.f32.gmra.mxu0 %v3214
      %v4182 = vpop.f32.mrf.mxu0
      %v4183 = vadd.f32 %v4070, %v4182
      %4184 = vmatmul.f32.gmra.mxu0 %v3223
      %v4185 = vpop.f32.mrf.mxu0
      %v4186 = vadd.f32 %v4073, %v4185
      %4187 = vmatmul.f32.gmra.mxu0 %v3232
      %v4188 = vpop.f32.mrf.mxu0
      %v4189 = vadd.f32 %v4076, %v4188
      %4190 = vmatmul.f32.gmra.mxu0 %v3241
      %v4191 = vpop.f32.mrf.mxu0
      %v4192 = vadd.f32 %v4079, %v4191
      %4193 = vmatmul.f32.gmra.mxu0 %v3250
      %v4194 = vpop.f32.mrf.mxu0
      %v4195 = vadd.f32 %v4082, %v4194
      %4196 = vmatmul.f32.gmra.mxu0 %v3259
      %v4197 = vpop.f32.mrf.mxu0
      %v4198 = vadd.f32 %v4085, %v4197
      %4199 = vmatmul.f32.gmra.mxu0 %v3268
      %v4200 = vpop.f32.mrf.mxu0
      %v4201 = vadd.f32 %v4088, %v4200
      %4202 = vmatmul.f32.gmra.mxu0 %v3277
      %v4203 = vpop.f32.mrf.mxu0
      %v4204 = vadd.f32 %v4091, %v4203
      %4205 = vmatmul.f32.gmra.mxu0 %v3286
      %v4206 = vpop.f32.mrf.mxu0
      %v4207 = vadd.f32 %v4094, %v4206
      %4208 = vmatmul.f32.gmra.mxu0 %v3295
      %v4209 = vpop.f32.mrf.mxu0
      %v4210 = vadd.f32 %v4097, %v4209
      %4211 = vmatmul.f32.gmra.mxu0 %v3304
      %v4212 = vpop.f32.mrf.mxu0
      %v4213 = vadd.f32 %v4100, %v4212
      %4214 = vmatmul.f32.gmra.mxu0 %v3313
      %v4215 = vpop.f32.mrf.mxu0
      %v4216 = vadd.f32 %v4103, %v4215
      %4217 = vmatmul.f32.gmra.mxu0 %v3322
      %v4218 = vpop.f32.mrf.mxu0
      %v4219 = vadd.f32 %v4106, %v4218
      %4220 = vmatmul.f32.gmra.mxu0 %v3331
      %v4221 = vpop.f32.mrf.mxu0
      %v4222 = vadd.f32 %v4109, %v4221
      %4223 = vmatmul.f32.gmra.mxu0 %v3340
      %v4224 = vpop.f32.mrf.mxu0
      %v4225 = vadd.f32 %v4112, %v4224
      %4226 = vmatmul.f32.gmra.mxu0 %v3349
      %v4227 = vpop.f32.mrf.mxu0
      %v4228 = vadd.f32 %v4115, %v4227
      %4229 = vmatmul.f32.gmra.mxu0 %v3358
      %v4230 = vpop.f32.mrf.mxu0
      %v4231 = vadd.f32 %v4118, %v4230
      %4232 = vdwg.mxu0
      %4233 = vmatpush.msra.mxu0 %v3458
      %4234 = vmatpush.msra.mxu0 %v3457
      %4235 = vmatpush.msra.mxu0 %v3456
      %4236 = vmatpush.msra.mxu0 %v3455
      %4237 = vmatpush.msra.mxu0 %v3454
      %4238 = vmatpush.msra.mxu0 %v3453
      %4239 = vmatpush.msra.mxu0 %v3452
      %4240 = vmatpush.msra.mxu0 %v3451
      %4241 = vmatpush.msra.mxu0 %v3450
      %4242 = vmatpush.msra.mxu0 %v3449
      %4243 = vmatpush.msra.mxu0 %v3448
      %4244 = vmatpush.msra.mxu0 %v3447
      %4245 = vmatpush.msra.mxu0 %v3446
      %4246 = vmatpush.msra.mxu0 %v3445
      %4247 = vmatpush.msra.mxu0 %v3444
      %4248 = vmatpush.msra.mxu0 %v3443
      %4249 = vmatmul.f32.gmra.mxu0 %v3080
      %v4250 = vpop.f32.mrf.mxu0
      %v4251 = vadd.f32 %v4138, %v4250
      %4252 = vmatmul.f32.gmra.mxu0 %v3089
      %v4253 = vpop.f32.mrf.mxu0
      %v4254 = vadd.f32 %v4141, %v4253
      %4255 = vmatmul.f32.gmra.mxu0 %v3098
      %v4256 = vpop.f32.mrf.mxu0
      %v4257 = vadd.f32 %v4144, %v4256
      %4258 = vmatmul.f32.gmra.mxu0 %v3107
      %v4259 = vpop.f32.mrf.mxu0
      %v4260 = vadd.f32 %v4147, %v4259
      %4261 = vmatmul.f32.gmra.mxu0 %v3116
      %v4262 = vpop.f32.mrf.mxu0
      %v4263 = vadd.f32 %v4150, %v4262
      %4264 = vmatmul.f32.gmra.mxu0 %v3125
      %v4265 = vpop.f32.mrf.mxu0
      %v4266 = vadd.f32 %v4153, %v4265
      %4267 = vmatmul.f32.gmra.mxu0 %v3134
      %v4268 = vpop.f32.mrf.mxu0
      %v4269 = vadd.f32 %v4156, %v4268
      %4270 = vmatmul.f32.gmra.mxu0 %v3143
      %v4271 = vpop.f32.mrf.mxu0
      %v4272 = vadd.f32 %v4159, %v4271
      %4273 = vmatmul.f32.gmra.mxu0 %v3152
      %v4274 = vpop.f32.mrf.mxu0
      %v4275 = vadd.f32 %v4162, %v4274
      %4276 = vmatmul.f32.gmra.mxu0 %v3161
      %v4277 = vpop.f32.mrf.mxu0
      %v4278 = vadd.f32 %v4165, %v4277
      %4279 = vmatmul.f32.gmra.mxu0 %v3170
      %v4280 = vpop.f32.mrf.mxu0
      %v4281 = vadd.f32 %v4168, %v4280
      %4282 = vmatmul.f32.gmra.mxu0 %v3179
      %v4283 = vpop.f32.mrf.mxu0
      %v4284 = vadd.f32 %v4171, %v4283
      %4285 = vmatmul.f32.gmra.mxu0 %v3188
      %v4286 = vpop.f32.mrf.mxu0
      %v4287 = vadd.f32 %v4174, %v4286
      %4288 = vmatmul.f32.gmra.mxu0 %v3197
      %v4289 = vpop.f32.mrf.mxu0
      %v4290 = vadd.f32 %v4177, %v4289
      %4291 = vmatmul.f32.gmra.mxu0 %v3206
      %v4292 = vpop.f32.mrf.mxu0
      %v4293 = vadd.f32 %v4180, %v4292
      %4294 = vmatmul.f32.gmra.mxu0 %v3215
      %v4295 = vpop.f32.mrf.mxu0
      %v4296 = vadd.f32 %v4183, %v4295
      %4297 = vmatmul.f32.gmra.mxu0 %v3224
      %v4298 = vpop.f32.mrf.mxu0
      %v4299 = vadd.f32 %v4186, %v4298
      %4300 = vmatmul.f32.gmra.mxu0 %v3233
      %v4301 = vpop.f32.mrf.mxu0
      %v4302 = vadd.f32 %v4189, %v4301
      %4303 = vmatmul.f32.gmra.mxu0 %v3242
      %v4304 = vpop.f32.mrf.mxu0
      %v4305 = vadd.f32 %v4192, %v4304
      %4306 = vmatmul.f32.gmra.mxu0 %v3251
      %v4307 = vpop.f32.mrf.mxu0
      %v4308 = vadd.f32 %v4195, %v4307
      %4309 = vmatmul.f32.gmra.mxu0 %v3260
      %v4310 = vpop.f32.mrf.mxu0
      %v4311 = vadd.f32 %v4198, %v4310
      %4312 = vmatmul.f32.gmra.mxu0 %v3269
      %v4313 = vpop.f32.mrf.mxu0
      %v4314 = vadd.f32 %v4201, %v4313
      %4315 = vmatmul.f32.gmra.mxu0 %v3278
      %v4316 = vpop.f32.mrf.mxu0
      %v4317 = vadd.f32 %v4204, %v4316
      %4318 = vmatmul.f32.gmra.mxu0 %v3287
      %v4319 = vpop.f32.mrf.mxu0
      %v4320 = vadd.f32 %v4207, %v4319
      %4321 = vmatmul.f32.gmra.mxu0 %v3296
      %v4322 = vpop.f32.mrf.mxu0
      %v4323 = vadd.f32 %v4210, %v4322
      %4324 = vmatmul.f32.gmra.mxu0 %v3305
      %v4325 = vpop.f32.mrf.mxu0
      %v4326 = vadd.f32 %v4213, %v4325
      %4327 = vmatmul.f32.gmra.mxu0 %v3314
      %v4328 = vpop.f32.mrf.mxu0
      %v4329 = vadd.f32 %v4216, %v4328
      %4330 = vmatmul.f32.gmra.mxu0 %v3323
      %v4331 = vpop.f32.mrf.mxu0
      %v4332 = vadd.f32 %v4219, %v4331
      %4333 = vmatmul.f32.gmra.mxu0 %v3332
      %v4334 = vpop.f32.mrf.mxu0
      %v4335 = vadd.f32 %v4222, %v4334
      %4336 = vmatmul.f32.gmra.mxu0 %v3341
      %v4337 = vpop.f32.mrf.mxu0
      %v4338 = vadd.f32 %v4225, %v4337
      %4339 = vmatmul.f32.gmra.mxu0 %v3350
      %v4340 = vpop.f32.mrf.mxu0
      %v4341 = vadd.f32 %v4228, %v4340
      %4342 = vmatmul.f32.gmra.mxu0 %v3359
      %v4343 = vpop.f32.mrf.mxu0
      %v4344 = vadd.f32 %v4231, %v4343
      %4345 = vdwg.mxu0
      %4346 = vmatpush.msra.mxu0 %v3474
      %4347 = vmatpush.msra.mxu0 %v3473
      %4348 = vmatpush.msra.mxu0 %v3472
      %4349 = vmatpush.msra.mxu0 %v3471
      %4350 = vmatpush.msra.mxu0 %v3470
      %4351 = vmatpush.msra.mxu0 %v3469
      %4352 = vmatpush.msra.mxu0 %v3468
      %4353 = vmatpush.msra.mxu0 %v3467
      %4354 = vmatpush.msra.mxu0 %v3466
      %4355 = vmatpush.msra.mxu0 %v3465
      %4356 = vmatpush.msra.mxu0 %v3464
      %4357 = vmatpush.msra.mxu0 %v3463
      %4358 = vmatpush.msra.mxu0 %v3462
      %4359 = vmatpush.msra.mxu0 %v3461
      %4360 = vmatpush.msra.mxu0 %v3460
      %4361 = vmatpush.msra.mxu0 %v3459
      %4362 = vmatmul.f32.gmra.mxu0 %v3081
      %v4363 = vpop.f32.mrf.mxu0
      %v4364 = vadd.f32 %v4251, %v4363
      %4365 = vmatmul.f32.gmra.mxu0 %v3090
      %v4366 = vpop.f32.mrf.mxu0
      %v4367 = vadd.f32 %v4254, %v4366
      %4368 = vmatmul.f32.gmra.mxu0 %v3099
      %v4369 = vpop.f32.mrf.mxu0
      %v4370 = vadd.f32 %v4257, %v4369
      %4371 = vmatmul.f32.gmra.mxu0 %v3108
      %v4372 = vpop.f32.mrf.mxu0
      %v4373 = vadd.f32 %v4260, %v4372
      %4374 = vmatmul.f32.gmra.mxu0 %v3117
      %v4375 = vpop.f32.mrf.mxu0
      %v4376 = vadd.f32 %v4263, %v4375
      %4377 = vmatmul.f32.gmra.mxu0 %v3126
      %v4378 = vpop.f32.mrf.mxu0
      %v4379 = vadd.f32 %v4266, %v4378
      %4380 = vmatmul.f32.gmra.mxu0 %v3135
      %v4381 = vpop.f32.mrf.mxu0
      %v4382 = vadd.f32 %v4269, %v4381
      %4383 = vmatmul.f32.gmra.mxu0 %v3144
      %v4384 = vpop.f32.mrf.mxu0
      %v4385 = vadd.f32 %v4272, %v4384
      %4386 = vmatmul.f32.gmra.mxu0 %v3153
      %v4387 = vpop.f32.mrf.mxu0
      %v4388 = vadd.f32 %v4275, %v4387
      %4389 = vmatmul.f32.gmra.mxu0 %v3162
      %v4390 = vpop.f32.mrf.mxu0
      %v4391 = vadd.f32 %v4278, %v4390
      %4392 = vmatmul.f32.gmra.mxu0 %v3171
      %v4393 = vpop.f32.mrf.mxu0
      %v4394 = vadd.f32 %v4281, %v4393
      %4395 = vmatmul.f32.gmra.mxu0 %v3180
      %v4396 = vpop.f32.mrf.mxu0
      %v4397 = vadd.f32 %v4284, %v4396
      %4398 = vmatmul.f32.gmra.mxu0 %v3189
      %v4399 = vpop.f32.mrf.mxu0
      %v4400 = vadd.f32 %v4287, %v4399
      %4401 = vmatmul.f32.gmra.mxu0 %v3198
      %v4402 = vpop.f32.mrf.mxu0
      %v4403 = vadd.f32 %v4290, %v4402
      %4404 = vmatmul.f32.gmra.mxu0 %v3207
      %v4405 = vpop.f32.mrf.mxu0
      %v4406 = vadd.f32 %v4293, %v4405
      %4407 = vmatmul.f32.gmra.mxu0 %v3216
      %v4408 = vpop.f32.mrf.mxu0
      %v4409 = vadd.f32 %v4296, %v4408
      %4410 = vmatmul.f32.gmra.mxu0 %v3225
      %v4411 = vpop.f32.mrf.mxu0
      %v4412 = vadd.f32 %v4299, %v4411
      %4413 = vmatmul.f32.gmra.mxu0 %v3234
      %v4414 = vpop.f32.mrf.mxu0
      %v4415 = vadd.f32 %v4302, %v4414
      %4416 = vmatmul.f32.gmra.mxu0 %v3243
      %v4417 = vpop.f32.mrf.mxu0
      %v4418 = vadd.f32 %v4305, %v4417
      %4419 = vmatmul.f32.gmra.mxu0 %v3252
      %v4420 = vpop.f32.mrf.mxu0
      %v4421 = vadd.f32 %v4308, %v4420
      %4422 = vmatmul.f32.gmra.mxu0 %v3261
      %v4423 = vpop.f32.mrf.mxu0
      %v4424 = vadd.f32 %v4311, %v4423
      %4425 = vmatmul.f32.gmra.mxu0 %v3270
      %v4426 = vpop.f32.mrf.mxu0
      %v4427 = vadd.f32 %v4314, %v4426
      %4428 = vmatmul.f32.gmra.mxu0 %v3279
      %v4429 = vpop.f32.mrf.mxu0
      %v4430 = vadd.f32 %v4317, %v4429
      %4431 = vmatmul.f32.gmra.mxu0 %v3288
      %v4432 = vpop.f32.mrf.mxu0
      %v4433 = vadd.f32 %v4320, %v4432
      %4434 = vmatmul.f32.gmra.mxu0 %v3297
      %v4435 = vpop.f32.mrf.mxu0
      %v4436 = vadd.f32 %v4323, %v4435
      %4437 = vmatmul.f32.gmra.mxu0 %v3306
      %v4438 = vpop.f32.mrf.mxu0
      %v4439 = vadd.f32 %v4326, %v4438
      %4440 = vmatmul.f32.gmra.mxu0 %v3315
      %v4441 = vpop.f32.mrf.mxu0
      %v4442 = vadd.f32 %v4329, %v4441
      %4443 = vmatmul.f32.gmra.mxu0 %v3324
      %v4444 = vpop.f32.mrf.mxu0
      %v4445 = vadd.f32 %v4332, %v4444
      %4446 = vmatmul.f32.gmra.mxu0 %v3333
      %v4447 = vpop.f32.mrf.mxu0
      %v4448 = vadd.f32 %v4335, %v4447
      %4449 = vmatmul.f32.gmra.mxu0 %v3342
      %v4450 = vpop.f32.mrf.mxu0
      %v4451 = vadd.f32 %v4338, %v4450
      %4452 = vmatmul.f32.gmra.mxu0 %v3351
      %v4453 = vpop.f32.mrf.mxu0
      %v4454 = vadd.f32 %v4341, %v4453
      %4455 = vmatmul.f32.gmra.mxu0 %v3360
      %v4456 = vpop.f32.mrf.mxu0
      %v4457 = vadd.f32 %v4344, %v4456
      %4458 = vdwg.mxu0
      %4459 = vmatpush.msra.mxu0 %v3490
      %4460 = vmatpush.msra.mxu0 %v3489
      %4461 = vmatpush.msra.mxu0 %v3488
      %4462 = vmatpush.msra.mxu0 %v3487
      %4463 = vmatpush.msra.mxu0 %v3486
      %4464 = vmatpush.msra.mxu0 %v3485
      %4465 = vmatpush.msra.mxu0 %v3484
      %4466 = vmatpush.msra.mxu0 %v3483
      %4467 = vmatpush.msra.mxu0 %v3482
      %4468 = vmatpush.msra.mxu0 %v3481
      %4469 = vmatpush.msra.mxu0 %v3480
      %4470 = vmatpush.msra.mxu0 %v3479
      %4471 = vmatpush.msra.mxu0 %v3478
      %4472 = vmatpush.msra.mxu0 %v3477
      %4473 = vmatpush.msra.mxu0 %v3476
      %4474 = vmatpush.msra.mxu0 %v3475
      %4475 = vmatmul.f32.gmra.mxu0 %v3082
      %v4476 = vpop.f32.mrf.mxu0
      %v4477 = vadd.f32 %v4364, %v4476
      %4478 = vmatmul.f32.gmra.mxu0 %v3091
      %v4479 = vpop.f32.mrf.mxu0
      %v4480 = vadd.f32 %v4367, %v4479
      %4481 = vmatmul.f32.gmra.mxu0 %v3100
      %v4482 = vpop.f32.mrf.mxu0
      %v4483 = vadd.f32 %v4370, %v4482
      %4484 = vmatmul.f32.gmra.mxu0 %v3109
      %v4485 = vpop.f32.mrf.mxu0
      %v4486 = vadd.f32 %v4373, %v4485
      %4487 = vmatmul.f32.gmra.mxu0 %v3118
      %v4488 = vpop.f32.mrf.mxu0
      %v4489 = vadd.f32 %v4376, %v4488
      %4490 = vmatmul.f32.gmra.mxu0 %v3127
      %v4491 = vpop.f32.mrf.mxu0
      %v4492 = vadd.f32 %v4379, %v4491
      %4493 = vmatmul.f32.gmra.mxu0 %v3136
      %v4494 = vpop.f32.mrf.mxu0
      %v4495 = vadd.f32 %v4382, %v4494
      %4496 = vmatmul.f32.gmra.mxu0 %v3145
      %v4497 = vpop.f32.mrf.mxu0
      %v4498 = vadd.f32 %v4385, %v4497
      %4499 = vmatmul.f32.gmra.mxu0 %v3154
      %v4500 = vpop.f32.mrf.mxu0
      %v4501 = vadd.f32 %v4388, %v4500
      %4502 = vmatmul.f32.gmra.mxu0 %v3163
      %v4503 = vpop.f32.mrf.mxu0
      %v4504 = vadd.f32 %v4391, %v4503
      %4505 = vmatmul.f32.gmra.mxu0 %v3172
      %v4506 = vpop.f32.mrf.mxu0
      %v4507 = vadd.f32 %v4394, %v4506
      %4508 = vmatmul.f32.gmra.mxu0 %v3181
      %v4509 = vpop.f32.mrf.mxu0
      %v4510 = vadd.f32 %v4397, %v4509
      %4511 = vmatmul.f32.gmra.mxu0 %v3190
      %v4512 = vpop.f32.mrf.mxu0
      %v4513 = vadd.f32 %v4400, %v4512
      %4514 = vmatmul.f32.gmra.mxu0 %v3199
      %v4515 = vpop.f32.mrf.mxu0
      %v4516 = vadd.f32 %v4403, %v4515
      %4517 = vmatmul.f32.gmra.mxu0 %v3208
      %v4518 = vpop.f32.mrf.mxu0
      %v4519 = vadd.f32 %v4406, %v4518
      %4520 = vmatmul.f32.gmra.mxu0 %v3217
      %v4521 = vpop.f32.mrf.mxu0
      %v4522 = vadd.f32 %v4409, %v4521
      %4523 = vmatmul.f32.gmra.mxu0 %v3226
      %v4524 = vpop.f32.mrf.mxu0
      %v4525 = vadd.f32 %v4412, %v4524
      %4526 = vmatmul.f32.gmra.mxu0 %v3235
      %v4527 = vpop.f32.mrf.mxu0
      %v4528 = vadd.f32 %v4415, %v4527
      %4529 = vmatmul.f32.gmra.mxu0 %v3244
      %v4530 = vpop.f32.mrf.mxu0
      %v4531 = vadd.f32 %v4418, %v4530
      %4532 = vmatmul.f32.gmra.mxu0 %v3253
      %v4533 = vpop.f32.mrf.mxu0
      %v4534 = vadd.f32 %v4421, %v4533
      %4535 = vmatmul.f32.gmra.mxu0 %v3262
      %v4536 = vpop.f32.mrf.mxu0
      %v4537 = vadd.f32 %v4424, %v4536
      %4538 = vmatmul.f32.gmra.mxu0 %v3271
      %v4539 = vpop.f32.mrf.mxu0
      %v4540 = vadd.f32 %v4427, %v4539
      %4541 = vmatmul.f32.gmra.mxu0 %v3280
      %v4542 = vpop.f32.mrf.mxu0
      %v4543 = vadd.f32 %v4430, %v4542
      %4544 = vmatmul.f32.gmra.mxu0 %v3289
      %v4545 = vpop.f32.mrf.mxu0
      %v4546 = vadd.f32 %v4433, %v4545
      %4547 = vmatmul.f32.gmra.mxu0 %v3298
      %v4548 = vpop.f32.mrf.mxu0
      %v4549 = vadd.f32 %v4436, %v4548
      %4550 = vmatmul.f32.gmra.mxu0 %v3307
      %v4551 = vpop.f32.mrf.mxu0
      %v4552 = vadd.f32 %v4439, %v4551
      %4553 = vmatmul.f32.gmra.mxu0 %v3316
      %v4554 = vpop.f32.mrf.mxu0
      %v4555 = vadd.f32 %v4442, %v4554
      %4556 = vmatmul.f32.gmra.mxu0 %v3325
      %v4557 = vpop.f32.mrf.mxu0
      %v4558 = vadd.f32 %v4445, %v4557
      %4559 = vmatmul.f32.gmra.mxu0 %v3334
      %v4560 = vpop.f32.mrf.mxu0
      %v4561 = vadd.f32 %v4448, %v4560
      %4562 = vmatmul.f32.gmra.mxu0 %v3343
      %v4563 = vpop.f32.mrf.mxu0
      %v4564 = vadd.f32 %v4451, %v4563
      %4565 = vmatmul.f32.gmra.mxu0 %v3352
      %v4566 = vpop.f32.mrf.mxu0
      %v4567 = vadd.f32 %v4454, %v4566
      %4568 = vmatmul.f32.gmra.mxu0 %v3361
      %v4569 = vpop.f32.mrf.mxu0
      %v4570 = vadd.f32 %v4457, %v4569
      %4571 = vdwg.mxu0
      %4572 = vmatpush.msra.mxu0 %v3506
      %4573 = vmatpush.msra.mxu0 %v3505
      %4574 = vmatpush.msra.mxu0 %v3504
      %4575 = vmatpush.msra.mxu0 %v3503
      %4576 = vmatpush.msra.mxu0 %v3502
      %4577 = vmatpush.msra.mxu0 %v3501
      %4578 = vmatpush.msra.mxu0 %v3500
      %4579 = vmatpush.msra.mxu0 %v3499
      %4580 = vmatpush.msra.mxu0 %v3498
      %4581 = vmatpush.msra.mxu0 %v3497
      %4582 = vmatpush.msra.mxu0 %v3496
      %4583 = vmatpush.msra.mxu0 %v3495
      %4584 = vmatpush.msra.mxu0 %v3494
      %4585 = vmatpush.msra.mxu0 %v3493
      %4586 = vmatpush.msra.mxu0 %v3492
      %4587 = vmatpush.msra.mxu0 %v3491
      %4588 = vmatmul.f32.gmra.mxu0 %v3083
      %v4589 = vpop.f32.mrf.mxu0
      %v4590 = vadd.f32 %v4477, %v4589
      %4591 = vmatmul.f32.gmra.mxu0 %v3092
      %v4592 = vpop.f32.mrf.mxu0
      %v4593 = vadd.f32 %v4480, %v4592
      %4594 = vmatmul.f32.gmra.mxu0 %v3101
      %v4595 = vpop.f32.mrf.mxu0
      %v4596 = vadd.f32 %v4483, %v4595
      %4597 = vmatmul.f32.gmra.mxu0 %v3110
      %v4598 = vpop.f32.mrf.mxu0
      %v4599 = vadd.f32 %v4486, %v4598
      %4600 = vmatmul.f32.gmra.mxu0 %v3119
      %v4601 = vpop.f32.mrf.mxu0
      %v4602 = vadd.f32 %v4489, %v4601
      %4603 = vmatmul.f32.gmra.mxu0 %v3128
      %v4604 = vpop.f32.mrf.mxu0
      %v4605 = vadd.f32 %v4492, %v4604
      %4606 = vmatmul.f32.gmra.mxu0 %v3137
      %v4607 = vpop.f32.mrf.mxu0
      %v4608 = vadd.f32 %v4495, %v4607
      %4609 = vmatmul.f32.gmra.mxu0 %v3146
      %v4610 = vpop.f32.mrf.mxu0
      %v4611 = vadd.f32 %v4498, %v4610
      %4612 = vmatmul.f32.gmra.mxu0 %v3155
      %v4613 = vpop.f32.mrf.mxu0
      %v4614 = vadd.f32 %v4501, %v4613
      %4615 = vmatmul.f32.gmra.mxu0 %v3164
      %v4616 = vpop.f32.mrf.mxu0
      %v4617 = vadd.f32 %v4504, %v4616
      %4618 = vmatmul.f32.gmra.mxu0 %v3173
      %v4619 = vpop.f32.mrf.mxu0
      %v4620 = vadd.f32 %v4507, %v4619
      %4621 = vmatmul.f32.gmra.mxu0 %v3182
      %v4622 = vpop.f32.mrf.mxu0
      %v4623 = vadd.f32 %v4510, %v4622
      %4624 = vmatmul.f32.gmra.mxu0 %v3191
      %v4625 = vpop.f32.mrf.mxu0
      %v4626 = vadd.f32 %v4513, %v4625
      %4627 = vmatmul.f32.gmra.mxu0 %v3200
      %v4628 = vpop.f32.mrf.mxu0
      %v4629 = vadd.f32 %v4516, %v4628
      %4630 = vmatmul.f32.gmra.mxu0 %v3209
      %v4631 = vpop.f32.mrf.mxu0
      %v4632 = vadd.f32 %v4519, %v4631
      %4633 = vmatmul.f32.gmra.mxu0 %v3218
      %v4634 = vpop.f32.mrf.mxu0
      %v4635 = vadd.f32 %v4522, %v4634
      %4636 = vmatmul.f32.gmra.mxu0 %v3227
      %v4637 = vpop.f32.mrf.mxu0
      %v4638 = vadd.f32 %v4525, %v4637
      %4639 = vmatmul.f32.gmra.mxu0 %v3236
      %v4640 = vpop.f32.mrf.mxu0
      %v4641 = vadd.f32 %v4528, %v4640
      %4642 = vmatmul.f32.gmra.mxu0 %v3245
      %v4643 = vpop.f32.mrf.mxu0
      %v4644 = vadd.f32 %v4531, %v4643
      %4645 = vmatmul.f32.gmra.mxu0 %v3254
      %v4646 = vpop.f32.mrf.mxu0
      %v4647 = vadd.f32 %v4534, %v4646
      %4648 = vmatmul.f32.gmra.mxu0 %v3263
      %v4649 = vpop.f32.mrf.mxu0
      %v4650 = vadd.f32 %v4537, %v4649
      %4651 = vmatmul.f32.gmra.mxu0 %v3272
      %v4652 = vpop.f32.mrf.mxu0
      %v4653 = vadd.f32 %v4540, %v4652
      %4654 = vmatmul.f32.gmra.mxu0 %v3281
      %v4655 = vpop.f32.mrf.mxu0
      %v4656 = vadd.f32 %v4543, %v4655
      %4657 = vmatmul.f32.gmra.mxu0 %v3290
      %v4658 = vpop.f32.mrf.mxu0
      %v4659 = vadd.f32 %v4546, %v4658
      %4660 = vmatmul.f32.gmra.mxu0 %v3299
      %v4661 = vpop.f32.mrf.mxu0
      %v4662 = vadd.f32 %v4549, %v4661
      %4663 = vmatmul.f32.gmra.mxu0 %v3308
      %v4664 = vpop.f32.mrf.mxu0
      %v4665 = vadd.f32 %v4552, %v4664
      %4666 = vmatmul.f32.gmra.mxu0 %v3317
      %v4667 = vpop.f32.mrf.mxu0
      %v4668 = vadd.f32 %v4555, %v4667
      %4669 = vmatmul.f32.gmra.mxu0 %v3326
      %v4670 = vpop.f32.mrf.mxu0
      %v4671 = vadd.f32 %v4558, %v4670
      %4672 = vmatmul.f32.gmra.mxu0 %v3335
      %v4673 = vpop.f32.mrf.mxu0
      %v4674 = vadd.f32 %v4561, %v4673
      %4675 = vmatmul.f32.gmra.mxu0 %v3344
      %v4676 = vpop.f32.mrf.mxu0
      %v4677 = vadd.f32 %v4564, %v4676
      %4678 = vmatmul.f32.gmra.mxu0 %v3353
      %v4679 = vpop.f32.mrf.mxu0
      %v4680 = vadd.f32 %v4567, %v4679
      %4681 = vmatmul.f32.gmra.mxu0 %v3362
      %v4682 = vpop.f32.mrf.mxu0
      %v4683 = vadd.f32 %v4570, %v4682
      %4684 = vdwg.mxu0
      %v4685 = vmax.f32 %v4590, 0.0
      %v4686 = vmax.f32 %v4593, 0.0
      %v4687 = vmax.f32 %v4596, 0.0
      %v4688 = vmax.f32 %v4599, 0.0
      %v4689 = vmax.f32 %v4602, 0.0
      %v4690 = vmax.f32 %v4605, 0.0
      %v4691 = vmax.f32 %v4608, 0.0
      %v4692 = vmax.f32 %v4611, 0.0
      %v4693 = vmax.f32 %v4614, 0.0
      %v4694 = vmax.f32 %v4617, 0.0
      %v4695 = vmax.f32 %v4620, 0.0
      %v4696 = vmax.f32 %v4623, 0.0
      %v4697 = vmax.f32 %v4626, 0.0
      %v4698 = vmax.f32 %v4629, 0.0
      %v4699 = vmax.f32 %v4632, 0.0
      %v4700 = vmax.f32 %v4635, 0.0
      %v4701 = vmax.f32 %v4638, 0.0
      %v4702 = vmax.f32 %v4641, 0.0
      %v4703 = vmax.f32 %v4644, 0.0
      %v4704 = vmax.f32 %v4647, 0.0
      %v4705 = vmax.f32 %v4650, 0.0
      %v4706 = vmax.f32 %v4653, 0.0
      %v4707 = vmax.f32 %v4656, 0.0
      %v4708 = vmax.f32 %v4659, 0.0
      %v4709 = vmax.f32 %v4662, 0.0
      %v4710 = vmax.f32 %v4665, 0.0
      %v4711 = vmax.f32 %v4668, 0.0
      %v4712 = vmax.f32 %v4671, 0.0
      %v4713 = vmax.f32 %v4674, 0.0
      %v4714 = vmax.f32 %v4677, 0.0
      %v4715 = vmax.f32 %v4680, 0.0
      %v4716 = vmax.f32 %v4683, 0.0
      %4717 = vst [vmem:[%s197] sm:$0xff] %v4685
      %4718 = vst [vmem:[%s197 + $0x8] sm:$0xff] %v4686
      %4719 = vst [vmem:[%s197 + $0x10] sm:$0xff] %v4687
      %4720 = vst [vmem:[%s197 + $0x18] sm:$0xff] %v4688
      %4721 = vst [vmem:[%s197 + $0x20] sm:$0xff] %v4689
      %4722 = vst [vmem:[%s197 + $0x28] sm:$0xff] %v4690
      %4723 = vst [vmem:[%s197 + $0x30] sm:$0xff] %v4691
      %4724 = vst [vmem:[%s197 + $0x38] sm:$0xff] %v4692
      %4725 = vst [vmem:[%s197 + $0x40] sm:$0xff] %v4693
      %4726 = vst [vmem:[%s197 + $0x48] sm:$0xff] %v4694
      %4727 = vst [vmem:[%s197 + $0x50] sm:$0xff] %v4695
      %4728 = vst [vmem:[%s197 + $0x58] sm:$0xff] %v4696
      %4729 = vst [vmem:[%s197 + $0x60] sm:$0xff] %v4697
      %4730 = vst [vmem:[%s197 + $0x68] sm:$0xff] %v4698
      %4731 = vst [vmem:[%s197 + $0x70] sm:$0xff] %v4699
      %4732 = vst [vmem:[%s197 + $0x78] sm:$0xff] %v4700
      %4733 = vst [vmem:[%s197 + $0x80] sm:$0xff] %v4701
      %4734 = vst [vmem:[%s197 + $0x88] sm:$0xff] %v4702
      %4735 = vst [vmem:[%s197 + $0x90] sm:$0xff] %v4703
      %4736 = vst [vmem:[%s197 + $0x98] sm:$0xff] %v4704
      %4737 = vst [vmem:[%s197 + $0xa0] sm:$0xff] %v4705
      %4738 = vst [vmem:[%s197 + $0xa8] sm:$0xff] %v4706
      %4739 = vst [vmem:[%s197 + $0xb0] sm:$0xff] %v4707
      %4740 = vst [vmem:[%s197 + $0xb8] sm:$0xff] %v4708
      %4741 = vst [vmem:[%s197 + $0xc0] sm:$0xff] %v4709
      %4742 = vst [vmem:[%s197 + $0xc8] sm:$0xff] %v4710
      %4743 = vst [vmem:[%s197 + $0xd0] sm:$0xff] %v4711
      %4744 = vst [vmem:[%s197 + $0xd8] sm:$0xff] %v4712
      %4745 = vst [vmem:[%s197 + $0xe0] sm:$0xff] %v4713
      %4746 = vst [vmem:[%s197 + $0xe8] sm:$0xff] %v4714
      %4747 = vst [vmem:[%s197 + $0xf0] sm:$0xff] %v4715
      %4748 = vst [vmem:[%s197 + $0xf8] sm:$0xff] %v4716
      %p4749 = scmp.lt.s32.totalorder %s15, 1
      %s4750 = scalar_select %p4749, %s15, 1
      %s4751 = smul.addr %s4750, 32
      %s4752 = smul.addr %s4751, 8
      %s4753 = scalar_lea.vmem %s4, %s4752
      // Predicated region
      $region37: #{basic_block_forward.1} parent=35 // pred_check
        %p4754 = pneg %p122
      $region38: #{basic_block_forward.1} parent=35 // pred_check_branch
        %4756 = sbr.rel (%p4754) target = $region40
      $region39: #{basic_block_forward.1} parent=35 // pred_region
        _
      $region40: #{basic_block_forward.1} parent=35 // pred_fallthru
        _
    $region36: #{basic_block_forward.1} parent=5 // pred_fallthru
      _
    %p4757 = scmp.le.s32.totalorder 2, %s10
    // Predicated region
    $region41: #{basic_block_forward.1} parent=5 // pred_check
      %p4758 = pneg %p4757
    $region42: #{basic_block_forward.1} parent=5 // pred_check_branch
      %4760 = sbr.rel (%p4758) target = $region44
    $region43: #{basic_block_forward.1} parent=5 // pred_region
      %s4761 = ssub.s32 %s10, 2
      // Predicated region
      $region45: #{basic_block_forward.1} parent=43 // pred_check
        %p4762 = pneg %p128
      $region46: #{basic_block_forward.1} parent=43 // pred_check_branch
        %4764 = sbr.rel (%p4762) target = $region48
      $region47: #{basic_block_forward.1} parent=43 // pred_region
        %p4765 = scmp.lt.s32.totalorder %s16, 1
        %s4766 = scalar_select %p4765, %s16, 1
        %s4767 = smul.addr %s4766, 32
        %s4768 = smul.addr %s4767, 8
        %s4769 = scalar_lea.vmem %s4, %s4768
      $region48: #{basic_block_forward.1} parent=43 // pred_fallthru
        _
    $region44: #{basic_block_forward.1} parent=5 // pred_fallthru
      _
  $region6: #{basic_block_forward.1} parent=0 // loop_footer
    %s14 = sadd.s32 1, %s10
  $region7: #{basic_block_forward.1} parent=0 // loop_footer_branch
    %9 = sbr.rel target = $region3
  $region8: #{basic_block_forward.1} parent=0 // loop_exit
    _

</llo_original>
